<compile_context>
chip_gen: v5e
topology: v5e:2x2
jax: 0.10.0
libtpu: 0.0.40
codegen_flags: <defaults>
</compile_context>

<pallas_src>
import functools

import numpy as np
import jax
import jax.numpy as jnp
from jax import lax
from jax.experimental import pallas as pl
from jax.experimental.pallas import tpu as pltpu


def _round_up(x, m):
    return ((x + m - 1) // m) * m


# --------------------------------------------------------------------------
# Anchor utilities (pure glue, standard Faster R-CNN anchor generation)
# --------------------------------------------------------------------------
def generate_anchor_base(base_size=16, ratios=(0.5, 1, 2), anchor_scales=(8, 16, 32)):
    py = base_size / 2.0
    px = base_size / 2.0
    ab = np.zeros((len(ratios) * len(anchor_scales), 4), dtype=np.float32)
    for i, r in enumerate(ratios):
        for j, s in enumerate(anchor_scales):
            h = base_size * s * np.sqrt(r)
            w = base_size * s * np.sqrt(1.0 / r)
            idx = i * len(anchor_scales) + j
            ab[idx, 0] = py - h / 2.0
            ab[idx, 1] = px - w / 2.0
            ab[idx, 2] = py + h / 2.0
            ab[idx, 3] = px + w / 2.0
    return ab


def enumerate_shifted_anchors(anchor_base, feat_stride, H, W):
    shift_y = np.arange(0, H * feat_stride, feat_stride, dtype=np.float32)
    shift_x = np.arange(0, W * feat_stride, feat_stride, dtype=np.float32)
    sx, sy = np.meshgrid(shift_x, shift_y)
    shift = np.stack((sy.ravel(), sx.ravel(), sy.ravel(), sx.ravel()), axis=1)
    A = anchor_base.shape[0]
    K = shift.shape[0]
    anchors = anchor_base.reshape(1, A, 4) + shift.reshape(K, 1, 4)
    return anchors.reshape(K * A, 4).astype(np.float32)


# --------------------------------------------------------------------------
# Pallas kernel: fused 3x3 conv (single K=9C matmul per mid-chunk) + ReLU +
# fused 1x1 score/loc heads (single lane-dense 128-wide output)
# --------------------------------------------------------------------------
def _rpn_fused_kernel(x_ref, w9_ref, b1_ref, wh_ref, bh_ref, out_ref, *,
                      wpad, tile_h, mid_chunk):
    """One (batch, H-tile) step.

    x_ref  : (win_rows, C)        bf16  -- flattened padded halo window,
                                           win_rows = (tile_h+3)*wpad
    w9_ref : (9*C, mid_pad)       bf16  -- conv3x3 weights, row t*C+c with t=ky*3+kx
    b1_ref : (1, mid_pad)         f32
    wh_ref : (mid_pad, head_pad)  bf16  -- [score | loc] weights, zero-padded
    bh_ref : (1, head_pad)        f32
    out_ref: (m, head_pad)        bf16  -- m = tile_h*wpad (junk cols x'>=W included,
                                           sliced off by the caller)
    """
    m = tile_h * wpad                      # output rows this step (incl. junk cols)
    l3 = (tile_h + 2) * wpad               # rows needed by the ky-shifted views
    head_pad = out_ref.shape[-1]
    mid_pad = w9_ref.shape[-1]

    # ---- build the fused K = 9*C LHS -------------------------------------
    # 3 kx-shifted views of the flattened window, hoisted once (reused per ky).
    x3 = jnp.concatenate(
        [x_ref[pl.ds(kx, l3), :] for kx in range(3)], axis=-1)        # (l3, 3C)
    # 3 ky-shifted, sublane-aligned (wpad % 16 == 0) row slices -> (m, 9C);
    # lane block t = ky*3 + kx matches the w9 row ordering.
    lhs9 = jnp.concatenate(
        [x3[ky * wpad: ky * wpad + m, :] for ky in range(3)], axis=-1)

    # ---- conv3x3 (one MXU matmul per mid-chunk) + ReLU + fused heads ------
    acc = jnp.zeros((m, head_pad), jnp.float32)
    for ci in range(mid_pad // mid_chunk):                 # static unroll
        lo = ci * mid_chunk
        hc = jnp.dot(lhs9, w9_ref[:, pl.ds(lo, mid_chunk)],
                     preferred_element_type=jnp.float32)
        hc = jnp.maximum(hc + b1_ref[:, pl.ds(lo, mid_chunk)], 0.0)   # f32 epilogue
        acc = acc + jnp.dot(hc.astype(jnp.bfloat16),
                            wh_ref[pl.ds(lo, mid_chunk), :],
                            preferred_element_type=jnp.float32)

    out_ref[...] = (acc + bh_ref[...]).astype(out_ref.dtype)          # bf16 store


def rpn_head_pallas(x_nhwc, w9, b1_row, w_heads, b_heads, *, tile_h=None,
                    vmem_budget_bytes=32 * 1024 * 1024):
    """Fused conv3x3+ReLU+heads. x_nhwc: (N, H, W, C). Returns (N, H, W, head_pad) bf16."""
    N, H, W, C = x_nhwc.shape
    mid_pad = w9.shape[1]
    head_pad = w_heads.shape[1]
    assert w9.shape[0] == 9 * C
    assert mid_pad % 128 == 0 and head_pad % 128 == 0
    mid_chunk = 256 if mid_pad % 256 == 0 else 128

    # Row stride of the flattened window: >= W+2 (1-px halo each side) and
    # bf16-sublane aligned so the ky*wpad tap offsets need no realignment.
    wpad = _round_up(W + 2, 16)
    assert wpad >= W + 2   # columns x' in [W, wpad) are junk and MUST be sliced off

    def per_step_bytes(t):
        m = t * wpad
        win = (t + 3) * wpad
        b = 2 * win * C * 2                               # input window (2 bufs, bf16)
        b += 2 * m * head_pad * 2                         # output block (2 bufs, bf16)
        b += (9 * C * mid_pad + mid_pad * head_pad) * 2   # weights (single buffer)
        b += (mid_pad + head_pad) * 4                     # biases
        b += (t + 2) * wpad * 3 * C * 2 + m * 9 * C * 2   # x3 + lhs9 temporaries
        b += m * head_pad * 4 + m * mid_chunk * 4         # f32 acc + one mid chunk
        return b

    def pick_tile_h():
        best = None
        for t in range(H, 0, -1):                         # biggest tile that fits
            if per_step_bytes(t) > vmem_budget_bytes:
                continue
            if best is None:
                best = t
            if H % t == 0 and 2 * t >= best:              # prefer divisors of H
                return t
        return best if best is not None else 1

    if tile_h is None:
        tile_h = pick_tile_h()
    tile_h = max(1, min(int(tile_h), H))
    nhb = -(-H // tile_h)
    h_rows = nhb * tile_h
    win_rows = (tile_h + 3) * wpad        # +2 halo rows + 1 guard row for kx/ky slices
    m_blk = tile_h * wpad

    # bf16 input; pad 1 top, (h_rows - H + 2) bottom, 1 left, (wpad - W - 1) right.
    xb = x_nhwc.astype(jnp.bfloat16)
    xp = jnp.pad(xb, ((0, 0), (1, h_rows - H + 2), (1, wpad - W - 1), (0, 0)))

    if nhb == 1:
        # Single H-tile (small-map fast path): no windows copy, just a reshape.
        windows = xp.reshape(N, 1, win_rows, C)
    else:
        # TODO(synk): multi-tile path still materializes overlapping halo windows
        # (~(tile_h+3)/tile_h x input) in HBM; a manual-DMA (memory_space=pl.ANY)
        # double-buffered variant would avoid this extra input round trip.
        windows = jnp.stack(
            [xp[:, hb * tile_h: hb * tile_h + tile_h + 3] for hb in range(nhb)],
            axis=1)
        windows = windows.reshape(N, nhb, win_rows, C)

    # VMEM limit computed from the actual per-step footprint (v7x-safe headroom).
    step_bytes = per_step_bytes(tile_h)
    vmem_limit = int(max(24 * 1024 * 1024,
                         min(step_bytes + 8 * 1024 * 1024, 40 * 1024 * 1024)))
    vmem_limit = max(vmem_limit, step_bytes + 2 * 1024 * 1024)

    kernel = functools.partial(_rpn_fused_kernel,
                               wpad=wpad, tile_h=tile_h, mid_chunk=mid_chunk)

    def make_call(single_buffer_weights):
        def wspec(shape, index_map):
            if single_buffer_weights:
                # grid-invariant operands: one VMEM buffer is enough
                return pl.BlockSpec(shape, index_map, pipeline_mode=pl.Buffered(1))
            return pl.BlockSpec(shape, index_map)

        grid_spec = pltpu.PrefetchScalarGridSpec(
            num_scalar_prefetch=0,
            grid=(N, nhb),
            in_specs=[
                # streaming input: one flattened halo window per (batch, H-tile)
                pl.BlockSpec((None, None, win_rows, C), lambda n, hb: (n, hb, 0, 0)),
                # grid-invariant weights / biases (constant index_map -> no re-DMA)
                wspec((9 * C, mid_pad), lambda n, hb: (0, 0)),
                wspec((1, mid_pad), lambda n, hb: (0, 0)),
                wspec((mid_pad, head_pad), lambda n, hb: (0, 0)),
                wspec((1, head_pad), lambda n, hb: (0, 0)),
            ],
            out_specs=pl.BlockSpec((None, None, m_blk, head_pad),
                                   lambda n, hb: (n, hb, 0, 0)),
        )
        return pl.pallas_call(
            kernel,
            out_shape=jax.ShapeDtypeStruct((N, nhb, m_blk, head_pad), jnp.bfloat16),
            grid_spec=grid_spec,
            compiler_params=pltpu.CompilerParams(
                dimension_semantics=("parallel", "parallel"),
                vmem_limit_bytes=vmem_limit),
        )

    args = (windows, w9, b1_row, w_heads, b_heads)
    try:
        out = make_call(True)(*args)       # single-buffered weight specs (v7x VMEM)
    except Exception:
        out = make_call(False)(*args)      # fallback if pl.Buffered(1) is unsupported

    # (N, nhb*tile_h, wpad, head_pad) bf16 -> drop padded rows and junk columns.
    out = out.reshape(N, nhb * tile_h, wpad, head_pad)[:, :H, :W, :]
    return out


# --------------------------------------------------------------------------
# RPN module (JAX/Pallas version)
# --------------------------------------------------------------------------
class RPNPallas:
    def __init__(self, in_channels, mid_channels, ratios=(0.5, 1, 2),
                 anchor_scales=(8, 16, 32), feat_stride=16,
                 key=jax.random.PRNGKey(42)):
        self.anchor_base = generate_anchor_base(16, ratios, anchor_scales)
        self.feat_stride = feat_stride
        self.in_channels = in_channels
        self.mid_channels = mid_channels
        self.n_anchors = self.anchor_base.shape[0]      # 9
        A = self.n_anchors

        k1, k2, k3 = jax.random.split(key, 3)
        # Parameter shapes mirror nn.Conv2d weights (out, in, kh, kw); deterministic init.
        self.w_conv = 0.01 * jax.random.normal(
            k1, (mid_channels, in_channels, 3, 3), jnp.float32)
        self.b_conv = jnp.zeros((mid_channels,), jnp.float32)
        self.w_score = 0.01 * jax.random.normal(
            k2, (A * 2, mid_channels, 1, 1), jnp.float32)
        self.b_score = jnp.zeros((A * 2,), jnp.float32)
        self.w_loc = 0.01 * jax.random.normal(
            k3, (A * 4, mid_channels, 1, 1), jnp.float32)
        self.b_loc = jnp.zeros((A * 4,), jnp.float32)

        # --- pre-packed kernel operands (bf16 matmul operands, f32 biases) ---
        self.mid_pad = _round_up(mid_channels, 128)       # lane-dense conv output
        # conv weights, fused-K layout: row t*C + c with t = ky*3 + kx
        w9 = jnp.transpose(self.w_conv, (2, 3, 1, 0)).reshape(
            9 * in_channels, mid_channels)
        self.w9 = jnp.pad(
            w9, ((0, 0), (0, self.mid_pad - mid_channels))).astype(jnp.bfloat16)
        self.b1_row = jnp.pad(
            self.b_conv, (0, self.mid_pad - mid_channels))[None, :].astype(jnp.float32)
        # fused heads: [score (2A) | loc (4A)], zero-padded to 128 lanes
        wsm = self.w_score.reshape(A * 2, mid_channels).T        # (mid, 2A)
        wlm = self.w_loc.reshape(A * 4, mid_channels).T          # (mid, 4A)
        w_heads = jnp.concatenate([wsm, wlm], axis=1)            # (mid, 6A)
        self.n_head = 6 * A
        self.head_pad = _round_up(self.n_head, 128)              # -> 128
        self.w_heads = jnp.pad(
            w_heads, ((0, self.mid_pad - mid_channels),
                      (0, self.head_pad - self.n_head))).astype(jnp.bfloat16)
        self.b_heads = jnp.pad(
            jnp.concatenate([self.b_score, self.b_loc]),
            (0, self.head_pad - self.n_head))[None, :].astype(jnp.float32)

    def __call__(self, x, img_size, tile_h=None):
        """x: (N, C, H, W) float32 (NCHW, like the PyTorch module)."""
        N, C, H, W = x.shape
        A = self.n_anchors

        shifted_anchors = jnp.asarray(
            enumerate_shifted_anchors(self.anchor_base, self.feat_stride, H, W))

        x_nhwc = jnp.transpose(x, (0, 2, 3, 1))            # NCHW -> NHWC (lane = C)
        out = rpn_head_pallas(x_nhwc, self.w9, self.b1_row,
                              self.w_heads, self.b_heads, tile_h=tile_h)

        # Matches PyTorch .permute(0,2,3,1).contiguous().view(N, -1, {2,4});
        # slices stay in bf16, final cast happens on the small views.
        rpn_scores = out[..., :2 * A].reshape(N, H * W * A, 2).astype(jnp.float32)
        rpn_locs = out[..., 2 * A:6 * A].reshape(N, H * W * A, 4).astype(jnp.float32)

        # TODO(synk): ProposalLayer (loc2bbox + clamp + min-size filter + argsort
        # top-k + NMS) has data-dependent output shapes and relies on helpers that
        # are undefined in the reference (loc2bbox, nms); rois/roi_indices are
        # returned empty and the fg-score softmax it would consume is not computed.
        rois = jnp.zeros((0, 4), jnp.float32)
        roi_indices = jnp.zeros((0,), jnp.int32)

        return rpn_scores, rpn_locs, rois, roi_indices, shifted_anchors


# --------------------------------------------------------------------------
# Pure-JAX reference (mirrors the kernel's bf16-operand / f32-accumulate numerics)
# --------------------------------------------------------------------------
def rpn_reference(x, rpn):
    f32 = jnp.float32
    xb = x.astype(jnp.bfloat16).astype(f32)
    wb = rpn.w_conv.astype(jnp.bfloat16).astype(f32)
    h = lax.conv_general_dilated(xb, wb, (1, 1), ((1, 1), (1, 1)),
                                 dimension_numbers=("NCHW", "OIHW", "NCHW"))
    h = jnp.maximum(h + rpn.b_conv[None, :, None, None], 0.0)
    hb = h.astype(jnp.bfloat16).astype(f32)
    A = rpn.n_anchors
    ws = rpn.w_score.reshape(A * 2, rpn.mid_channels).astype(jnp.bfloat16).astype(f32)
    wl = rpn.w_loc.reshape(A * 4, rpn.mid_channels).astype(jnp.bfloat16).astype(f32)
    sc = jnp.einsum("nchw,oc->nhwo", hb, ws) + rpn.b_score
    lc = jnp.einsum("nchw,oc->nhwo", hb, wl) + rpn.b_loc
    # kernel stores its head output in bf16; mirror that rounding
    sc = sc.astype(jnp.bfloat16).astype(f32)
    lc = lc.astype(jnp.bfloat16).astype(f32)
    N, _, H, W = x.shape
    return sc.reshape(N, H * W * A, 2), lc.reshape(N, H * W * A, 4)


# --------------------------------------------------------------------------
if __name__ == "__main__":
    key = jax.random.PRNGKey(0)
    kx, kp = jax.random.split(key)

    N, C, H, W = 2, 4, 16, 16
    mid_channels = 32
    feat_stride = 16
    img_size = (H * feat_stride, W * feat_stride)

    x = jax.random.normal(kx, (N, C, H, W), jnp.float32)

    rpn = RPNPallas(C, mid_channels, feat_stride=feat_stride, key=kp)
    ref_scores, ref_locs = rpn_reference(x, rpn)

    # Default heuristic: H=16 -> one H-tile per batch, grid (N, 1).
    outs = rpn(x, img_size)
    outs = jax.block_until_ready(outs)
    rpn_scores, rpn_locs, rois, roi_indices, shifted_anchors = outs
    assert rpn_scores.shape == (N, H * W * 9, 2)
    assert rpn_locs.shape == (N, H * W * 9, 4)
    assert shifted_anchors.shape == (H * W * 9, 4)
    np.testing.assert_allclose(np.asarray(rpn_scores), np.asarray(ref_scores),
                               rtol=2e-2, atol=2e-3)
    np.testing.assert_allclose(np.asarray(rpn_locs), np.asarray(ref_locs),
                               rtol=2e-2, atol=2e-3)

    # Also exercise the multi-H-tile halo path (grid (2, 2)).
    outs2 = jax.block_until_ready(rpn(x, img_size, tile_h=8))
    np.testing.assert_allclose(np.asarray(outs2[0]), np.asarray(ref_scores),
                               rtol=2e-2, atol=2e-3)
    np.testing.assert_allclose(np.asarray(outs2[1]), np.asarray(ref_locs),
                               rtol=2e-2, atol=2e-3)

    print("KERNEL_OK")
</pallas_src>

<mosaic_0001>
module attributes {stable_mosaic.version = 11 : i64} {
  func.func @_rpn_fused_kernel(%arg0: i32, %arg1: i32, %arg2: memref<1x1x608x4xbf16, #tpu.memory_space<vmem>>, %arg3: memref<36x128xbf16, #tpu.memory_space<vmem>>, %arg4: memref<1x128xf32, #tpu.memory_space<vmem>>, %arg5: memref<128x128xbf16, #tpu.memory_space<vmem>>, %arg6: memref<1x128xf32, #tpu.memory_space<vmem>>, %arg7: memref<1x1x512x128xbf16, #tpu.memory_space<vmem>>) attributes {dimension_semantics = [#tpu.dimension_semantics<parallel>, #tpu.dimension_semantics<parallel>], iteration_bounds = array<i64: 2, 1>, scalar_prefetch = 0 : i64, scratch_operands = 0 : i64, tpu.core_type = #tpu.core_type<tc>, window_params = [{transform_indices = @transform_0, window_bounds = array<i64: 1, 1, 608, 4>}, {pipeline_mode = #tpu.pipeline_mode<synchronous>, transform_indices = @transform_1, window_bounds = array<i64: 36, 128>}, {pipeline_mode = #tpu.pipeline_mode<synchronous>, transform_indices = @transform_2, window_bounds = array<i64: 1, 128>}, {pipeline_mode = #tpu.pipeline_mode<synchronous>, transform_indices = @transform_3, window_bounds = array<i64: 128, 128>}, {pipeline_mode = #tpu.pipeline_mode<synchronous>, transform_indices = @transform_4, window_bounds = array<i64: 1, 128>}, {transform_indices = @transform_5, window_bounds = array<i64: 1, 1, 512, 128>}]} {
    %c0 = arith.constant 0 : index
    %c0_0 = arith.constant 0 : index
    %c0_1 = arith.constant 0 : index
    %c0_2 = arith.constant 0 : index
    %0 = vector.load %arg2[%c0, %c0_0, %c0_1, %c0_2] : memref<1x1x608x4xbf16, #tpu.memory_space<vmem>>, vector<1x1x576x4xbf16>
    %1 = vector.shape_cast %0 : vector<1x1x576x4xbf16> to vector<576x4xbf16>
    %c0_3 = arith.constant 0 : index
    %c0_4 = arith.constant 0 : index
    %c1 = arith.constant 1 : index
    %c0_5 = arith.constant 0 : index
    %2 = vector.load %arg2[%c0_3, %c0_4, %c1, %c0_5] : memref<1x1x608x4xbf16, #tpu.memory_space<vmem>>, vector<1x1x576x4xbf16>
    %3 = vector.shape_cast %2 : vector<1x1x576x4xbf16> to vector<576x4xbf16>
    %c0_6 = arith.constant 0 : index
    %c0_7 = arith.constant 0 : index
    %c2 = arith.constant 2 : index
    %c0_8 = arith.constant 0 : index
    %4 = vector.load %arg2[%c0_6, %c0_7, %c2, %c0_8] : memref<1x1x608x4xbf16, #tpu.memory_space<vmem>>, vector<1x1x576x4xbf16>
    %5 = vector.shape_cast %4 : vector<1x1x576x4xbf16> to vector<576x4xbf16>
    %6 = tpu.concatenate %1, %3, %5 in 1 : vector<576x4xbf16>, vector<576x4xbf16>, vector<576x4xbf16> -> vector<576x12xbf16>
    %7 = vector.extract_strided_slice %6 {offsets = [0, 0], sizes = [512, 12], strides = [1, 1]} : vector<576x12xbf16> to vector<512x12xbf16>
    %8 = vector.extract_strided_slice %6 {offsets = [32, 0], sizes = [512, 12], strides = [1, 1]} : vector<576x12xbf16> to vector<512x12xbf16>
    %9 = vector.extract_strided_slice %6 {offsets = [64, 0], sizes = [512, 12], strides = [1, 1]} : vector<576x12xbf16> to vector<512x12xbf16>
    %10 = tpu.concatenate %7, %8, %9 in 1 : vector<512x12xbf16>, vector<512x12xbf16>, vector<512x12xbf16> -> vector<512x36xbf16>
    %cst = arith.constant 0.000000e+00 : f32
    %11 = vector.broadcast %cst : f32 to vector<512x128xf32>
    %c0_9 = arith.constant 0 : index
    %c0_10 = arith.constant 0 : index
    %12 = vector.load %arg3[%c0_9, %c0_10] : memref<36x128xbf16, #tpu.memory_space<vmem>>, vector<36x128xbf16>
    %cst_11 = arith.constant dense<0.000000e+00> : vector<512x128xf32>
    %13 = tpu.matmul %10, %12, %cst_11 {dimension_numbers = #tpu.dot_dimension_numbers<[1], [0], [0], [1], [0, 0, 1, 1], [], []>} : vector<512x36xbf16>, vector<36x128xbf16>, vector<512x128xf32> -> vector<512x128xf32>
    %c0_12 = arith.constant 0 : index
    %c0_13 = arith.constant 0 : index
    %14 = vector.load %arg4[%c0_12, %c0_13] : memref<1x128xf32, #tpu.memory_space<vmem>>, vector<1x128xf32>
    %15 = vector.broadcast %14 : vector<1x128xf32> to vector<512x128xf32>
    %16 = arith.addf %13, %15 : vector<512x128xf32>
    %cst_14 = arith.constant 0.000000e+00 : f32
    %17 = vector.broadcast %cst_14 : f32 to vector<512x128xf32>
    %18 = arith.maximumf %16, %17 : vector<512x128xf32>
    %19 = arith.truncf %18 : vector<512x128xf32> to vector<512x128xbf16>
    %c0_15 = arith.constant 0 : index
    %c0_16 = arith.constant 0 : index
    %20 = vector.load %arg5[%c0_15, %c0_16] : memref<128x128xbf16, #tpu.memory_space<vmem>>, vector<128x128xbf16>
    %cst_17 = arith.constant dense<0.000000e+00> : vector<512x128xf32>
    %21 = tpu.matmul %19, %20, %cst_17 {dimension_numbers = #tpu.dot_dimension_numbers<[1], [0], [0], [1], [0, 0, 1, 1], [], []>} : vector<512x128xbf16>, vector<128x128xbf16>, vector<512x128xf32> -> vector<512x128xf32>
    %22 = arith.addf %11, %21 : vector<512x128xf32>
    %c0_18 = arith.constant 0 : index
    %c0_19 = arith.constant 0 : index
    %23 = vector.load %arg6[%c0_18, %c0_19] : memref<1x128xf32, #tpu.memory_space<vmem>>, vector<1x128xf32>
    %24 = vector.broadcast %23 : vector<1x128xf32> to vector<512x128xf32>
    %25 = arith.addf %22, %24 : vector<512x128xf32>
    %26 = arith.truncf %25 : vector<512x128xf32> to vector<512x128xbf16>
    %c0_20 = arith.constant 0 : index
    %c0_21 = arith.constant 0 : index
    %c0_22 = arith.constant 0 : index
    %c0_23 = arith.constant 0 : index
    %27 = vector.load %arg7[%c0_20, %c0_21, %c0_22, %c0_23] : memref<1x1x512x128xbf16, #tpu.memory_space<vmem>>, vector<1x1x512x128xbf16>
    %28 = vector.shape_cast %27 : vector<1x1x512x128xbf16> to vector<512x128xbf16>
    %29 = vector.shape_cast %26 : vector<512x128xbf16> to vector<1x1x512x128xbf16>
    tpu.vector_store %arg7[%c0_20, %c0_21, %c0_22, %c0_23], %29 {strides = array<i32>} : memref<1x1x512x128xbf16, #tpu.memory_space<vmem>>, vector<1x1x512x128xbf16>,
    return
  }
  func.func @transform_0(%arg0: i32, %arg1: i32) -> (i32, i32, i32, i32) {
    %c0_i32 = arith.constant 0 : i32
    %c0_i32_0 = arith.constant 0 : i32
    %c0_i32_1 = arith.constant 0 : i32
    return %arg0, %arg1, %c0_i32, %c0_i32_0 : i32, i32, i32, i32
  }
  func.func @transform_1(%arg0: i32, %arg1: i32) -> (i32, i32) {
    %c0_i32 = arith.constant 0 : i32
    %c0_i32_0 = arith.constant 0 : i32
    %c0_i32_1 = arith.constant 0 : i32
    return %c0_i32, %c0_i32_0 : i32, i32
  }
  func.func @transform_2(%arg0: i32, %arg1: i32) -> (i32, i32) {
    %c0_i32 = arith.constant 0 : i32
    %c0_i32_0 = arith.constant 0 : i32
    %c0_i32_1 = arith.constant 0 : i32
    return %c0_i32, %c0_i32_0 : i32, i32
  }
  func.func @transform_3(%arg0: i32, %arg1: i32) -> (i32, i32) {
    %c0_i32 = arith.constant 0 : i32
    %c0_i32_0 = arith.constant 0 : i32
    %c0_i32_1 = arith.constant 0 : i32
    return %c0_i32, %c0_i32_0 : i32, i32
  }
  func.func @transform_4(%arg0: i32, %arg1: i32) -> (i32, i32) {
    %c0_i32 = arith.constant 0 : i32
    %c0_i32_0 = arith.constant 0 : i32
    %c0_i32_1 = arith.constant 0 : i32
    return %c0_i32, %c0_i32_0 : i32, i32
  }
  func.func @transform_5(%arg0: i32, %arg1: i32) -> (i32, i32, i32, i32) {
    %c0_i32 = arith.constant 0 : i32
    %c0_i32_0 = arith.constant 0 : i32
    %c0_i32_1 = arith.constant 0 : i32
    return %arg0, %arg1, %c0_i32, %c0_i32_0 : i32, i32, i32, i32
  }
}

module attributes {stable_mosaic.version = 11 : i64} {
  func.func @_rpn_fused_kernel(%arg0: i32, %arg1: i32, %arg2: memref<1x1x608x4xbf16, #tpu.memory_space<vmem>>, %arg3: memref<36x128xbf16, #tpu.memory_space<vmem>>, %arg4: memref<1x128xf32, #tpu.memory_space<vmem>>, %arg5: memref<128x128xbf16, #tpu.memory_space<vmem>>, %arg6: memref<1x128xf32, #tpu.memory_space<vmem>>, %arg7: memref<1x1x512x128xbf16, #tpu.memory_space<vmem>>) attributes {dimension_semantics = [#tpu.dimension_semantics<parallel>, #tpu.dimension_semantics<parallel>], iteration_bounds = array<i64: 2, 1>, scalar_prefetch = 0 : i64, scratch_operands = 0 : i64, tpu.core_type = #tpu.core_type<tc>, window_params = [{transform_indices = @transform_0, window_bounds = array<i64: 1, 1, 608, 4>}, {pipeline_mode = #tpu.pipeline_mode<synchronous>, transform_indices = @transform_1, window_bounds = array<i64: 36, 128>}, {pipeline_mode = #tpu.pipeline_mode<synchronous>, transform_indices = @transform_2, window_bounds = array<i64: 1, 128>}, {pipeline_mode = #tpu.pipeline_mode<synchronous>, transform_indices = @transform_3, window_bounds = array<i64: 128, 128>}, {pipeline_mode = #tpu.pipeline_mode<synchronous>, transform_indices = @transform_4, window_bounds = array<i64: 1, 128>}, {transform_indices = @transform_5, window_bounds = array<i64: 1, 1, 512, 128>}]} {
    %c0 = arith.constant 0 : index
    %c0_0 = arith.constant 0 : index
    %c0_1 = arith.constant 0 : index
    %c0_2 = arith.constant 0 : index
    %0 = vector.load %arg2[%c0, %c0_0, %c0_1, %c0_2] : memref<1x1x608x4xbf16, #tpu.memory_space<vmem>>, vector<1x1x576x4xbf16>
    %1 = vector.shape_cast %0 : vector<1x1x576x4xbf16> to vector<576x4xbf16>
    %c0_3 = arith.constant 0 : index
    %c0_4 = arith.constant 0 : index
    %c1 = arith.constant 1 : index
    %c0_5 = arith.constant 0 : index
    %2 = vector.load %arg2[%c0_3, %c0_4, %c1, %c0_5] : memref<1x1x608x4xbf16, #tpu.memory_space<vmem>>, vector<1x1x576x4xbf16>
    %3 = vector.shape_cast %2 : vector<1x1x576x4xbf16> to vector<576x4xbf16>
    %c0_6 = arith.constant 0 : index
    %c0_7 = arith.constant 0 : index
    %c2 = arith.constant 2 : index
    %c0_8 = arith.constant 0 : index
    %4 = vector.load %arg2[%c0_6, %c0_7, %c2, %c0_8] : memref<1x1x608x4xbf16, #tpu.memory_space<vmem>>, vector<1x1x576x4xbf16>
    %5 = vector.shape_cast %4 : vector<1x1x576x4xbf16> to vector<576x4xbf16>
    %6 = tpu.concatenate %1, %3, %5 in 1 : vector<576x4xbf16>, vector<576x4xbf16>, vector<576x4xbf16> -> vector<576x12xbf16>
    %7 = vector.extract_strided_slice %6 {offsets = [0, 0], sizes = [512, 12], strides = [1, 1]} : vector<576x12xbf16> to vector<512x12xbf16>
    %8 = vector.extract_strided_slice %6 {offsets = [32, 0], sizes = [512, 12], strides = [1, 1]} : vector<576x12xbf16> to vector<512x12xbf16>
    %9 = vector.extract_strided_slice %6 {offsets = [64, 0], sizes = [512, 12], strides = [1, 1]} : vector<576x12xbf16> to vector<512x12xbf16>
    %10 = tpu.concatenate %7, %8, %9 in 1 : vector<512x12xbf16>, vector<512x12xbf16>, vector<512x12xbf16> -> vector<512x36xbf16>
    %cst = arith.constant 0.000000e+00 : f32
    %11 = vector.broadcast %cst : f32 to vector<512x128xf32>
    %c0_9 = arith.constant 0 : index
    %c0_10 = arith.constant 0 : index
    %12 = vector.load %arg3[%c0_9, %c0_10] : memref<36x128xbf16, #tpu.memory_space<vmem>>, vector<36x128xbf16>
    %cst_11 = arith.constant dense<0.000000e+00> : vector<512x128xf32>
    %13 = tpu.matmul %10, %12, %cst_11 {dimension_numbers = #tpu.dot_dimension_numbers<[1], [0], [0], [1], [0, 0, 1, 1], [], []>} : vector<512x36xbf16>, vector<36x128xbf16>, vector<512x128xf32> -> vector<512x128xf32>
    %c0_12 = arith.constant 0 : index
    %c0_13 = arith.constant 0 : index
    %14 = vector.load %arg4[%c0_12, %c0_13] : memref<1x128xf32, #tpu.memory_space<vmem>>, vector<1x128xf32>
    %15 = vector.broadcast %14 : vector<1x128xf32> to vector<512x128xf32>
    %16 = arith.addf %13, %15 : vector<512x128xf32>
    %cst_14 = arith.constant 0.000000e+00 : f32
    %17 = vector.broadcast %cst_14 : f32 to vector<512x128xf32>
    %18 = arith.maximumf %16, %17 : vector<512x128xf32>
    %19 = arith.truncf %18 : vector<512x128xf32> to vector<512x128xbf16>
    %c0_15 = arith.constant 0 : index
    %c0_16 = arith.constant 0 : index
    %20 = vector.load %arg5[%c0_15, %c0_16] : memref<128x128xbf16, #tpu.memory_space<vmem>>, vector<128x128xbf16>
    %cst_17 = arith.constant dense<0.000000e+00> : vector<512x128xf32>
    %21 = tpu.matmul %19, %20, %cst_17 {dimension_numbers = #tpu.dot_dimension_numbers<[1], [0], [0], [1], [0, 0, 1, 1], [], []>} : vector<512x128xbf16>, vector<128x128xbf16>, vector<512x128xf32> -> vector<512x128xf32>
    %22 = arith.addf %11, %21 : vector<512x128xf32>
    %c0_18 = arith.constant 0 : index
    %c0_19 = arith.constant 0 : index
    %23 = vector.load %arg6[%c0_18, %c0_19] : memref<1x128xf32, #tpu.memory_space<vmem>>, vector<1x128xf32>
    %24 = vector.broadcast %23 : vector<1x128xf32> to vector<512x128xf32>
    %25 = arith.addf %22, %24 : vector<512x128xf32>
    %26 = arith.truncf %25 : vector<512x128xf32> to vector<512x128xbf16>
    %c0_20 = arith.constant 0 : index
    %c0_21 = arith.constant 0 : index
    %c0_22 = arith.constant 0 : index
    %c0_23 = arith.constant 0 : index
    %27 = vector.load %arg7[%c0_20, %c0_21, %c0_22, %c0_23] : memref<1x1x512x128xbf16, #tpu.memory_space<vmem>>, vector<1x1x512x128xbf16>
    %28 = vector.shape_cast %27 : vector<1x1x512x128xbf16> to vector<512x128xbf16>
    %29 = vector.shape_cast %26 : vector<512x128xbf16> to vector<1x1x512x128xbf16>
    tpu.vector_store %arg7[%c0_20, %c0_21, %c0_22, %c0_23], %29 {strides = array<i32>} : memref<1x1x512x128xbf16, #tpu.memory_space<vmem>>, vector<1x1x512x128xbf16>,
    return
  }
  func.func @transform_0(%arg0: i32, %arg1: i32) -> (i32, i32, i32, i32) {
    %c0_i32 = arith.constant 0 : i32
    %c0_i32_0 = arith.constant 0 : i32
    %c0_i32_1 = arith.constant 0 : i32
    return %arg0, %arg1, %c0_i32, %c0_i32_0 : i32, i32, i32, i32
  }
  func.func @transform_1(%arg0: i32, %arg1: i32) -> (i32, i32) {
    %c0_i32 = arith.constant 0 : i32
    %c0_i32_0 = arith.constant 0 : i32
    %c0_i32_1 = arith.constant 0 : i32
    return %c0_i32, %c0_i32_0 : i32, i32
  }
  func.func @transform_2(%arg0: i32, %arg1: i32) -> (i32, i32) {
    %c0_i32 = arith.constant 0 : i32
    %c0_i32_0 = arith.constant 0 : i32
    %c0_i32_1 = arith.constant 0 : i32
    return %c0_i32, %c0_i32_0 : i32, i32
  }
  func.func @transform_3(%arg0: i32, %arg1: i32) -> (i32, i32) {
    %c0_i32 = arith.constant 0 : i32
    %c0_i32_0 = arith.constant 0 : i32
    %c0_i32_1 = arith.constant 0 : i32
    return %c0_i32, %c0_i32_0 : i32, i32
  }
  func.func @transform_4(%arg0: i32, %arg1: i32) -> (i32, i32) {
    %c0_i32 = arith.constant 0 : i32
    %c0_i32_0 = arith.constant 0 : i32
    %c0_i32_1 = arith.constant 0 : i32
    return %c0_i32, %c0_i32_0 : i32, i32
  }
  func.func @transform_5(%arg0: i32, %arg1: i32) -> (i32, i32, i32, i32) {
    %c0_i32 = arith.constant 0 : i32
    %c0_i32_0 = arith.constant 0 : i32
    %c0_i32_1 = arith.constant 0 : i32
    return %arg0, %arg1, %c0_i32, %c0_i32_0 : i32, i32, i32, i32
  }
}

</mosaic_0001>

<llo_original>
// kernel: tpu_custom_call.1
$region0: #{tpu_custom_call.1}
  #allocation0 [shape = 'u32[]', space=smem, size = 0x4, offset = 0x4, fixed_abs, tag = 'smem constant byte address 0x4 - core index']
  #allocation1 [shape = 'u32[72,128]{1,0:T(1,128)}', space=vmem, size = 0x9000, scoped, tag = 'internal scratch']
  %s0 = inlined_call_operand.vmem [shape: bf16[2,1,608,4], index: 0, kind: input, shape index: {}]
  %s1 = inlined_call_operand.vmem [shape: bf16[36,128], index: 1, kind: input, shape index: {}]
  %s2 = inlined_call_operand.vmem [shape: f32[1,128], index: 2, kind: input, shape index: {}]
  %s3 = inlined_call_operand.vmem [shape: bf16[128,128], index: 3, kind: input, shape index: {}]
  %s4 = inlined_call_operand.vmem [shape: f32[1,128], index: 4, kind: input, shape index: {}]
  %s5 = inlined_call_operand.hbm [shape: bf16[2,1,512,128], index: 5, kind: output, shape index: {}]
  %s6 = sld [smem:[#allocation0]]
  $region53: #{tpu_custom_call.1} parent=0
    _
  %s8 = ssub.s32 1, %s6
  %s9 = scalar_select 0, %s8, %s6
  $region1: #{tpu_custom_call.1} parent=0
    #allocation2 [shape = 'u8[262144]{0}', space=vmem, size = 0x40000, scoped, tag = 'output window, operand 0']
    #allocation3 [shape = 's32[2]{0}', space=sflag, size = 0x8, scoped, tag = 'scoped memory for tpu_custom_call.1']
    %10 = vsyncpa [#allocation3], 0
    %s11 = scalar_lea.sflag [#allocation3], 1
    %12 = vsyncpa %s11, 0
    loop: start=0, step=1, limit=4
    $region2: #{tpu_custom_call.1} parent=1 // loop_pre_header
      _
    $region3: #{tpu_custom_call.1} parent=1 // loop_header
      %s14 = sphi 0, %s18
      %p15 = scmp.ge.s32.totalorder %s14, 4
      %s21 = sphi 0, %s33
      %s22 = sphi 0, %s29
      %s23 = sphi 0, %s21
      %s24 = sphi 0, %s22
      %s25 = sphi 0, %s23
      %s26 = sphi 0, %s24
      %s38 = sphi 0, %s40
      %s41 = sphi 0, %s38
      %s42 = sphi 0, %s41
      %s58 = sphi 0, %s42
      %s62 = sphi 0, %s62
      %s64 = sphi 0, %s62
      %s65 = sphi 0, %s64
      %s79 = sphi 0, %s65
      %s83 = sphi 0, %s83
      %s85 = sphi 0, %s83
      %s86 = sphi 0, %s85
      %s100 = sphi 0, %s86
      %s104 = sphi 0, %s104
      %s106 = sphi 0, %s104
      %s107 = sphi 0, %s106
      %s121 = sphi 0, %s107
      %s125 = sphi 0, %s125
      %s127 = sphi 0, %s125
      %s128 = sphi 0, %s127
      %s142 = sphi 0, %s128
      %s150 = sphi 0, %s152
      %s153 = sphi 0, %s150
      %s154 = sphi 0, %s153
      %s170 = sphi 0, %s154
    $region4: #{tpu_custom_call.1} parent=1 // loop_header_branch
      %17 = sbr.rel (%p15) target = $region8
    $region5: #{tpu_custom_call.1} parent=1 // loop_body
      %s19 = ssub.s32 %s14, 1
      %s20 = ssub.s32 %s14, 2
      %s27 = sadd.s32 1, %s22
      %p28 = scmp.ge.s32.totalorder %s27, 1
      %s29 = scalar_select %p28, 0, %s27
      %s30 = sadd.s32 1, %s21
      %s31 = scalar_select %p28, %s30, %s21
      %p32 = scmp.ge.s32.totalorder %s31, 2
      %s33 = scalar_select %p32, 0, %s31
      %s34 = ssub.s32 %s21, %s33
      %s35 = ssub.s32 %s22, %s29
      %s36 = sor.u32 %s34, %s35
      %p37 = scmp.eq.s32.totalorder %s36, 0
      %s39 = sadd.s32 %s38, 1
      %s40 = scalar_select %p37, %s38, %s39
      %p43 = pneg %p37
      %p44 = scmp.eq.s32.totalorder %s14, 1
      %p45 = por %p43, %p44
      %p46 = scmp.ne.s32.totalorder %s38, %s41
      %p47 = scmp.eq.s32.totalorder %s14, 0
      %p48 = por %p46, %p47
      %p49 = scmp.ne.s32.totalorder %s38, %s41
      %p50 = scmp.eq.s32.totalorder %s19, 1
      %p51 = por %p49, %p50
      %p52 = scmp.ne.s32.totalorder %s41, %s42
      %p53 = scmp.eq.s32.totalorder %s19, 0
      %p54 = por %p52, %p53
      %p55 = scmp.ne.s32.totalorder %s41, %s42
      %p56 = scmp.eq.s32.totalorder %s20, 1
      %p57 = por %p55, %p56
      %p59 = scmp.ne.s32.totalorder %s42, %s58
      %p60 = scmp.eq.s32.totalorder %s20, 0
      %p61 = por %p59, %p60
      %s63 = sadd.s32 %s62, 1
      %p66 = scmp.eq.s32.totalorder %s14, 1
      %p67 = scmp.ne.s32.totalorder %s62, %s64
      %p68 = scmp.eq.s32.totalorder %s14, 0
      %p69 = por %p67, %p68
      %p70 = scmp.ne.s32.totalorder %s62, %s64
      %p71 = scmp.eq.s32.totalorder %s19, 1
      %p72 = por %p70, %p71
      %p73 = scmp.ne.s32.totalorder %s64, %s65
      %p74 = scmp.eq.s32.totalorder %s19, 0
      %p75 = por %p73, %p74
      %p76 = scmp.ne.s32.totalorder %s64, %s65
      %p77 = scmp.eq.s32.totalorder %s20, 1
      %p78 = por %p76, %p77
      %p80 = scmp.ne.s32.totalorder %s65, %s79
      %p81 = scmp.eq.s32.totalorder %s20, 0
      %p82 = por %p80, %p81
      %s84 = sadd.s32 %s83, 1
      %p87 = scmp.eq.s32.totalorder %s14, 1
      %p88 = scmp.ne.s32.totalorder %s83, %s85
      %p89 = scmp.eq.s32.totalorder %s14, 0
      %p90 = por %p88, %p89
      %p91 = scmp.ne.s32.totalorder %s83, %s85
      %p92 = scmp.eq.s32.totalorder %s19, 1
      %p93 = por %p91, %p92
      %p94 = scmp.ne.s32.totalorder %s85, %s86
      %p95 = scmp.eq.s32.totalorder %s19, 0
      %p96 = por %p94, %p95
      %p97 = scmp.ne.s32.totalorder %s85, %s86
      %p98 = scmp.eq.s32.totalorder %s20, 1
      %p99 = por %p97, %p98
      %p101 = scmp.ne.s32.totalorder %s86, %s100
      %p102 = scmp.eq.s32.totalorder %s20, 0
      %p103 = por %p101, %p102
      %s105 = sadd.s32 %s104, 1
      %p108 = scmp.eq.s32.totalorder %s14, 1
      %p109 = scmp.ne.s32.totalorder %s104, %s106
      %p110 = scmp.eq.s32.totalorder %s14, 0
      %p111 = por %p109, %p110
      %p112 = scmp.ne.s32.totalorder %s104, %s106
      %p113 = scmp.eq.s32.totalorder %s19, 1
      %p114 = por %p112, %p113
      %p115 = scmp.ne.s32.totalorder %s106, %s107
      %p116 = scmp.eq.s32.totalorder %s19, 0
      %p117 = por %p115, %p116
      %p118 = scmp.ne.s32.totalorder %s106, %s107
      %p119 = scmp.eq.s32.totalorder %s20, 1
      %p120 = por %p118, %p119
      %p122 = scmp.ne.s32.totalorder %s107, %s121
      %p123 = scmp.eq.s32.totalorder %s20, 0
      %p124 = por %p122, %p123
      %s126 = sadd.s32 %s125, 1
      %p129 = scmp.eq.s32.totalorder %s14, 1
      %p130 = scmp.ne.s32.totalorder %s125, %s127
      %p131 = scmp.eq.s32.totalorder %s14, 0
      %p132 = por %p130, %p131
      %p133 = scmp.ne.s32.totalorder %s125, %s127
      %p134 = scmp.eq.s32.totalorder %s19, 1
      %p135 = por %p133, %p134
      %p136 = scmp.ne.s32.totalorder %s127, %s128
      %p137 = scmp.eq.s32.totalorder %s19, 0
      %p138 = por %p136, %p137
      %p139 = scmp.ne.s32.totalorder %s127, %s128
      %p140 = scmp.eq.s32.totalorder %s20, 1
      %p141 = por %p139, %p140
      %p143 = scmp.ne.s32.totalorder %s128, %s142
      %p144 = scmp.eq.s32.totalorder %s20, 0
      %p145 = por %p143, %p144
      %s146 = ssub.s32 %s21, %s33
      %s147 = ssub.s32 %s22, %s29
      %s148 = sor.u32 %s146, %s147
      %p149 = scmp.eq.s32.totalorder %s148, 0
      %s151 = sadd.s32 %s150, 1
      %s152 = scalar_select %p149, %s150, %s151
      %p155 = pneg %p149
      %p156 = scmp.eq.s32.totalorder %s14, 1
      %p157 = por %p155, %p156
      %p158 = scmp.ne.s32.totalorder %s150, %s153
      %p159 = scmp.eq.s32.totalorder %s14, 0
      %p160 = por %p158, %p159
      %p161 = scmp.ne.s32.totalorder %s150, %s153
      %p162 = scmp.eq.s32.totalorder %s19, 1
      %p163 = por %p161, %p162
      %p164 = scmp.ne.s32.totalorder %s153, %s154
      %p165 = scmp.eq.s32.totalorder %s19, 0
      %p166 = por %p164, %p165
      %p167 = scmp.ne.s32.totalorder %s153, %s154
      %p168 = scmp.eq.s32.totalorder %s20, 1
      %p169 = por %p167, %p168
      %p171 = scmp.ne.s32.totalorder %s154, %s170
      %p172 = scmp.eq.s32.totalorder %s20, 0
      %p173 = por %p171, %p172
      %p174 = scmp.le.s32.totalorder 1, %s14
      %p175 = scmp.lt.s32.totalorder %s14, 3
      %p176 = pnand %p174, %p175
      %p177 = pneg %p176
      // Predicated region
      $region9: #{tpu_custom_call.1} parent=5 // pred_check
        _
      $region10: #{tpu_custom_call.1} parent=5 // pred_check_branch
        %179 = sbr.rel (%p176) target = $region12
      $region11: #{tpu_custom_call.1} parent=5 // pred_region
        %s180 = ssub.s32 %s14, 1
        // Predicated region
        $region13: #{tpu_custom_call.1} parent=11 // pred_check
          %p181 = pneg %p75
        $region14: #{tpu_custom_call.1} parent=11 // pred_check_branch
          %183 = sbr.rel (%p181) target = $region16
        $region15: #{tpu_custom_call.1} parent=11 // pred_region
          _
        $region16: #{tpu_custom_call.1} parent=11 // pred_fallthru
          _
        // Predicated region
        $region17: #{tpu_custom_call.1} parent=11 // pred_check
          %p184 = pneg %p96
        $region18: #{tpu_custom_call.1} parent=11 // pred_check_branch
          %186 = sbr.rel (%p184) target = $region20
        $region19: #{tpu_custom_call.1} parent=11 // pred_region
          _
        $region20: #{tpu_custom_call.1} parent=11 // pred_fallthru
          _
        // Predicated region
        $region21: #{tpu_custom_call.1} parent=11 // pred_check
          %p187 = pneg %p117
        $region22: #{tpu_custom_call.1} parent=11 // pred_check_branch
          %189 = sbr.rel (%p187) target = $region24
        $region23: #{tpu_custom_call.1} parent=11 // pred_region
          _
        $region24: #{tpu_custom_call.1} parent=11 // pred_fallthru
          _
        // Predicated region
        $region25: #{tpu_custom_call.1} parent=11 // pred_check
          %p190 = pneg %p138
        $region26: #{tpu_custom_call.1} parent=11 // pred_check_branch
          %192 = sbr.rel (%p190) target = $region28
        $region27: #{tpu_custom_call.1} parent=11 // pred_region
          _
        $region28: #{tpu_custom_call.1} parent=11 // pred_fallthru
          _
      $region12: #{tpu_custom_call.1} parent=5 // pred_fallthru
        _
      %p193 = scmp.lt.s32.totalorder %s14, 2
      // Predicated region
      $region29: #{tpu_custom_call.1} parent=5 // pred_check
        %p194 = pneg %p193
      $region30: #{tpu_custom_call.1} parent=5 // pred_check_branch
        %196 = sbr.rel (%p194) target = $region32
      $region31: #{tpu_custom_call.1} parent=5 // pred_region
        // Predicated region
        $region33: #{tpu_custom_call.1} parent=31 // pred_check
          %p197 = pneg %p48
        $region34: #{tpu_custom_call.1} parent=31 // pred_check_branch
          %199 = sbr.rel (%p197) target = $region36
        $region35: #{tpu_custom_call.1} parent=31 // pred_region
          %p200 = scmp.lt.s32.totalorder %s21, 1
          %s201 = scalar_select %p200, %s21, 1
          %p202 = scmp.lt.s32.totalorder %s22, 0
          %s203 = scalar_select %p202, %s22, 0
          %s204 = smul.addr %s203, 76
          %s205 = smul.addr %s201, 76
          %s206 = sadd.s32 %s204, %s205
          %s207 = smul.addr %s206, 4
          %s208 = scalar_lea.vmem %s0, %s207
        $region36: #{tpu_custom_call.1} parent=31 // pred_fallthru
          _
      $region32: #{tpu_custom_call.1} parent=5 // pred_fallthru
        _
      %p209 = scmp.le.s32.totalorder 1, %s14
      %p210 = scmp.lt.s32.totalorder %s14, 3
      %p211 = pnand %p209, %p210
      %p212 = pneg %p211
      // Predicated region
      $region37: #{tpu_custom_call.1} parent=5 // pred_check
        _
      $region38: #{tpu_custom_call.1} parent=5 // pred_check_branch
        %214 = sbr.rel (%p211) target = $region40
      $region39: #{tpu_custom_call.1} parent=5 // pred_region
        %s215 = ssub.s32 %s14, 1
        %p216 = scmp.lt.s32.totalorder %s23, 1
        %s217 = scalar_select %p216, %s23, 1
        %p218 = scmp.lt.s32.totalorder %s24, 0
        %s219 = scalar_select %p218, %s24, 0
        %s220 = smul.addr %s219, 76
        %s221 = smul.addr %s217, 76
        %s222 = sadd.s32 %s220, %s221
        %s223 = smul.addr %s222, 4
        %s224 = scalar_lea.vmem %s0, %s223
        %p225 = pneg %p54
        %p226 = pneg %p51
        %p227 = pneg %p75
        %p228 = pneg %p72
        %p229 = pneg %p96
        %p230 = pneg %p93
        %p231 = pneg %p117
        %p232 = pneg %p114
        %p233 = pneg %p138
        %p234 = pneg %p135
        %p235 = pneg %p166
        %p236 = pneg %p163
        %s237 = sand.u32 %s153, 1
        %s238 = scalar_lea.sflag [#allocation3], %s237
        %s239 = sand.u32 %s153, 1
        %s240 = smul.addr %s239, 256
        %s241 = scalar_lea.vmem [#allocation2], %s240
        %p242 = scmp.lt.s32.totalorder %s23, 1
        %s243 = scalar_select %p242, %s23, 1
        %p244 = scmp.lt.s32.totalorder %s24, 0
        %s245 = scalar_select %p244, %s24, 0
        %s246 = smul.addr %s245, 76
        %s247 = smul.addr %s243, 76
        %s248 = sadd.s32 %s246, %s247
        %s249 = smul.addr %s248, 4
        %s250 = scalar_lea.vmem %s0, %s249
        %v252 = vld [vmem:[%s250] sm:$0xf]
        %v253 = vld [vmem:[%s250 + $0x4] sm:$0xf]
        %v254 = vld [vmem:[%s250 + $0x8] sm:$0xf]
        %v255 = vld [vmem:[%s250 + $0xc] sm:$0xf]
        %v256 = vld [vmem:[%s250 + $0x10] sm:$0xf]
        %v257 = vld [vmem:[%s250 + $0x14] sm:$0xf]
        %v258 = vld [vmem:[%s250 + $0x18] sm:$0xf]
        %v259 = vld [vmem:[%s250 + $0x1c] sm:$0xf]
        %v260 = vld [vmem:[%s250 + $0x20] sm:$0xf]
        %v261 = vld [vmem:[%s250 + $0x24] sm:$0xf]
        %v262 = vld [vmem:[%s250 + $0x28] sm:$0xf]
        %v263 = vld [vmem:[%s250 + $0x2c] sm:$0xf]
        %v264 = vld [vmem:[%s250 + $0x30] sm:$0xf]
        %v265 = vld [vmem:[%s250 + $0x34] sm:$0xf]
        %v266 = vld [vmem:[%s250 + $0x38] sm:$0xf]
        %v267 = vld [vmem:[%s250 + $0x3c] sm:$0xf]
        %v268 = vld [vmem:[%s250 + $0x40] sm:$0xf]
        %v269 = vld [vmem:[%s250 + $0x44] sm:$0xf]
        %v270 = vld [vmem:[%s250 + $0x48] sm:$0xf]
        %v271 = vld [vmem:[%s250 + $0x4c] sm:$0xf]
        %v272 = vld [vmem:[%s250 + $0x50] sm:$0xf]
        %v273 = vld [vmem:[%s250 + $0x54] sm:$0xf]
        %v274 = vld [vmem:[%s250 + $0x58] sm:$0xf]
        %v275 = vld [vmem:[%s250 + $0x5c] sm:$0xf]
        %v276 = vld [vmem:[%s250 + $0x60] sm:$0xf]
        %v277 = vld [vmem:[%s250 + $0x64] sm:$0xf]
        %v278 = vld [vmem:[%s250 + $0x68] sm:$0xf]
        %v279 = vld [vmem:[%s250 + $0x6c] sm:$0xf]
        %v280 = vld [vmem:[%s250 + $0x70] sm:$0xf]
        %v281 = vld [vmem:[%s250 + $0x74] sm:$0xf]
        %v282 = vld [vmem:[%s250 + $0x78] sm:$0xf]
        %v283 = vld [vmem:[%s250 + $0x7c] sm:$0xf]
        %v284 = vld [vmem:[%s250 + $0x80] sm:$0xf]
        %v285 = vld [vmem:[%s250 + $0x84] sm:$0xf]
        %v286 = vld [vmem:[%s250 + $0x88] sm:$0xf]
        %v287 = vld [vmem:[%s250 + $0x8c] sm:$0xf]
        %v288 = vld [vmem:[%s250 + $0x90] sm:$0xf]
        %v289 = vld [vmem:[%s250 + $0x94] sm:$0xf]
        %v290 = vld [vmem:[%s250 + $0x98] sm:$0xf]
        %v291 = vld [vmem:[%s250 + $0x9c] sm:$0xf]
        %v292 = vld [vmem:[%s250 + $0xa0] sm:$0xf]
        %v293 = vld [vmem:[%s250 + $0xa4] sm:$0xf]
        %v294 = vld [vmem:[%s250 + $0xa8] sm:$0xf]
        %v295 = vld [vmem:[%s250 + $0xac] sm:$0xf]
        %v296 = vld [vmem:[%s250 + $0xb0] sm:$0xf]
        %v297 = vld [vmem:[%s250 + $0xb4] sm:$0xf]
        %v298 = vld [vmem:[%s250 + $0xb8] sm:$0xf]
        %v299 = vld [vmem:[%s250 + $0xbc] sm:$0xf]
        %v300 = vld [vmem:[%s250 + $0xc0] sm:$0xf]
        %v301 = vld [vmem:[%s250 + $0xc4] sm:$0xf]
        %v302 = vld [vmem:[%s250 + $0xc8] sm:$0xf]
        %v303 = vld [vmem:[%s250 + $0xcc] sm:$0xf]
        %v304 = vld [vmem:[%s250 + $0xd0] sm:$0xf]
        %v305 = vld [vmem:[%s250 + $0xd4] sm:$0xf]
        %v306 = vld [vmem:[%s250 + $0xd8] sm:$0xf]
        %v307 = vld [vmem:[%s250 + $0xdc] sm:$0xf]
        %v308 = vld [vmem:[%s250 + $0xe0] sm:$0xf]
        %v309 = vld [vmem:[%s250 + $0xe4] sm:$0xf]
        %v310 = vld [vmem:[%s250 + $0xe8] sm:$0xf]
        %v311 = vld [vmem:[%s250 + $0xec] sm:$0xf]
        %v312 = vld [vmem:[%s250 + $0xf0] sm:$0xf]
        %v313 = vld [vmem:[%s250 + $0xf4] sm:$0xf]
        %v314 = vld [vmem:[%s250 + $0xf8] sm:$0xf]
        %v315 = vld [vmem:[%s250 + $0xfc] sm:$0xf]
        %v316 = vld [vmem:[%s250 + $0x100] sm:$0xf]
        %v317 = vld [vmem:[%s250 + $0x104] sm:$0xf]
        %v318 = vld [vmem:[%s250 + $0x108] sm:$0xf]
        %v319 = vld [vmem:[%s250 + $0x10c] sm:$0xf]
        %v320 = vld [vmem:[%s250 + $0x110] sm:$0xf]
        %v321 = vld [vmem:[%s250 + $0x114] sm:$0xf]
        %v322 = vld [vmem:[%s250 + $0x118] sm:$0xf]
        %v323 = vld [vmem:[%s250 + $0x11c] sm:$0xf]
        %v324 = vld [vmem:[%s250 + $0x120] sm:$0x1]
        %v325 = vld [vmem:[%s250] sm:$0xe]
        %v398 = vunpack.c.l.b16 %v252
        %v399 = vunpack.c.l.b16 %v253
        %v400 = vunpack.c.l.b16 %v254
        %v401 = vunpack.c.l.b16 %v255
        %v402 = vunpack.c.l.b16 %v256
        %v403 = vunpack.c.l.b16 %v257
        %v404 = vunpack.c.l.b16 %v258
        %v405 = vunpack.c.l.b16 %v259
        %v406 = vunpack.c.l.b16 %v260
        %v407 = vunpack.c.l.b16 %v261
        %v408 = vunpack.c.l.b16 %v262
        %v409 = vunpack.c.l.b16 %v263
        %v410 = vunpack.c.l.b16 %v264
        %v411 = vunpack.c.l.b16 %v265
        %v412 = vunpack.c.l.b16 %v266
        %v413 = vunpack.c.l.b16 %v267
        %v414 = vunpack.c.l.b16 %v268
        %v415 = vunpack.c.l.b16 %v269
        %v416 = vunpack.c.l.b16 %v270
        %v417 = vunpack.c.l.b16 %v271
        %v418 = vunpack.c.l.b16 %v272
        %v419 = vunpack.c.l.b16 %v273
        %v420 = vunpack.c.l.b16 %v274
        %v421 = vunpack.c.l.b16 %v275
        %v422 = vunpack.c.l.b16 %v276
        %v423 = vunpack.c.l.b16 %v277
        %v424 = vunpack.c.l.b16 %v278
        %v425 = vunpack.c.l.b16 %v279
        %v426 = vunpack.c.l.b16 %v280
        %v427 = vunpack.c.l.b16 %v281
        %v428 = vunpack.c.l.b16 %v282
        %v429 = vunpack.c.l.b16 %v283
        %v430 = vunpack.c.l.b16 %v284
        %v431 = vunpack.c.l.b16 %v285
        %v432 = vunpack.c.l.b16 %v286
        %v433 = vunpack.c.l.b16 %v287
        %v434 = vunpack.c.l.b16 %v288
        %v435 = vunpack.c.l.b16 %v289
        %v436 = vunpack.c.l.b16 %v290
        %v437 = vunpack.c.l.b16 %v291
        %v438 = vunpack.c.l.b16 %v292
        %v439 = vunpack.c.l.b16 %v293
        %v440 = vunpack.c.l.b16 %v294
        %v441 = vunpack.c.l.b16 %v295
        %v442 = vunpack.c.l.b16 %v296
        %v443 = vunpack.c.l.b16 %v297
        %v444 = vunpack.c.l.b16 %v298
        %v445 = vunpack.c.l.b16 %v299
        %v446 = vunpack.c.l.b16 %v300
        %v447 = vunpack.c.l.b16 %v301
        %v448 = vunpack.c.l.b16 %v302
        %v449 = vunpack.c.l.b16 %v303
        %v450 = vunpack.c.l.b16 %v304
        %v451 = vunpack.c.l.b16 %v305
        %v452 = vunpack.c.l.b16 %v306
        %v453 = vunpack.c.l.b16 %v307
        %v454 = vunpack.c.l.b16 %v308
        %v455 = vunpack.c.l.b16 %v309
        %v456 = vunpack.c.l.b16 %v310
        %v457 = vunpack.c.l.b16 %v311
        %v458 = vunpack.c.l.b16 %v312
        %v459 = vunpack.c.l.b16 %v313
        %v460 = vunpack.c.l.b16 %v314
        %v461 = vunpack.c.l.b16 %v315
        %v462 = vunpack.c.l.b16 %v316
        %v463 = vunpack.c.l.b16 %v317
        %v464 = vunpack.c.l.b16 %v318
        %v465 = vunpack.c.l.b16 %v319
        %v466 = vunpack.c.l.b16 %v320
        %v467 = vunpack.c.l.b16 %v321
        %v468 = vunpack.c.l.b16 %v322
        %v469 = vunpack.c.l.b16 %v323
        %v470 = vpack.c.b16 %v399, %v398
        %v471 = vpack.c.b16 %v401, %v400
        %v472 = vpack.c.b16 %v403, %v402
        %v473 = vpack.c.b16 %v405, %v404
        %v474 = vpack.c.b16 %v407, %v406
        %v475 = vpack.c.b16 %v409, %v408
        %v476 = vpack.c.b16 %v411, %v410
        %v477 = vpack.c.b16 %v413, %v412
        %v478 = vpack.c.b16 %v415, %v414
        %v479 = vpack.c.b16 %v417, %v416
        %v480 = vpack.c.b16 %v419, %v418
        %v481 = vpack.c.b16 %v421, %v420
        %v482 = vpack.c.b16 %v423, %v422
        %v483 = vpack.c.b16 %v425, %v424
        %v484 = vpack.c.b16 %v427, %v426
        %v485 = vpack.c.b16 %v429, %v428
        %v486 = vpack.c.b16 %v431, %v430
        %v487 = vpack.c.b16 %v433, %v432
        %v488 = vpack.c.b16 %v435, %v434
        %v489 = vpack.c.b16 %v437, %v436
        %v490 = vpack.c.b16 %v439, %v438
        %v491 = vpack.c.b16 %v441, %v440
        %v492 = vpack.c.b16 %v443, %v442
        %v493 = vpack.c.b16 %v445, %v444
        %v494 = vpack.c.b16 %v447, %v446
        %v495 = vpack.c.b16 %v449, %v448
        %v496 = vpack.c.b16 %v451, %v450
        %v497 = vpack.c.b16 %v453, %v452
        %v498 = vpack.c.b16 %v455, %v454
        %v499 = vpack.c.b16 %v457, %v456
        %v500 = vpack.c.b16 %v459, %v458
        %v501 = vpack.c.b16 %v461, %v460
        %v502 = vpack.c.b16 %v463, %v462
        %v503 = vpack.c.b16 %v465, %v464
        %v504 = vpack.c.b16 %v467, %v466
        %v505 = vpack.c.b16 %v469, %v468
        %v507 = vunpack.c.l.b16 %v324
        %v508 = vpack.c.b16 %v507, %v507
        %vm509 = vsmask.f32 7424
        %v511 = vshrl.u32 %v470, 16
        %v513 = vshll.u32 %v470, 16
        %v515 = vrot.slane %v513, 1
        %v516 = vor.u32 %v511, %v515
        %v518 = vshll.u32 %v471, 16
        %v520 = vrot.slane %v518, 1
        %v521 = vsel %vm509, %v516, %v520
        %v522 = vshrl.u32 %v471, 16
        %v524 = vor.u32 %v522, %v520
        %v526 = vshll.u32 %v472, 16
        %v528 = vrot.slane %v526, 1
        %v529 = vsel %vm509, %v524, %v528
        %v530 = vshrl.u32 %v472, 16
        %v532 = vor.u32 %v530, %v528
        %v534 = vshll.u32 %v473, 16
        %v536 = vrot.slane %v534, 1
        %v537 = vsel %vm509, %v532, %v536
        %v538 = vshrl.u32 %v473, 16
        %v540 = vor.u32 %v538, %v536
        %v542 = vshll.u32 %v474, 16
        %v544 = vrot.slane %v542, 1
        %v545 = vsel %vm509, %v540, %v544
        %v546 = vshrl.u32 %v474, 16
        %v548 = vor.u32 %v546, %v544
        %v550 = vshll.u32 %v475, 16
        %v552 = vrot.slane %v550, 1
        %v553 = vsel %vm509, %v548, %v552
        %v554 = vshrl.u32 %v475, 16
        %v556 = vor.u32 %v554, %v552
        %v558 = vshll.u32 %v476, 16
        %v560 = vrot.slane %v558, 1
        %v561 = vsel %vm509, %v556, %v560
        %v562 = vshrl.u32 %v476, 16
        %v564 = vor.u32 %v562, %v560
        %v566 = vshll.u32 %v477, 16
        %v568 = vrot.slane %v566, 1
        %v569 = vsel %vm509, %v564, %v568
        %v570 = vshrl.u32 %v477, 16
        %v572 = vor.u32 %v570, %v568
        %v574 = vshll.u32 %v478, 16
        %v576 = vrot.slane %v574, 1
        %v577 = vsel %vm509, %v572, %v576
        %v578 = vshrl.u32 %v478, 16
        %v580 = vor.u32 %v578, %v576
        %v582 = vshll.u32 %v479, 16
        %v584 = vrot.slane %v582, 1
        %v585 = vsel %vm509, %v580, %v584
        %v586 = vshrl.u32 %v479, 16
        %v588 = vor.u32 %v586, %v584
        %v590 = vshll.u32 %v480, 16
        %v592 = vrot.slane %v590, 1
        %v593 = vsel %vm509, %v588, %v592
        %v594 = vshrl.u32 %v480, 16
        %v596 = vor.u32 %v594, %v592
        %v598 = vshll.u32 %v481, 16
        %v600 = vrot.slane %v598, 1
        %v601 = vsel %vm509, %v596, %v600
        %v602 = vshrl.u32 %v481, 16
        %v604 = vor.u32 %v602, %v600
        %v606 = vshll.u32 %v482, 16
        %v608 = vrot.slane %v606, 1
        %v609 = vsel %vm509, %v604, %v608
        %v610 = vshrl.u32 %v482, 16
        %v612 = vor.u32 %v610, %v608
        %v614 = vshll.u32 %v483, 16
        %v616 = vrot.slane %v614, 1
        %v617 = vsel %vm509, %v612, %v616
        %v618 = vshrl.u32 %v483, 16
        %v620 = vor.u32 %v618, %v616
        %v622 = vshll.u32 %v484, 16
        %v624 = vrot.slane %v622, 1
        %v625 = vsel %vm509, %v620, %v624
        %v626 = vshrl.u32 %v484, 16
        %v628 = vor.u32 %v626, %v624
        %v630 = vshll.u32 %v485, 16
        %v632 = vrot.slane %v630, 1
        %v633 = vsel %vm509, %v628, %v632
        %v634 = vshrl.u32 %v485, 16
        %v636 = vor.u32 %v634, %v632
        %v638 = vshll.u32 %v486, 16
        %v640 = vrot.slane %v638, 1
        %v641 = vsel %vm509, %v636, %v640
        %v642 = vshrl.u32 %v486, 16
        %v644 = vor.u32 %v642, %v640
        %v646 = vshll.u32 %v487, 16
        %v648 = vrot.slane %v646, 1
        %v649 = vsel %vm509, %v644, %v648
        %v650 = vshrl.u32 %v487, 16
        %v652 = vor.u32 %v650, %v648
        %v654 = vshll.u32 %v488, 16
        %v656 = vrot.slane %v654, 1
        %v657 = vsel %vm509, %v652, %v656
        %v658 = vshrl.u32 %v488, 16
        %v660 = vor.u32 %v658, %v656
        %v662 = vshll.u32 %v489, 16
        %v664 = vrot.slane %v662, 1
        %v665 = vsel %vm509, %v660, %v664
        %v666 = vshrl.u32 %v489, 16
        %v668 = vor.u32 %v666, %v664
        %v670 = vshll.u32 %v490, 16
        %v672 = vrot.slane %v670, 1
        %v673 = vsel %vm509, %v668, %v672
        %v674 = vshrl.u32 %v490, 16
        %v676 = vor.u32 %v674, %v672
        %v678 = vshll.u32 %v491, 16
        %v680 = vrot.slane %v678, 1
        %v681 = vsel %vm509, %v676, %v680
        %v682 = vshrl.u32 %v491, 16
        %v684 = vor.u32 %v682, %v680
        %v686 = vshll.u32 %v492, 16
        %v688 = vrot.slane %v686, 1
        %v689 = vsel %vm509, %v684, %v688
        %v690 = vshrl.u32 %v492, 16
        %v692 = vor.u32 %v690, %v688
        %v694 = vshll.u32 %v493, 16
        %v696 = vrot.slane %v694, 1
        %v697 = vsel %vm509, %v692, %v696
        %v698 = vshrl.u32 %v493, 16
        %v700 = vor.u32 %v698, %v696
        %v702 = vshll.u32 %v494, 16
        %v704 = vrot.slane %v702, 1
        %v705 = vsel %vm509, %v700, %v704
        %v706 = vshrl.u32 %v494, 16
        %v708 = vor.u32 %v706, %v704
        %v710 = vshll.u32 %v495, 16
        %v712 = vrot.slane %v710, 1
        %v713 = vsel %vm509, %v708, %v712
        %v714 = vshrl.u32 %v495, 16
        %v716 = vor.u32 %v714, %v712
        %v718 = vshll.u32 %v496, 16
        %v720 = vrot.slane %v718, 1
        %v721 = vsel %vm509, %v716, %v720
        %v722 = vshrl.u32 %v496, 16
        %v724 = vor.u32 %v722, %v720
        %v726 = vshll.u32 %v497, 16
        %v728 = vrot.slane %v726, 1
        %v729 = vsel %vm509, %v724, %v728
        %v730 = vshrl.u32 %v497, 16
        %v732 = vor.u32 %v730, %v728
        %v734 = vshll.u32 %v498, 16
        %v736 = vrot.slane %v734, 1
        %v737 = vsel %vm509, %v732, %v736
        %v738 = vshrl.u32 %v498, 16
        %v740 = vor.u32 %v738, %v736
        %v742 = vshll.u32 %v499, 16
        %v744 = vrot.slane %v742, 1
        %v745 = vsel %vm509, %v740, %v744
        %v746 = vshrl.u32 %v499, 16
        %v748 = vor.u32 %v746, %v744
        %v750 = vshll.u32 %v500, 16
        %v752 = vrot.slane %v750, 1
        %v753 = vsel %vm509, %v748, %v752
        %v754 = vshrl.u32 %v500, 16
        %v756 = vor.u32 %v754, %v752
        %v758 = vshll.u32 %v501, 16
        %v760 = vrot.slane %v758, 1
        %v761 = vsel %vm509, %v756, %v760
        %v762 = vshrl.u32 %v501, 16
        %v764 = vor.u32 %v762, %v760
        %v766 = vshll.u32 %v502, 16
        %v768 = vrot.slane %v766, 1
        %v769 = vsel %vm509, %v764, %v768
        %v770 = vshrl.u32 %v502, 16
        %v772 = vor.u32 %v770, %v768
        %v774 = vshll.u32 %v503, 16
        %v776 = vrot.slane %v774, 1
        %v777 = vsel %vm509, %v772, %v776
        %v778 = vshrl.u32 %v503, 16
        %v780 = vor.u32 %v778, %v776
        %v782 = vshll.u32 %v504, 16
        %v784 = vrot.slane %v782, 1
        %v785 = vsel %vm509, %v780, %v784
        %v786 = vshrl.u32 %v504, 16
        %v788 = vor.u32 %v786, %v784
        %v790 = vshll.u32 %v505, 16
        %v792 = vrot.slane %v790, 1
        %v793 = vsel %vm509, %v788, %v792
        %v794 = vshrl.u32 %v505, 16
        %v796 = vor.u32 %v794, %v792
        %v798 = vshll.u32 %v508, 16
        %v800 = vrot.slane %v798, 1
        %v801 = vsel %vm509, %v796, %v800
        %802 = vrot.lane.b32.xlu0 %v521, 4
        %v803 = vpop.permute.xlu0 %802
        %804 = vrot.lane.b32.xlu0 %v529, 4
        %v805 = vpop.permute.xlu0 %804
        %806 = vrot.lane.b32.xlu0 %v537, 4
        %v807 = vpop.permute.xlu0 %806
        %808 = vrot.lane.b32.xlu0 %v545, 4
        %v809 = vpop.permute.xlu0 %808
        %810 = vrot.lane.b32.xlu0 %v553, 4
        %v811 = vpop.permute.xlu0 %810
        %812 = vrot.lane.b32.xlu0 %v561, 4
        %v813 = vpop.permute.xlu0 %812
        %814 = vrot.lane.b32.xlu0 %v569, 4
        %v815 = vpop.permute.xlu0 %814
        %816 = vrot.lane.b32.xlu0 %v577, 4
        %v817 = vpop.permute.xlu0 %816
        %818 = vrot.lane.b32.xlu0 %v585, 4
        %v819 = vpop.permute.xlu0 %818
        %820 = vrot.lane.b32.xlu0 %v593, 4
        %v821 = vpop.permute.xlu0 %820
        %822 = vrot.lane.b32.xlu0 %v601, 4
        %v823 = vpop.permute.xlu0 %822
        %824 = vrot.lane.b32.xlu0 %v609, 4
        %v825 = vpop.permute.xlu0 %824
        %826 = vrot.lane.b32.xlu0 %v617, 4
        %v827 = vpop.permute.xlu0 %826
        %828 = vrot.lane.b32.xlu0 %v625, 4
        %v829 = vpop.permute.xlu0 %828
        %830 = vrot.lane.b32.xlu0 %v633, 4
        %v831 = vpop.permute.xlu0 %830
        %832 = vrot.lane.b32.xlu0 %v641, 4
        %v833 = vpop.permute.xlu0 %832
        %834 = vrot.lane.b32.xlu0 %v649, 4
        %v835 = vpop.permute.xlu0 %834
        %836 = vrot.lane.b32.xlu0 %v657, 4
        %v837 = vpop.permute.xlu0 %836
        %838 = vrot.lane.b32.xlu0 %v665, 4
        %v839 = vpop.permute.xlu0 %838
        %840 = vrot.lane.b32.xlu0 %v673, 4
        %v841 = vpop.permute.xlu0 %840
        %842 = vrot.lane.b32.xlu0 %v681, 4
        %v843 = vpop.permute.xlu0 %842
        %844 = vrot.lane.b32.xlu0 %v689, 4
        %v845 = vpop.permute.xlu0 %844
        %846 = vrot.lane.b32.xlu0 %v697, 4
        %v847 = vpop.permute.xlu0 %846
        %848 = vrot.lane.b32.xlu0 %v705, 4
        %v849 = vpop.permute.xlu0 %848
        %850 = vrot.lane.b32.xlu0 %v713, 4
        %v851 = vpop.permute.xlu0 %850
        %852 = vrot.lane.b32.xlu0 %v721, 4
        %v853 = vpop.permute.xlu0 %852
        %854 = vrot.lane.b32.xlu0 %v729, 4
        %v855 = vpop.permute.xlu0 %854
        %856 = vrot.lane.b32.xlu0 %v737, 4
        %v857 = vpop.permute.xlu0 %856
        %858 = vrot.lane.b32.xlu0 %v745, 4
        %v859 = vpop.permute.xlu0 %858
        %860 = vrot.lane.b32.xlu0 %v753, 4
        %v861 = vpop.permute.xlu0 %860
        %862 = vrot.lane.b32.xlu0 %v761, 4
        %v863 = vpop.permute.xlu0 %862
        %864 = vrot.lane.b32.xlu0 %v769, 4
        %v865 = vpop.permute.xlu0 %864
        %866 = vrot.lane.b32.xlu0 %v777, 4
        %v867 = vpop.permute.xlu0 %866
        %868 = vrot.lane.b32.xlu0 %v785, 4
        %v869 = vpop.permute.xlu0 %868
        %870 = vrot.lane.b32.xlu0 %v793, 4
        %v871 = vpop.permute.xlu0 %870
        %872 = vrot.lane.b32.xlu0 %v801, 4
        %v873 = vpop.permute.xlu0 %872
        %v875 = vunpack.c.l.b16 %v325
        %v876 = vpack.c.b16 %v399, %v875
        %vm877 = vcmask 1046528
        %v878 = vrot.slane %v876, 1
        %v879 = vrot.slane %v471, 1
        %v880 = vsel %vm877, %v878, %v879
        %v881 = vrot.slane %v472, 1
        %v882 = vsel %vm877, %v879, %v881
        %v883 = vrot.slane %v473, 1
        %v884 = vsel %vm877, %v881, %v883
        %v885 = vrot.slane %v474, 1
        %v886 = vsel %vm877, %v883, %v885
        %v887 = vrot.slane %v475, 1
        %v888 = vsel %vm877, %v885, %v887
        %v889 = vrot.slane %v476, 1
        %v890 = vsel %vm877, %v887, %v889
        %v891 = vrot.slane %v477, 1
        %v892 = vsel %vm877, %v889, %v891
        %v893 = vrot.slane %v478, 1
        %v894 = vsel %vm877, %v891, %v893
        %v895 = vrot.slane %v479, 1
        %v896 = vsel %vm877, %v893, %v895
        %v897 = vrot.slane %v480, 1
        %v898 = vsel %vm877, %v895, %v897
        %v899 = vrot.slane %v481, 1
        %v900 = vsel %vm877, %v897, %v899
        %v901 = vrot.slane %v482, 1
        %v902 = vsel %vm877, %v899, %v901
        %v903 = vrot.slane %v483, 1
        %v904 = vsel %vm877, %v901, %v903
        %v905 = vrot.slane %v484, 1
        %v906 = vsel %vm877, %v903, %v905
        %v907 = vrot.slane %v485, 1
        %v908 = vsel %vm877, %v905, %v907
        %v909 = vrot.slane %v486, 1
        %v910 = vsel %vm877, %v907, %v909
        %v911 = vrot.slane %v487, 1
        %v912 = vsel %vm877, %v909, %v911
        %v913 = vrot.slane %v488, 1
        %v914 = vsel %vm877, %v911, %v913
        %v915 = vrot.slane %v489, 1
        %v916 = vsel %vm877, %v913, %v915
        %v917 = vrot.slane %v490, 1
        %v918 = vsel %vm877, %v915, %v917
        %v919 = vrot.slane %v491, 1
        %v920 = vsel %vm877, %v917, %v919
        %v921 = vrot.slane %v492, 1
        %v922 = vsel %vm877, %v919, %v921
        %v923 = vrot.slane %v493, 1
        %v924 = vsel %vm877, %v921, %v923
        %v925 = vrot.slane %v494, 1
        %v926 = vsel %vm877, %v923, %v925
        %v927 = vrot.slane %v495, 1
        %v928 = vsel %vm877, %v925, %v927
        %v929 = vrot.slane %v496, 1
        %v930 = vsel %vm877, %v927, %v929
        %v931 = vrot.slane %v497, 1
        %v932 = vsel %vm877, %v929, %v931
        %v933 = vrot.slane %v498, 1
        %v934 = vsel %vm877, %v931, %v933
        %v935 = vrot.slane %v499, 1
        %v936 = vsel %vm877, %v933, %v935
        %v937 = vrot.slane %v500, 1
        %v938 = vsel %vm877, %v935, %v937
        %v939 = vrot.slane %v501, 1
        %v940 = vsel %vm877, %v937, %v939
        %v941 = vrot.slane %v502, 1
        %v942 = vsel %vm877, %v939, %v941
        %v943 = vrot.slane %v503, 1
        %v944 = vsel %vm877, %v941, %v943
        %v945 = vrot.slane %v504, 1
        %v946 = vsel %vm877, %v943, %v945
        %v947 = vrot.slane %v505, 1
        %v948 = vsel %vm877, %v945, %v947
        %v949 = vrot.slane %v508, 1
        %v950 = vsel %vm877, %v947, %v949
        %951 = vrot.lane.b32.xlu0 %v880, 8
        %v952 = vpop.permute.xlu0 %951
        %953 = vrot.lane.b32.xlu0 %v882, 8
        %v954 = vpop.permute.xlu0 %953
        %955 = vrot.lane.b32.xlu0 %v884, 8
        %v956 = vpop.permute.xlu0 %955
        %957 = vrot.lane.b32.xlu0 %v886, 8
        %v958 = vpop.permute.xlu0 %957
        %959 = vrot.lane.b32.xlu0 %v888, 8
        %v960 = vpop.permute.xlu0 %959
        %961 = vrot.lane.b32.xlu0 %v890, 8
        %v962 = vpop.permute.xlu0 %961
        %963 = vrot.lane.b32.xlu0 %v892, 8
        %v964 = vpop.permute.xlu0 %963
        %965 = vrot.lane.b32.xlu0 %v894, 8
        %v966 = vpop.permute.xlu0 %965
        %967 = vrot.lane.b32.xlu0 %v896, 8
        %v968 = vpop.permute.xlu0 %967
        %969 = vrot.lane.b32.xlu0 %v898, 8
        %v970 = vpop.permute.xlu0 %969
        %971 = vrot.lane.b32.xlu0 %v900, 8
        %v972 = vpop.permute.xlu0 %971
        %973 = vrot.lane.b32.xlu0 %v902, 8
        %v974 = vpop.permute.xlu0 %973
        %975 = vrot.lane.b32.xlu0 %v904, 8
        %v976 = vpop.permute.xlu0 %975
        %977 = vrot.lane.b32.xlu0 %v906, 8
        %v978 = vpop.permute.xlu0 %977
        %979 = vrot.lane.b32.xlu0 %v908, 8
        %v980 = vpop.permute.xlu0 %979
        %981 = vrot.lane.b32.xlu0 %v910, 8
        %v982 = vpop.permute.xlu0 %981
        %983 = vrot.lane.b32.xlu0 %v912, 8
        %v984 = vpop.permute.xlu0 %983
        %985 = vrot.lane.b32.xlu0 %v914, 8
        %v986 = vpop.permute.xlu0 %985
        %987 = vrot.lane.b32.xlu0 %v916, 8
        %v988 = vpop.permute.xlu0 %987
        %989 = vrot.lane.b32.xlu0 %v918, 8
        %v990 = vpop.permute.xlu0 %989
        %991 = vrot.lane.b32.xlu0 %v920, 8
        %v992 = vpop.permute.xlu0 %991
        %993 = vrot.lane.b32.xlu0 %v922, 8
        %v994 = vpop.permute.xlu0 %993
        %995 = vrot.lane.b32.xlu0 %v924, 8
        %v996 = vpop.permute.xlu0 %995
        %997 = vrot.lane.b32.xlu0 %v926, 8
        %v998 = vpop.permute.xlu0 %997
        %999 = vrot.lane.b32.xlu0 %v928, 8
        %v1000 = vpop.permute.xlu0 %999
        %1001 = vrot.lane.b32.xlu0 %v930, 8
        %v1002 = vpop.permute.xlu0 %1001
        %1003 = vrot.lane.b32.xlu0 %v932, 8
        %v1004 = vpop.permute.xlu0 %1003
        %1005 = vrot.lane.b32.xlu0 %v934, 8
        %v1006 = vpop.permute.xlu0 %1005
        %1007 = vrot.lane.b32.xlu0 %v936, 8
        %v1008 = vpop.permute.xlu0 %1007
        %1009 = vrot.lane.b32.xlu0 %v938, 8
        %v1010 = vpop.permute.xlu0 %1009
        %1011 = vrot.lane.b32.xlu0 %v940, 8
        %v1012 = vpop.permute.xlu0 %1011
        %1013 = vrot.lane.b32.xlu0 %v942, 8
        %v1014 = vpop.permute.xlu0 %1013
        %1015 = vrot.lane.b32.xlu0 %v944, 8
        %v1016 = vpop.permute.xlu0 %1015
        %1017 = vrot.lane.b32.xlu0 %v946, 8
        %v1018 = vpop.permute.xlu0 %1017
        %1019 = vrot.lane.b32.xlu0 %v948, 8
        %v1020 = vpop.permute.xlu0 %1019
        %1021 = vrot.lane.b32.xlu0 %v950, 8
        %v1022 = vpop.permute.xlu0 %1021
        %vm1023 = vcmask 31744
        %v1025 = vsel %vm1023, %v470, %v803
        %v1027 = vsel %vm1023, %v471, %v805
        %v1029 = vsel %vm1023, %v472, %v807
        %v1031 = vsel %vm1023, %v473, %v809
        %v1033 = vsel %vm1023, %v474, %v811
        %v1035 = vsel %vm1023, %v475, %v813
        %v1037 = vsel %vm1023, %v476, %v815
        %v1039 = vsel %vm1023, %v477, %v817
        %v1041 = vsel %vm1023, %v478, %v819
        %v1043 = vsel %vm1023, %v479, %v821
        %v1045 = vsel %vm1023, %v480, %v823
        %v1047 = vsel %vm1023, %v481, %v825
        %v1049 = vsel %vm1023, %v482, %v827
        %v1051 = vsel %vm1023, %v483, %v829
        %v1053 = vsel %vm1023, %v484, %v831
        %v1055 = vsel %vm1023, %v485, %v833
        %v1057 = vsel %vm1023, %v486, %v835
        %v1059 = vsel %vm1023, %v487, %v837
        %v1061 = vsel %vm1023, %v488, %v839
        %v1063 = vsel %vm1023, %v489, %v841
        %v1065 = vsel %vm1023, %v490, %v843
        %v1067 = vsel %vm1023, %v491, %v845
        %v1069 = vsel %vm1023, %v492, %v847
        %v1071 = vsel %vm1023, %v493, %v849
        %v1073 = vsel %vm1023, %v494, %v851
        %v1075 = vsel %vm1023, %v495, %v853
        %v1077 = vsel %vm1023, %v496, %v855
        %v1079 = vsel %vm1023, %v497, %v857
        %v1081 = vsel %vm1023, %v498, %v859
        %v1083 = vsel %vm1023, %v499, %v861
        %v1085 = vsel %vm1023, %v500, %v863
        %v1087 = vsel %vm1023, %v501, %v865
        %v1089 = vsel %vm1023, %v502, %v867
        %v1091 = vsel %vm1023, %v503, %v869
        %v1093 = vsel %vm1023, %v504, %v871
        %v1095 = vsel %vm1023, %v505, %v873
        %vm1096 = vcmask 64512
        %v1098 = vsel %vm1096, %v1025, %v952
        %v1100 = vsel %vm1096, %v1027, %v954
        %v1102 = vsel %vm1096, %v1029, %v956
        %v1104 = vsel %vm1096, %v1031, %v958
        %v1106 = vsel %vm1096, %v1033, %v960
        %v1108 = vsel %vm1096, %v1035, %v962
        %v1110 = vsel %vm1096, %v1037, %v964
        %v1112 = vsel %vm1096, %v1039, %v966
        %v1114 = vsel %vm1096, %v1041, %v968
        %v1116 = vsel %vm1096, %v1043, %v970
        %v1118 = vsel %vm1096, %v1045, %v972
        %v1120 = vsel %vm1096, %v1047, %v974
        %v1122 = vsel %vm1096, %v1049, %v976
        %v1124 = vsel %vm1096, %v1051, %v978
        %v1126 = vsel %vm1096, %v1053, %v980
        %v1128 = vsel %vm1096, %v1055, %v982
        %v1130 = vsel %vm1096, %v1057, %v984
        %v1132 = vsel %vm1096, %v1059, %v986
        %v1134 = vsel %vm1096, %v1061, %v988
        %v1136 = vsel %vm1096, %v1063, %v990
        %v1138 = vsel %vm1096, %v1065, %v992
        %v1140 = vsel %vm1096, %v1067, %v994
        %v1142 = vsel %vm1096, %v1069, %v996
        %v1144 = vsel %vm1096, %v1071, %v998
        %v1146 = vsel %vm1096, %v1073, %v1000
        %v1148 = vsel %vm1096, %v1075, %v1002
        %v1150 = vsel %vm1096, %v1077, %v1004
        %v1152 = vsel %vm1096, %v1079, %v1006
        %v1154 = vsel %vm1096, %v1081, %v1008
        %v1156 = vsel %vm1096, %v1083, %v1010
        %v1158 = vsel %vm1096, %v1085, %v1012
        %v1160 = vsel %vm1096, %v1087, %v1014
        %v1162 = vsel %vm1096, %v1089, %v1016
        %v1164 = vsel %vm1096, %v1091, %v1018
        %v1166 = vsel %vm1096, %v1093, %v1020
        %v1168 = vsel %vm1096, %v1095, %v1022
        %1201 = vrot.lane.b32.xlu0 %v1102, 12
        %v1202 = vpop.permute.xlu0 %1201
        %1203 = vrot.lane.b32.xlu0 %v1104, 12
        %v1204 = vpop.permute.xlu0 %1203
        %1205 = vrot.lane.b32.xlu0 %v1106, 12
        %v1206 = vpop.permute.xlu0 %1205
        %1207 = vrot.lane.b32.xlu0 %v1108, 12
        %v1208 = vpop.permute.xlu0 %1207
        %1209 = vrot.lane.b32.xlu0 %v1110, 12
        %v1210 = vpop.permute.xlu0 %1209
        %1211 = vrot.lane.b32.xlu0 %v1112, 12
        %v1212 = vpop.permute.xlu0 %1211
        %1213 = vrot.lane.b32.xlu0 %v1114, 12
        %v1214 = vpop.permute.xlu0 %1213
        %1215 = vrot.lane.b32.xlu0 %v1116, 12
        %v1216 = vpop.permute.xlu0 %1215
        %1217 = vrot.lane.b32.xlu0 %v1118, 12
        %v1218 = vpop.permute.xlu0 %1217
        %1219 = vrot.lane.b32.xlu0 %v1120, 12
        %v1220 = vpop.permute.xlu0 %1219
        %1221 = vrot.lane.b32.xlu0 %v1122, 12
        %v1222 = vpop.permute.xlu0 %1221
        %1223 = vrot.lane.b32.xlu0 %v1124, 12
        %v1224 = vpop.permute.xlu0 %1223
        %1225 = vrot.lane.b32.xlu0 %v1126, 12
        %v1226 = vpop.permute.xlu0 %1225
        %1227 = vrot.lane.b32.xlu0 %v1128, 12
        %v1228 = vpop.permute.xlu0 %1227
        %1229 = vrot.lane.b32.xlu0 %v1130, 12
        %v1230 = vpop.permute.xlu0 %1229
        %1231 = vrot.lane.b32.xlu0 %v1132, 12
        %v1232 = vpop.permute.xlu0 %1231
        %1233 = vrot.lane.b32.xlu0 %v1134, 12
        %v1234 = vpop.permute.xlu0 %1233
        %1235 = vrot.lane.b32.xlu0 %v1136, 12
        %v1236 = vpop.permute.xlu0 %1235
        %1237 = vrot.lane.b32.xlu0 %v1138, 12
        %v1238 = vpop.permute.xlu0 %1237
        %1239 = vrot.lane.b32.xlu0 %v1140, 12
        %v1240 = vpop.permute.xlu0 %1239
        %1241 = vrot.lane.b32.xlu0 %v1142, 12
        %v1242 = vpop.permute.xlu0 %1241
        %1243 = vrot.lane.b32.xlu0 %v1144, 12
        %v1244 = vpop.permute.xlu0 %1243
        %1245 = vrot.lane.b32.xlu0 %v1146, 12
        %v1246 = vpop.permute.xlu0 %1245
        %1247 = vrot.lane.b32.xlu0 %v1148, 12
        %v1248 = vpop.permute.xlu0 %1247
        %1249 = vrot.lane.b32.xlu0 %v1150, 12
        %v1250 = vpop.permute.xlu0 %1249
        %1251 = vrot.lane.b32.xlu0 %v1152, 12
        %v1252 = vpop.permute.xlu0 %1251
        %1253 = vrot.lane.b32.xlu0 %v1154, 12
        %v1254 = vpop.permute.xlu0 %1253
        %1255 = vrot.lane.b32.xlu0 %v1156, 12
        %v1256 = vpop.permute.xlu0 %1255
        %1257 = vrot.lane.b32.xlu0 %v1158, 12
        %v1258 = vpop.permute.xlu0 %1257
        %1259 = vrot.lane.b32.xlu0 %v1160, 12
        %v1260 = vpop.permute.xlu0 %1259
        %1261 = vrot.lane.b32.xlu0 %v1162, 12
        %v1262 = vpop.permute.xlu0 %1261
        %1263 = vrot.lane.b32.xlu0 %v1164, 12
        %v1264 = vpop.permute.xlu0 %1263
        %1267 = vrot.lane.b32.xlu0 %v1106, 24
        %v1268 = vpop.permute.xlu0 %1267
        %1269 = vrot.lane.b32.xlu0 %v1108, 24
        %v1270 = vpop.permute.xlu0 %1269
        %1271 = vrot.lane.b32.xlu0 %v1110, 24
        %v1272 = vpop.permute.xlu0 %1271
        %1273 = vrot.lane.b32.xlu0 %v1112, 24
        %v1274 = vpop.permute.xlu0 %1273
        %1275 = vrot.lane.b32.xlu0 %v1114, 24
        %v1276 = vpop.permute.xlu0 %1275
        %1277 = vrot.lane.b32.xlu0 %v1116, 24
        %v1278 = vpop.permute.xlu0 %1277
        %1279 = vrot.lane.b32.xlu0 %v1118, 24
        %v1280 = vpop.permute.xlu0 %1279
        %1281 = vrot.lane.b32.xlu0 %v1120, 24
        %v1282 = vpop.permute.xlu0 %1281
        %1283 = vrot.lane.b32.xlu0 %v1122, 24
        %v1284 = vpop.permute.xlu0 %1283
        %1285 = vrot.lane.b32.xlu0 %v1124, 24
        %v1286 = vpop.permute.xlu0 %1285
        %1287 = vrot.lane.b32.xlu0 %v1126, 24
        %v1288 = vpop.permute.xlu0 %1287
        %1289 = vrot.lane.b32.xlu0 %v1128, 24
        %v1290 = vpop.permute.xlu0 %1289
        %1291 = vrot.lane.b32.xlu0 %v1130, 24
        %v1292 = vpop.permute.xlu0 %1291
        %1293 = vrot.lane.b32.xlu0 %v1132, 24
        %v1294 = vpop.permute.xlu0 %1293
        %1295 = vrot.lane.b32.xlu0 %v1134, 24
        %v1296 = vpop.permute.xlu0 %1295
        %1297 = vrot.lane.b32.xlu0 %v1136, 24
        %v1298 = vpop.permute.xlu0 %1297
        %1299 = vrot.lane.b32.xlu0 %v1138, 24
        %v1300 = vpop.permute.xlu0 %1299
        %1301 = vrot.lane.b32.xlu0 %v1140, 24
        %v1302 = vpop.permute.xlu0 %1301
        %1303 = vrot.lane.b32.xlu0 %v1142, 24
        %v1304 = vpop.permute.xlu0 %1303
        %1305 = vrot.lane.b32.xlu0 %v1144, 24
        %v1306 = vpop.permute.xlu0 %1305
        %1307 = vrot.lane.b32.xlu0 %v1146, 24
        %v1308 = vpop.permute.xlu0 %1307
        %1309 = vrot.lane.b32.xlu0 %v1148, 24
        %v1310 = vpop.permute.xlu0 %1309
        %1311 = vrot.lane.b32.xlu0 %v1150, 24
        %v1312 = vpop.permute.xlu0 %1311
        %1313 = vrot.lane.b32.xlu0 %v1152, 24
        %v1314 = vpop.permute.xlu0 %1313
        %1315 = vrot.lane.b32.xlu0 %v1154, 24
        %v1316 = vpop.permute.xlu0 %1315
        %1317 = vrot.lane.b32.xlu0 %v1156, 24
        %v1318 = vpop.permute.xlu0 %1317
        %1319 = vrot.lane.b32.xlu0 %v1158, 24
        %v1320 = vpop.permute.xlu0 %1319
        %1321 = vrot.lane.b32.xlu0 %v1160, 24
        %v1322 = vpop.permute.xlu0 %1321
        %1323 = vrot.lane.b32.xlu0 %v1162, 24
        %v1324 = vpop.permute.xlu0 %1323
        %1325 = vrot.lane.b32.xlu0 %v1164, 24
        %v1326 = vpop.permute.xlu0 %1325
        %1327 = vrot.lane.b32.xlu0 %v1166, 24
        %v1328 = vpop.permute.xlu0 %1327
        %1329 = vrot.lane.b32.xlu0 %v1168, 24
        %v1330 = vpop.permute.xlu0 %1329
        %vm1331 = vcmask 97280
        %v1333 = vsel %vm1331, %v1098, %v1202
        %v1335 = vsel %vm1331, %v1100, %v1204
        %v1337 = vsel %vm1331, %v1102, %v1206
        %v1339 = vsel %vm1331, %v1104, %v1208
        %v1341 = vsel %vm1331, %v1106, %v1210
        %v1343 = vsel %vm1331, %v1108, %v1212
        %v1345 = vsel %vm1331, %v1110, %v1214
        %v1347 = vsel %vm1331, %v1112, %v1216
        %v1349 = vsel %vm1331, %v1114, %v1218
        %v1351 = vsel %vm1331, %v1116, %v1220
        %v1353 = vsel %vm1331, %v1118, %v1222
        %v1355 = vsel %vm1331, %v1120, %v1224
        %v1357 = vsel %vm1331, %v1122, %v1226
        %v1359 = vsel %vm1331, %v1124, %v1228
        %v1361 = vsel %vm1331, %v1126, %v1230
        %v1363 = vsel %vm1331, %v1128, %v1232
        %v1365 = vsel %vm1331, %v1130, %v1234
        %v1367 = vsel %vm1331, %v1132, %v1236
        %v1369 = vsel %vm1331, %v1134, %v1238
        %v1371 = vsel %vm1331, %v1136, %v1240
        %v1373 = vsel %vm1331, %v1138, %v1242
        %v1375 = vsel %vm1331, %v1140, %v1244
        %v1377 = vsel %vm1331, %v1142, %v1246
        %v1379 = vsel %vm1331, %v1144, %v1248
        %v1381 = vsel %vm1331, %v1146, %v1250
        %v1383 = vsel %vm1331, %v1148, %v1252
        %v1385 = vsel %vm1331, %v1150, %v1254
        %v1387 = vsel %vm1331, %v1152, %v1256
        %v1389 = vsel %vm1331, %v1154, %v1258
        %v1391 = vsel %vm1331, %v1156, %v1260
        %v1393 = vsel %vm1331, %v1158, %v1262
        %v1395 = vsel %vm1331, %v1160, %v1264
        %vm1396 = vcmask 195584
        %v1398 = vsel %vm1396, %v1333, %v1268
        %v1400 = vsel %vm1396, %v1335, %v1270
        %v1402 = vsel %vm1396, %v1337, %v1272
        %v1404 = vsel %vm1396, %v1339, %v1274
        %v1406 = vsel %vm1396, %v1341, %v1276
        %v1408 = vsel %vm1396, %v1343, %v1278
        %v1410 = vsel %vm1396, %v1345, %v1280
        %v1412 = vsel %vm1396, %v1347, %v1282
        %v1414 = vsel %vm1396, %v1349, %v1284
        %v1416 = vsel %vm1396, %v1351, %v1286
        %v1418 = vsel %vm1396, %v1353, %v1288
        %v1420 = vsel %vm1396, %v1355, %v1290
        %v1422 = vsel %vm1396, %v1357, %v1292
        %v1424 = vsel %vm1396, %v1359, %v1294
        %v1426 = vsel %vm1396, %v1361, %v1296
        %v1428 = vsel %vm1396, %v1363, %v1298
        %v1430 = vsel %vm1396, %v1365, %v1300
        %v1432 = vsel %vm1396, %v1367, %v1302
        %v1434 = vsel %vm1396, %v1369, %v1304
        %v1436 = vsel %vm1396, %v1371, %v1306
        %v1438 = vsel %vm1396, %v1373, %v1308
        %v1440 = vsel %vm1396, %v1375, %v1310
        %v1442 = vsel %vm1396, %v1377, %v1312
        %v1444 = vsel %vm1396, %v1379, %v1314
        %v1446 = vsel %vm1396, %v1381, %v1316
        %v1448 = vsel %vm1396, %v1383, %v1318
        %v1450 = vsel %vm1396, %v1385, %v1320
        %v1452 = vsel %vm1396, %v1387, %v1322
        %v1454 = vsel %vm1396, %v1389, %v1324
        %v1456 = vsel %vm1396, %v1391, %v1326
        %v1458 = vsel %vm1396, %v1393, %v1328
        %v1460 = vsel %vm1396, %v1395, %v1330
        %v1461 = vld [vmem:[%s1] sm:$0xf]
        %v1462 = vld [vmem:[%s1 + $0x4] sm:$0xf]
        %v1463 = vld [vmem:[%s1 + $0x8] sm:$0xf]
        %v1464 = vld [vmem:[%s1 + $0xc] sm:$0xf]
        %v1465 = vld [vmem:[%s1 + $0x10] sm:$0x3]
        %v1466 = vld [vmem:[%s2] sm:$0x1]
        %v1468 = vperm.slane %v1466, 0
        %v1475 = vunpack.c.l.b16 %v1461
        %v1476 = vunpack.c.l.b16 %v1462
        %v1477 = vunpack.c.l.b16 %v1463
        %v1478 = vunpack.c.l.b16 %v1464
        %v1479 = vunpack.c.l.b16 %v1465
        %v1480 = vpack.c.b16 %v1476, %v1475
        %v1481 = vpack.c.b16 %v1478, %v1477
        %v1482 = vpack.c.b16 %v1479, %v1479
        %vm1485 = vcmask 293888
        %v1486 = vsel %vm1485, %v1398, 0
        %v1488 = vsel %vm1485, %v1400, 0
        %v1490 = vsel %vm1485, %v1402, 0
        %v1492 = vsel %vm1485, %v1404, 0
        %v1494 = vsel %vm1485, %v1406, 0
        %v1496 = vsel %vm1485, %v1408, 0
        %v1498 = vsel %vm1485, %v1410, 0
        %v1500 = vsel %vm1485, %v1412, 0
        %v1502 = vsel %vm1485, %v1414, 0
        %v1504 = vsel %vm1485, %v1416, 0
        %v1506 = vsel %vm1485, %v1418, 0
        %v1508 = vsel %vm1485, %v1420, 0
        %v1510 = vsel %vm1485, %v1422, 0
        %v1512 = vsel %vm1485, %v1424, 0
        %v1514 = vsel %vm1485, %v1426, 0
        %v1516 = vsel %vm1485, %v1428, 0
        %v1518 = vsel %vm1485, %v1430, 0
        %v1520 = vsel %vm1485, %v1432, 0
        %v1522 = vsel %vm1485, %v1434, 0
        %v1524 = vsel %vm1485, %v1436, 0
        %v1526 = vsel %vm1485, %v1438, 0
        %v1528 = vsel %vm1485, %v1440, 0
        %v1530 = vsel %vm1485, %v1442, 0
        %v1532 = vsel %vm1485, %v1444, 0
        %v1534 = vsel %vm1485, %v1446, 0
        %v1536 = vsel %vm1485, %v1448, 0
        %v1538 = vsel %vm1485, %v1450, 0
        %v1540 = vsel %vm1485, %v1452, 0
        %v1542 = vsel %vm1485, %v1454, 0
        %v1544 = vsel %vm1485, %v1456, 0
        %v1546 = vsel %vm1485, %v1458, 0
        %v1548 = vsel %vm1485, %v1460, 0
        %vm1550 = vcmask 1041408
        %v1552 = vsel %vm1550, %v1482, 0
        %1554 = vmatpush.bf16.msra.mxu0 0
        %1555 = vmatpush.bf16.msra.mxu0 0
        %1556 = vmatpush.bf16.msra.mxu0 0
        %1557 = vmatpush.bf16.msra.mxu0 0
        %1558 = vmatpush.bf16.msra.mxu0 0
        %1559 = vmatpush.bf16.msra.mxu0 %v1552
        %1560 = vmatpush.bf16.msra.mxu0 %v1481
        %1561 = vmatpush.bf16.msra.mxu0 %v1480
        %1562 = vmatmul.bf16.gmra.mxu0 %v1486
        %v1563 = vpop.f32.mrf.mxu0
        %v1564 = vadd.f32 %v1468, %v1563
        %v1565 = vpop.f32.mrf.mxu0
        %v1566 = vadd.f32 %v1468, %v1565
        %1567 = vmatmul.bf16.gmra.mxu0 %v1488
        %v1568 = vpop.f32.mrf.mxu0
        %v1569 = vadd.f32 %v1468, %v1568
        %v1570 = vpop.f32.mrf.mxu0
        %v1571 = vadd.f32 %v1468, %v1570
        %1572 = vmatmul.bf16.gmra.mxu0 %v1490
        %v1573 = vpop.f32.mrf.mxu0
        %v1574 = vadd.f32 %v1468, %v1573
        %v1575 = vpop.f32.mrf.mxu0
        %v1576 = vadd.f32 %v1468, %v1575
        %1577 = vmatmul.bf16.gmra.mxu0 %v1492
        %v1578 = vpop.f32.mrf.mxu0
        %v1579 = vadd.f32 %v1468, %v1578
        %v1580 = vpop.f32.mrf.mxu0
        %v1581 = vadd.f32 %v1468, %v1580
        %1582 = vmatmul.bf16.gmra.mxu0 %v1494
        %v1583 = vpop.f32.mrf.mxu0
        %v1584 = vadd.f32 %v1468, %v1583
        %v1585 = vpop.f32.mrf.mxu0
        %v1586 = vadd.f32 %v1468, %v1585
        %1587 = vmatmul.bf16.gmra.mxu0 %v1496
        %v1588 = vpop.f32.mrf.mxu0
        %v1589 = vadd.f32 %v1468, %v1588
        %v1590 = vpop.f32.mrf.mxu0
        %v1591 = vadd.f32 %v1468, %v1590
        %1592 = vmatmul.bf16.gmra.mxu0 %v1498
        %v1593 = vpop.f32.mrf.mxu0
        %v1594 = vadd.f32 %v1468, %v1593
        %v1595 = vpop.f32.mrf.mxu0
        %v1596 = vadd.f32 %v1468, %v1595
        %1597 = vmatmul.bf16.gmra.mxu0 %v1500
        %v1598 = vpop.f32.mrf.mxu0
        %v1599 = vadd.f32 %v1468, %v1598
        %v1600 = vpop.f32.mrf.mxu0
        %v1601 = vadd.f32 %v1468, %v1600
        %1602 = vmatmul.bf16.gmra.mxu0 %v1502
        %v1603 = vpop.f32.mrf.mxu0
        %v1604 = vadd.f32 %v1468, %v1603
        %v1605 = vpop.f32.mrf.mxu0
        %v1606 = vadd.f32 %v1468, %v1605
        %1607 = vmatmul.bf16.gmra.mxu0 %v1504
        %v1608 = vpop.f32.mrf.mxu0
        %v1609 = vadd.f32 %v1468, %v1608
        %v1610 = vpop.f32.mrf.mxu0
        %v1611 = vadd.f32 %v1468, %v1610
        %1612 = vmatmul.bf16.gmra.mxu0 %v1506
        %v1613 = vpop.f32.mrf.mxu0
        %v1614 = vadd.f32 %v1468, %v1613
        %v1615 = vpop.f32.mrf.mxu0
        %v1616 = vadd.f32 %v1468, %v1615
        %1617 = vmatmul.bf16.gmra.mxu0 %v1508
        %v1618 = vpop.f32.mrf.mxu0
        %v1619 = vadd.f32 %v1468, %v1618
        %v1620 = vpop.f32.mrf.mxu0
        %v1621 = vadd.f32 %v1468, %v1620
        %1622 = vmatmul.bf16.gmra.mxu0 %v1510
        %v1623 = vpop.f32.mrf.mxu0
        %v1624 = vadd.f32 %v1468, %v1623
        %v1625 = vpop.f32.mrf.mxu0
        %v1626 = vadd.f32 %v1468, %v1625
        %1627 = vmatmul.bf16.gmra.mxu0 %v1512
        %v1628 = vpop.f32.mrf.mxu0
        %v1629 = vadd.f32 %v1468, %v1628
        %v1630 = vpop.f32.mrf.mxu0
        %v1631 = vadd.f32 %v1468, %v1630
        %1632 = vmatmul.bf16.gmra.mxu0 %v1514
        %v1633 = vpop.f32.mrf.mxu0
        %v1634 = vadd.f32 %v1468, %v1633
        %v1635 = vpop.f32.mrf.mxu0
        %v1636 = vadd.f32 %v1468, %v1635
        %1637 = vmatmul.bf16.gmra.mxu0 %v1516
        %v1638 = vpop.f32.mrf.mxu0
        %v1639 = vadd.f32 %v1468, %v1638
        %v1640 = vpop.f32.mrf.mxu0
        %v1641 = vadd.f32 %v1468, %v1640
        %1642 = vmatmul.bf16.gmra.mxu0 %v1518
        %v1643 = vpop.f32.mrf.mxu0
        %v1644 = vadd.f32 %v1468, %v1643
        %v1645 = vpop.f32.mrf.mxu0
        %v1646 = vadd.f32 %v1468, %v1645
        %1647 = vmatmul.bf16.gmra.mxu0 %v1520
        %v1648 = vpop.f32.mrf.mxu0
        %v1649 = vadd.f32 %v1468, %v1648
        %v1650 = vpop.f32.mrf.mxu0
        %v1651 = vadd.f32 %v1468, %v1650
        %1652 = vmatmul.bf16.gmra.mxu0 %v1522
        %v1653 = vpop.f32.mrf.mxu0
        %v1654 = vadd.f32 %v1468, %v1653
        %v1655 = vpop.f32.mrf.mxu0
        %v1656 = vadd.f32 %v1468, %v1655
        %1657 = vmatmul.bf16.gmra.mxu0 %v1524
        %v1658 = vpop.f32.mrf.mxu0
        %v1659 = vadd.f32 %v1468, %v1658
        %v1660 = vpop.f32.mrf.mxu0
        %v1661 = vadd.f32 %v1468, %v1660
        %1662 = vmatmul.bf16.gmra.mxu0 %v1526
        %v1663 = vpop.f32.mrf.mxu0
        %v1664 = vadd.f32 %v1468, %v1663
        %v1665 = vpop.f32.mrf.mxu0
        %v1666 = vadd.f32 %v1468, %v1665
        %1667 = vmatmul.bf16.gmra.mxu0 %v1528
        %v1668 = vpop.f32.mrf.mxu0
        %v1669 = vadd.f32 %v1468, %v1668
        %v1670 = vpop.f32.mrf.mxu0
        %v1671 = vadd.f32 %v1468, %v1670
        %1672 = vmatmul.bf16.gmra.mxu0 %v1530
        %v1673 = vpop.f32.mrf.mxu0
        %v1674 = vadd.f32 %v1468, %v1673
        %v1675 = vpop.f32.mrf.mxu0
        %v1676 = vadd.f32 %v1468, %v1675
        %1677 = vmatmul.bf16.gmra.mxu0 %v1532
        %v1678 = vpop.f32.mrf.mxu0
        %v1679 = vadd.f32 %v1468, %v1678
        %v1680 = vpop.f32.mrf.mxu0
        %v1681 = vadd.f32 %v1468, %v1680
        %1682 = vmatmul.bf16.gmra.mxu0 %v1534
        %v1683 = vpop.f32.mrf.mxu0
        %v1684 = vadd.f32 %v1468, %v1683
        %v1685 = vpop.f32.mrf.mxu0
        %v1686 = vadd.f32 %v1468, %v1685
        %1687 = vmatmul.bf16.gmra.mxu0 %v1536
        %v1688 = vpop.f32.mrf.mxu0
        %v1689 = vadd.f32 %v1468, %v1688
        %v1690 = vpop.f32.mrf.mxu0
        %v1691 = vadd.f32 %v1468, %v1690
        %1692 = vmatmul.bf16.gmra.mxu0 %v1538
        %v1693 = vpop.f32.mrf.mxu0
        %v1694 = vadd.f32 %v1468, %v1693
        %v1695 = vpop.f32.mrf.mxu0
        %v1696 = vadd.f32 %v1468, %v1695
        %1697 = vmatmul.bf16.gmra.mxu0 %v1540
        %v1698 = vpop.f32.mrf.mxu0
        %v1699 = vadd.f32 %v1468, %v1698
        %v1700 = vpop.f32.mrf.mxu0
        %v1701 = vadd.f32 %v1468, %v1700
        %1702 = vmatmul.bf16.gmra.mxu0 %v1542
        %v1703 = vpop.f32.mrf.mxu0
        %v1704 = vadd.f32 %v1468, %v1703
        %v1705 = vpop.f32.mrf.mxu0
        %v1706 = vadd.f32 %v1468, %v1705
        %1707 = vmatmul.bf16.gmra.mxu0 %v1544
        %v1708 = vpop.f32.mrf.mxu0
        %v1709 = vadd.f32 %v1468, %v1708
        %v1710 = vpop.f32.mrf.mxu0
        %v1711 = vadd.f32 %v1468, %v1710
        %1712 = vmatmul.bf16.gmra.mxu0 %v1546
        %v1713 = vpop.f32.mrf.mxu0
        %v1714 = vadd.f32 %v1468, %v1713
        %v1715 = vpop.f32.mrf.mxu0
        %v1716 = vadd.f32 %v1468, %v1715
        %1717 = vmatmul.bf16.gmra.mxu0 %v1548
        %v1718 = vpop.f32.mrf.mxu0
        %v1719 = vadd.f32 %v1468, %v1718
        %v1720 = vpop.f32.mrf.mxu0
        %v1721 = vadd.f32 %v1468, %v1720
        %1722 = vdwg.mxu0
        %v1723 = vmax.f32 %v1564, 0.0
        %v1724 = vmax.f32 %v1566, 0.0
        %v1725 = vmax.f32 %v1569, 0.0
        %v1726 = vmax.f32 %v1571, 0.0
        %v1727 = vmax.f32 %v1574, 0.0
        %v1728 = vmax.f32 %v1576, 0.0
        %v1729 = vmax.f32 %v1579, 0.0
        %v1730 = vmax.f32 %v1581, 0.0
        %v1731 = vmax.f32 %v1584, 0.0
        %v1732 = vmax.f32 %v1586, 0.0
        %v1733 = vmax.f32 %v1589, 0.0
        %v1734 = vmax.f32 %v1591, 0.0
        %v1735 = vmax.f32 %v1594, 0.0
        %v1736 = vmax.f32 %v1596, 0.0
        %v1737 = vmax.f32 %v1599, 0.0
        %v1738 = vmax.f32 %v1601, 0.0
        %v1739 = vmax.f32 %v1604, 0.0
        %v1740 = vmax.f32 %v1606, 0.0
        %v1741 = vmax.f32 %v1609, 0.0
        %v1742 = vmax.f32 %v1611, 0.0
        %v1743 = vmax.f32 %v1614, 0.0
        %v1744 = vmax.f32 %v1616, 0.0
        %v1745 = vmax.f32 %v1619, 0.0
        %v1746 = vmax.f32 %v1621, 0.0
        %v1747 = vmax.f32 %v1624, 0.0
        %v1748 = vmax.f32 %v1626, 0.0
        %v1749 = vmax.f32 %v1629, 0.0
        %v1750 = vmax.f32 %v1631, 0.0
        %v1751 = vmax.f32 %v1634, 0.0
        %v1752 = vmax.f32 %v1636, 0.0
        %v1753 = vmax.f32 %v1639, 0.0
        %v1754 = vmax.f32 %v1641, 0.0
        %v1755 = vmax.f32 %v1644, 0.0
        %v1756 = vmax.f32 %v1646, 0.0
        %v1757 = vmax.f32 %v1649, 0.0
        %v1758 = vmax.f32 %v1651, 0.0
        %v1759 = vmax.f32 %v1654, 0.0
        %v1760 = vmax.f32 %v1656, 0.0
        %v1761 = vmax.f32 %v1659, 0.0
        %v1762 = vmax.f32 %v1661, 0.0
        %v1763 = vmax.f32 %v1664, 0.0
        %v1764 = vmax.f32 %v1666, 0.0
        %v1765 = vmax.f32 %v1669, 0.0
        %v1766 = vmax.f32 %v1671, 0.0
        %v1767 = vmax.f32 %v1674, 0.0
        %v1768 = vmax.f32 %v1676, 0.0
        %v1769 = vmax.f32 %v1679, 0.0
        %v1770 = vmax.f32 %v1681, 0.0
        %v1771 = vmax.f32 %v1684, 0.0
        %v1772 = vmax.f32 %v1686, 0.0
        %v1773 = vmax.f32 %v1689, 0.0
        %v1774 = vmax.f32 %v1691, 0.0
        %v1775 = vmax.f32 %v1694, 0.0
        %v1776 = vmax.f32 %v1696, 0.0
        %v1777 = vmax.f32 %v1699, 0.0
        %v1778 = vmax.f32 %v1701, 0.0
        %v1779 = vmax.f32 %v1704, 0.0
        %v1780 = vmax.f32 %v1706, 0.0
        %v1781 = vmax.f32 %v1709, 0.0
        %v1782 = vmax.f32 %v1711, 0.0
        %v1783 = vmax.f32 %v1714, 0.0
        %v1784 = vmax.f32 %v1716, 0.0
        %v1785 = vmax.f32 %v1719, 0.0
        %v1786 = vmax.f32 %v1721, 0.0
        %v1787 = vpack.c.bf16 %v1724, %v1723
        %v1788 = vpack.c.bf16 %v1726, %v1725
        %v1789 = vpack.c.bf16 %v1728, %v1727
        %v1790 = vpack.c.bf16 %v1730, %v1729
        %v1791 = vpack.c.bf16 %v1732, %v1731
        %v1792 = vpack.c.bf16 %v1734, %v1733
        %v1793 = vpack.c.bf16 %v1736, %v1735
        %v1794 = vpack.c.bf16 %v1738, %v1737
        %v1795 = vpack.c.bf16 %v1740, %v1739
        %v1796 = vpack.c.bf16 %v1742, %v1741
        %v1797 = vpack.c.bf16 %v1744, %v1743
        %v1798 = vpack.c.bf16 %v1746, %v1745
        %v1799 = vpack.c.bf16 %v1748, %v1747
        %v1800 = vpack.c.bf16 %v1750, %v1749
        %v1801 = vpack.c.bf16 %v1752, %v1751
        %v1802 = vpack.c.bf16 %v1754, %v1753
        %v1803 = vpack.c.bf16 %v1756, %v1755
        %v1804 = vpack.c.bf16 %v1758, %v1757
        %v1805 = vpack.c.bf16 %v1760, %v1759
        %v1806 = vpack.c.bf16 %v1762, %v1761
        %v1807 = vpack.c.bf16 %v1764, %v1763
        %v1808 = vpack.c.bf16 %v1766, %v1765
        %v1809 = vpack.c.bf16 %v1768, %v1767
        %v1810 = vpack.c.bf16 %v1770, %v1769
        %v1811 = vpack.c.bf16 %v1772, %v1771
        %v1812 = vpack.c.bf16 %v1774, %v1773
        %v1813 = vpack.c.bf16 %v1776, %v1775
        %v1814 = vpack.c.bf16 %v1778, %v1777
        %v1815 = vpack.c.bf16 %v1780, %v1779
        %v1816 = vpack.c.bf16 %v1782, %v1781
        %v1817 = vpack.c.bf16 %v1784, %v1783
        %v1818 = vpack.c.bf16 %v1786, %v1785
        %v1819 = vld [vmem:[%s3] sm:$0xf]
        %v1820 = vld [vmem:[%s3 + $0x4] sm:$0xf]
        %v1821 = vld [vmem:[%s3 + $0x8] sm:$0xf]
        %v1822 = vld [vmem:[%s3 + $0xc] sm:$0xf]
        %v1823 = vld [vmem:[%s3 + $0x10] sm:$0xf]
        %v1824 = vld [vmem:[%s3 + $0x14] sm:$0xf]
        %v1825 = vld [vmem:[%s3 + $0x18] sm:$0xf]
        %v1826 = vld [vmem:[%s3 + $0x1c] sm:$0xf]
        %v1827 = vld [vmem:[%s3 + $0x20] sm:$0xf]
        %v1828 = vld [vmem:[%s3 + $0x24] sm:$0xf]
        %v1829 = vld [vmem:[%s3 + $0x28] sm:$0xf]
        %v1830 = vld [vmem:[%s3 + $0x2c] sm:$0xf]
        %v1831 = vld [vmem:[%s3 + $0x30] sm:$0xf]
        %v1832 = vld [vmem:[%s3 + $0x34] sm:$0xf]
        %v1833 = vld [vmem:[%s3 + $0x38] sm:$0xf]
        %v1834 = vld [vmem:[%s3 + $0x3c] sm:$0xf]
        %v1835 = vld [vmem:[%s4] sm:$0x1]
        %v1837 = vperm.slane %v1835, 0
        %v1855 = vunpack.c.l.b16 %v1819
        %v1856 = vunpack.c.l.b16 %v1820
        %v1857 = vunpack.c.l.b16 %v1821
        %v1858 = vunpack.c.l.b16 %v1822
        %v1859 = vunpack.c.l.b16 %v1823
        %v1860 = vunpack.c.l.b16 %v1824
        %v1861 = vunpack.c.l.b16 %v1825
        %v1862 = vunpack.c.l.b16 %v1826
        %v1863 = vunpack.c.l.b16 %v1827
        %v1864 = vunpack.c.l.b16 %v1828
        %v1865 = vunpack.c.l.b16 %v1829
        %v1866 = vunpack.c.l.b16 %v1830
        %v1867 = vunpack.c.l.b16 %v1831
        %v1868 = vunpack.c.l.b16 %v1832
        %v1869 = vunpack.c.l.b16 %v1833
        %v1870 = vunpack.c.l.b16 %v1834
        %v1871 = vpack.c.b16 %v1856, %v1855
        %v1872 = vpack.c.b16 %v1858, %v1857
        %v1873 = vpack.c.b16 %v1860, %v1859
        %v1874 = vpack.c.b16 %v1862, %v1861
        %v1875 = vpack.c.b16 %v1864, %v1863
        %v1876 = vpack.c.b16 %v1866, %v1865
        %v1877 = vpack.c.b16 %v1868, %v1867
        %v1878 = vpack.c.b16 %v1870, %v1869
        %1887 = vmatpush.bf16.msra.mxu0 %v1878
        %1888 = vmatpush.bf16.msra.mxu0 %v1877
        %1889 = vmatpush.bf16.msra.mxu0 %v1876
        %1890 = vmatpush.bf16.msra.mxu0 %v1875
        %1891 = vmatpush.bf16.msra.mxu0 %v1874
        %1892 = vmatpush.bf16.msra.mxu0 %v1873
        %1893 = vmatpush.bf16.msra.mxu0 %v1872
        %1894 = vmatpush.bf16.msra.mxu0 %v1871
        %1895 = vmatmul.bf16.gmra.mxu0 %v1787
        %v1896 = vpop.f32.mrf.mxu0
        %v1897 = vadd.f32 %v1837, %v1896
        %v1898 = vpop.f32.mrf.mxu0
        %v1899 = vadd.f32 %v1837, %v1898
        %1900 = vmatmul.bf16.gmra.mxu0 %v1788
        %v1901 = vpop.f32.mrf.mxu0
        %v1902 = vadd.f32 %v1837, %v1901
        %v1903 = vpop.f32.mrf.mxu0
        %v1904 = vadd.f32 %v1837, %v1903
        %1905 = vmatmul.bf16.gmra.mxu0 %v1789
        %v1906 = vpop.f32.mrf.mxu0
        %v1907 = vadd.f32 %v1837, %v1906
        %v1908 = vpop.f32.mrf.mxu0
        %v1909 = vadd.f32 %v1837, %v1908
        %1910 = vmatmul.bf16.gmra.mxu0 %v1790
        %v1911 = vpop.f32.mrf.mxu0
        %v1912 = vadd.f32 %v1837, %v1911
        %v1913 = vpop.f32.mrf.mxu0
        %v1914 = vadd.f32 %v1837, %v1913
        %1915 = vmatmul.bf16.gmra.mxu0 %v1791
        %v1916 = vpop.f32.mrf.mxu0
        %v1917 = vadd.f32 %v1837, %v1916
        %v1918 = vpop.f32.mrf.mxu0
        %v1919 = vadd.f32 %v1837, %v1918
        %1920 = vmatmul.bf16.gmra.mxu0 %v1792
        %v1921 = vpop.f32.mrf.mxu0
        %v1922 = vadd.f32 %v1837, %v1921
        %v1923 = vpop.f32.mrf.mxu0
        %v1924 = vadd.f32 %v1837, %v1923
        %1925 = vmatmul.bf16.gmra.mxu0 %v1793
        %v1926 = vpop.f32.mrf.mxu0
        %v1927 = vadd.f32 %v1837, %v1926
        %v1928 = vpop.f32.mrf.mxu0
        %v1929 = vadd.f32 %v1837, %v1928
        %1930 = vmatmul.bf16.gmra.mxu0 %v1794
        %v1931 = vpop.f32.mrf.mxu0
        %v1932 = vadd.f32 %v1837, %v1931
        %v1933 = vpop.f32.mrf.mxu0
        %v1934 = vadd.f32 %v1837, %v1933
        %1935 = vmatmul.bf16.gmra.mxu0 %v1795
        %v1936 = vpop.f32.mrf.mxu0
        %v1937 = vadd.f32 %v1837, %v1936
        %v1938 = vpop.f32.mrf.mxu0
        %v1939 = vadd.f32 %v1837, %v1938
        %1940 = vmatmul.bf16.gmra.mxu0 %v1796
        %v1941 = vpop.f32.mrf.mxu0
        %v1942 = vadd.f32 %v1837, %v1941
        %v1943 = vpop.f32.mrf.mxu0
        %v1944 = vadd.f32 %v1837, %v1943
        %1945 = vmatmul.bf16.gmra.mxu0 %v1797
        %v1946 = vpop.f32.mrf.mxu0
        %v1947 = vadd.f32 %v1837, %v1946
        %v1948 = vpop.f32.mrf.mxu0
        %v1949 = vadd.f32 %v1837, %v1948
        %1950 = vmatmul.bf16.gmra.mxu0 %v1798
        %v1951 = vpop.f32.mrf.mxu0
        %v1952 = vadd.f32 %v1837, %v1951
        %v1953 = vpop.f32.mrf.mxu0
        %v1954 = vadd.f32 %v1837, %v1953
        %1955 = vmatmul.bf16.gmra.mxu0 %v1799
        %v1956 = vpop.f32.mrf.mxu0
        %v1957 = vadd.f32 %v1837, %v1956
        %v1958 = vpop.f32.mrf.mxu0
        %v1959 = vadd.f32 %v1837, %v1958
        %1960 = vmatmul.bf16.gmra.mxu0 %v1800
        %v1961 = vpop.f32.mrf.mxu0
        %v1962 = vadd.f32 %v1837, %v1961
        %v1963 = vpop.f32.mrf.mxu0
        %v1964 = vadd.f32 %v1837, %v1963
        %1965 = vmatmul.bf16.gmra.mxu0 %v1801
        %v1966 = vpop.f32.mrf.mxu0
        %v1967 = vadd.f32 %v1837, %v1966
        %v1968 = vpop.f32.mrf.mxu0
        %v1969 = vadd.f32 %v1837, %v1968
        %1970 = vmatmul.bf16.gmra.mxu0 %v1802
        %v1971 = vpop.f32.mrf.mxu0
        %v1972 = vadd.f32 %v1837, %v1971
        %v1973 = vpop.f32.mrf.mxu0
        %v1974 = vadd.f32 %v1837, %v1973
        %1975 = vmatmul.bf16.gmra.mxu0 %v1803
        %v1976 = vpop.f32.mrf.mxu0
        %v1977 = vadd.f32 %v1837, %v1976
        %v1978 = vpop.f32.mrf.mxu0
        %v1979 = vadd.f32 %v1837, %v1978
        %1980 = vmatmul.bf16.gmra.mxu0 %v1804
        %v1981 = vpop.f32.mrf.mxu0
        %v1982 = vadd.f32 %v1837, %v1981
        %v1983 = vpop.f32.mrf.mxu0
        %v1984 = vadd.f32 %v1837, %v1983
        %1985 = vmatmul.bf16.gmra.mxu0 %v1805
        %v1986 = vpop.f32.mrf.mxu0
        %v1987 = vadd.f32 %v1837, %v1986
        %v1988 = vpop.f32.mrf.mxu0
        %v1989 = vadd.f32 %v1837, %v1988
        %1990 = vmatmul.bf16.gmra.mxu0 %v1806
        %v1991 = vpop.f32.mrf.mxu0
        %v1992 = vadd.f32 %v1837, %v1991
        %v1993 = vpop.f32.mrf.mxu0
        %v1994 = vadd.f32 %v1837, %v1993
        %1995 = vmatmul.bf16.gmra.mxu0 %v1807
        %v1996 = vpop.f32.mrf.mxu0
        %v1997 = vadd.f32 %v1837, %v1996
        %v1998 = vpop.f32.mrf.mxu0
        %v1999 = vadd.f32 %v1837, %v1998
        %2000 = vmatmul.bf16.gmra.mxu0 %v1808
        %v2001 = vpop.f32.mrf.mxu0
        %v2002 = vadd.f32 %v1837, %v2001
        %v2003 = vpop.f32.mrf.mxu0
        %v2004 = vadd.f32 %v1837, %v2003
        %2005 = vmatmul.bf16.gmra.mxu0 %v1809
        %v2006 = vpop.f32.mrf.mxu0
        %v2007 = vadd.f32 %v1837, %v2006
        %v2008 = vpop.f32.mrf.mxu0
        %v2009 = vadd.f32 %v1837, %v2008
        %2010 = vmatmul.bf16.gmra.mxu0 %v1810
        %v2011 = vpop.f32.mrf.mxu0
        %v2012 = vadd.f32 %v1837, %v2011
        %v2013 = vpop.f32.mrf.mxu0
        %v2014 = vadd.f32 %v1837, %v2013
        %2015 = vmatmul.bf16.gmra.mxu0 %v1811
        %v2016 = vpop.f32.mrf.mxu0
        %v2017 = vadd.f32 %v1837, %v2016
        %v2018 = vpop.f32.mrf.mxu0
        %v2019 = vadd.f32 %v1837, %v2018
        %2020 = vmatmul.bf16.gmra.mxu0 %v1812
        %v2021 = vpop.f32.mrf.mxu0
        %v2022 = vadd.f32 %v1837, %v2021
        %v2023 = vpop.f32.mrf.mxu0
        %v2024 = vadd.f32 %v1837, %v2023
        %2025 = vmatmul.bf16.gmra.mxu0 %v1813
        %v2026 = vpop.f32.mrf.mxu0
        %v2027 = vadd.f32 %v1837, %v2026
        %v2028 = vpop.f32.mrf.mxu0
        %v2029 = vadd.f32 %v1837, %v2028
        %2030 = vmatmul.bf16.gmra.mxu0 %v1814
        %v2031 = vpop.f32.mrf.mxu0
        %v2032 = vadd.f32 %v1837, %v2031
        %v2033 = vpop.f32.mrf.mxu0
        %v2034 = vadd.f32 %v1837, %v2033
        %2035 = vmatmul.bf16.gmra.mxu0 %v1815
        %v2036 = vpop.f32.mrf.mxu0
        %v2037 = vadd.f32 %v1837, %v2036
        %v2038 = vpop.f32.mrf.mxu0
        %v2039 = vadd.f32 %v1837, %v2038
        %2040 = vmatmul.bf16.gmra.mxu0 %v1816
        %v2041 = vpop.f32.mrf.mxu0
        %v2042 = vadd.f32 %v1837, %v2041
        %v2043 = vpop.f32.mrf.mxu0
        %v2044 = vadd.f32 %v1837, %v2043
        %2045 = vmatmul.bf16.gmra.mxu0 %v1817
        %v2046 = vpop.f32.mrf.mxu0
        %v2047 = vadd.f32 %v1837, %v2046
        %v2048 = vpop.f32.mrf.mxu0
        %v2049 = vadd.f32 %v1837, %v2048
        %2050 = vmatmul.bf16.gmra.mxu0 %v1818
        %v2051 = vpop.f32.mrf.mxu0
        %v2052 = vadd.f32 %v1837, %v2051
        %v2053 = vpop.f32.mrf.mxu0
        %v2054 = vadd.f32 %v1837, %v2053
        %2055 = vdwg.mxu0
        %v2056 = vpack.c.bf16 %v1897, %v1897
        %v2057 = vpack.c.bf16 %v1899, %v1899
        %v2058 = vpack.c.bf16 %v1902, %v1902
        %v2059 = vpack.c.bf16 %v1904, %v1904
        %v2060 = vpack.c.bf16 %v1907, %v1907
        %v2061 = vpack.c.bf16 %v1909, %v1909
        %v2062 = vpack.c.bf16 %v1912, %v1912
        %v2063 = vpack.c.bf16 %v1914, %v1914
        %v2064 = vpack.c.bf16 %v1917, %v1917
        %v2065 = vpack.c.bf16 %v1919, %v1919
        %v2066 = vpack.c.bf16 %v1922, %v1922
        %v2067 = vpack.c.bf16 %v1924, %v1924
        %v2068 = vpack.c.bf16 %v1927, %v1927
        %v2069 = vpack.c.bf16 %v1929, %v1929
        %v2070 = vpack.c.bf16 %v1932, %v1932
        %v2071 = vpack.c.bf16 %v1934, %v1934
        %v2072 = vpack.c.bf16 %v1937, %v1937
        %v2073 = vpack.c.bf16 %v1939, %v1939
        %v2074 = vpack.c.bf16 %v1942, %v1942
        %v2075 = vpack.c.bf16 %v1944, %v1944
        %v2076 = vpack.c.bf16 %v1947, %v1947
        %v2077 = vpack.c.bf16 %v1949, %v1949
        %v2078 = vpack.c.bf16 %v1952, %v1952
        %v2079 = vpack.c.bf16 %v1954, %v1954
        %v2080 = vpack.c.bf16 %v1957, %v1957
        %v2081 = vpack.c.bf16 %v1959, %v1959
        %v2082 = vpack.c.bf16 %v1962, %v1962
        %v2083 = vpack.c.bf16 %v1964, %v1964
        %v2084 = vpack.c.bf16 %v1967, %v1967
        %v2085 = vpack.c.bf16 %v1969, %v1969
        %v2086 = vpack.c.bf16 %v1972, %v1972
        %v2087 = vpack.c.bf16 %v1974, %v1974
        %v2088 = vpack.c.bf16 %v1977, %v1977
        %v2089 = vpack.c.bf16 %v1979, %v1979
        %v2090 = vpack.c.bf16 %v1982, %v1982
        %v2091 = vpack.c.bf16 %v1984, %v1984
        %v2092 = vpack.c.bf16 %v1987, %v1987
        %v2093 = vpack.c.bf16 %v1989, %v1989
        %v2094 = vpack.c.bf16 %v1992, %v1992
        %v2095 = vpack.c.bf16 %v1994, %v1994
        %v2096 = vpack.c.bf16 %v1997, %v1997
        %v2097 = vpack.c.bf16 %v1999, %v1999
        %v2098 = vpack.c.bf16 %v2002, %v2002
        %v2099 = vpack.c.bf16 %v2004, %v2004
        %v2100 = vpack.c.bf16 %v2007, %v2007
        %v2101 = vpack.c.bf16 %v2009, %v2009
        %v2102 = vpack.c.bf16 %v2012, %v2012
        %v2103 = vpack.c.bf16 %v2014, %v2014
        %v2104 = vpack.c.bf16 %v2017, %v2017
        %v2105 = vpack.c.bf16 %v2019, %v2019
        %v2106 = vpack.c.bf16 %v2022, %v2022
        %v2107 = vpack.c.bf16 %v2024, %v2024
        %v2108 = vpack.c.bf16 %v2027, %v2027
        %v2109 = vpack.c.bf16 %v2029, %v2029
        %v2110 = vpack.c.bf16 %v2032, %v2032
        %v2111 = vpack.c.bf16 %v2034, %v2034
        %v2112 = vpack.c.bf16 %v2037, %v2037
        %v2113 = vpack.c.bf16 %v2039, %v2039
        %v2114 = vpack.c.bf16 %v2042, %v2042
        %v2115 = vpack.c.bf16 %v2044, %v2044
        %v2116 = vpack.c.bf16 %v2047, %v2047
        %v2117 = vpack.c.bf16 %v2049, %v2049
        %v2118 = vpack.c.bf16 %v2052, %v2052
        %v2119 = vpack.c.bf16 %v2054, %v2054
        %2120 = vst [vmem:[%s241] sm:$0xf] %v2056
        %2121 = vst [vmem:[%s241 + $0x4] sm:$0xf] %v2057
        %2122 = vst [vmem:[%s241 + $0x8] sm:$0xf] %v2058
        %2123 = vst [vmem:[%s241 + $0xc] sm:$0xf] %v2059
        %2124 = vst [vmem:[%s241 + $0x10] sm:$0xf] %v2060
        %2125 = vst [vmem:[%s241 + $0x14] sm:$0xf] %v2061
        %2126 = vst [vmem:[%s241 + $0x18] sm:$0xf] %v2062
        %2127 = vst [vmem:[%s241 + $0x1c] sm:$0xf] %v2063
        %2128 = vst [vmem:[%s241 + $0x20] sm:$0xf] %v2064
        %2129 = vst [vmem:[%s241 + $0x24] sm:$0xf] %v2065
        %2130 = vst [vmem:[%s241 + $0x28] sm:$0xf] %v2066
        %2131 = vst [vmem:[%s241 + $0x2c] sm:$0xf] %v2067
        %2132 = vst [vmem:[%s241 + $0x30] sm:$0xf] %v2068
        %2133 = vst [vmem:[%s241 + $0x34] sm:$0xf] %v2069
        %2134 = vst [vmem:[%s241 + $0x38] sm:$0xf] %v2070
        %2135 = vst [vmem:[%s241 + $0x3c] sm:$0xf] %v2071
        %2136 = vst [vmem:[%s241 + $0x40] sm:$0xf] %v2072
        %2137 = vst [vmem:[%s241 + $0x44] sm:$0xf] %v2073
        %2138 = vst [vmem:[%s241 + $0x48] sm:$0xf] %v2074
        %2139 = vst [vmem:[%s241 + $0x4c] sm:$0xf] %v2075
        %2140 = vst [vmem:[%s241 + $0x50] sm:$0xf] %v2076
        %2141 = vst [vmem:[%s241 + $0x54] sm:$0xf] %v2077
        %2142 = vst [vmem:[%s241 + $0x58] sm:$0xf] %v2078
        %2143 = vst [vmem:[%s241 + $0x5c] sm:$0xf] %v2079
        %2144 = vst [vmem:[%s241 + $0x60] sm:$0xf] %v2080
        %2145 = vst [vmem:[%s241 + $0x64] sm:$0xf] %v2081
        %2146 = vst [vmem:[%s241 + $0x68] sm:$0xf] %v2082
        %2147 = vst [vmem:[%s241 + $0x6c] sm:$0xf] %v2083
        %2148 = vst [vmem:[%s241 + $0x70] sm:$0xf] %v2084
        %2149 = vst [vmem:[%s241 + $0x74] sm:$0xf] %v2085
        %2150 = vst [vmem:[%s241 + $0x78] sm:$0xf] %v2086
        %2151 = vst [vmem:[%s241 + $0x7c] sm:$0xf] %v2087
        %2152 = vst [vmem:[%s241 + $0x80] sm:$0xf] %v2088
        %2153 = vst [vmem:[%s241 + $0x84] sm:$0xf] %v2089
        %2154 = vst [vmem:[%s241 + $0x88] sm:$0xf] %v2090
        %2155 = vst [vmem:[%s241 + $0x8c] sm:$0xf] %v2091
        %2156 = vst [vmem:[%s241 + $0x90] sm:$0xf] %v2092
        %2157 = vst [vmem:[%s241 + $0x94] sm:$0xf] %v2093
        %2158 = vst [vmem:[%s241 + $0x98] sm:$0xf] %v2094
        %2159 = vst [vmem:[%s241 + $0x9c] sm:$0xf] %v2095
        %2160 = vst [vmem:[%s241 + $0xa0] sm:$0xf] %v2096
        %2161 = vst [vmem:[%s241 + $0xa4] sm:$0xf] %v2097
        %2162 = vst [vmem:[%s241 + $0xa8] sm:$0xf] %v2098
        %2163 = vst [vmem:[%s241 + $0xac] sm:$0xf] %v2099
        %2164 = vst [vmem:[%s241 + $0xb0] sm:$0xf] %v2100
        %2165 = vst [vmem:[%s241 + $0xb4] sm:$0xf] %v2101
        %2166 = vst [vmem:[%s241 + $0xb8] sm:$0xf] %v2102
        %2167 = vst [vmem:[%s241 + $0xbc] sm:$0xf] %v2103
        %2168 = vst [vmem:[%s241 + $0xc0] sm:$0xf] %v2104
        %2169 = vst [vmem:[%s241 + $0xc4] sm:$0xf] %v2105
        %2170 = vst [vmem:[%s241 + $0xc8] sm:$0xf] %v2106
        %2171 = vst [vmem:[%s241 + $0xcc] sm:$0xf] %v2107
        %2172 = vst [vmem:[%s241 + $0xd0] sm:$0xf] %v2108
        %2173 = vst [vmem:[%s241 + $0xd4] sm:$0xf] %v2109
        %2174 = vst [vmem:[%s241 + $0xd8] sm:$0xf] %v2110
        %2175 = vst [vmem:[%s241 + $0xdc] sm:$0xf] %v2111
        %2176 = vst [vmem:[%s241 + $0xe0] sm:$0xf] %v2112
        %2177 = vst [vmem:[%s241 + $0xe4] sm:$0xf] %v2113
        %2178 = vst [vmem:[%s241 + $0xe8] sm:$0xf] %v2114
        %2179 = vst [vmem:[%s241 + $0xec] sm:$0xf] %v2115
        %2180 = vst [vmem:[%s241 + $0xf0] sm:$0xf] %v2116
        %2181 = vst [vmem:[%s241 + $0xf4] sm:$0xf] %v2117
        %2182 = vst [vmem:[%s241 + $0xf8] sm:$0xf] %v2118
        %2183 = vst [vmem:[%s241 + $0xfc] sm:$0xf] %v2119
        %s2184 = sand.u32 %s153, 1
        %s2185 = scalar_lea.sflag [#allocation3], %s2184
        %s2186 = sand.u32 %s153, 1
        %s2187 = smul.addr %s2186, 256
        %s2188 = scalar_lea.vmem [#allocation2], %s2187
        // Predicated region
        $region41: #{tpu_custom_call.1} parent=39 // pred_check
          %p2189 = pneg %p163
        $region42: #{tpu_custom_call.1} parent=39 // pred_check_branch
          %2191 = sbr.rel (%p2189) target = $region44
        $region43: #{tpu_custom_call.1} parent=39 // pred_region
          %2193 = vsyncadd %s2185, 0
          %s2194 = smul.addr %s24, 64
          %s2195 = smul.addr %s23, 64
          %s2196 = sadd.s32 %s2194, %s2195
          %s2197 = smul.addr %s2196, 4
          %s2198 = scalar_lea.hbm %s5, %s2197
          %s2199 = sshll.u32 %s2188, 4
          %s2200 = int_to_ptr.vmem [resolvable:$true] %s2199
          %s2201 = sshll.u32 %s2198, 4
          %s2202 = int_to_ptr.hbm [resolvable:$true] %s2201
          %2207 = dma.vmem_to_hbm [thread:$0]  %s2200, 4096, %s2202, %s2185, 64, 64, 4
        $region44: #{tpu_custom_call.1} parent=39 // pred_fallthru
          _
      $region40: #{tpu_custom_call.1} parent=5 // pred_fallthru
        _
      %p2208 = scmp.le.s32.totalorder 2, %s14
      // Predicated region
      $region45: #{tpu_custom_call.1} parent=5 // pred_check
        %p2209 = pneg %p2208
      $region46: #{tpu_custom_call.1} parent=5 // pred_check_branch
        %2211 = sbr.rel (%p2209) target = $region48
      $region47: #{tpu_custom_call.1} parent=5 // pred_region
        %s2212 = ssub.s32 %s14, 2
        // Predicated region
        $region49: #{tpu_custom_call.1} parent=47 // pred_check
          %p2213 = pneg %p169
        $region50: #{tpu_custom_call.1} parent=47 // pred_check_branch
          %2215 = sbr.rel (%p2213) target = $region52
        $region51: #{tpu_custom_call.1} parent=47 // pred_region
          %s2216 = sand.u32 %s154, 1
          %s2217 = scalar_lea.sflag [#allocation3], %s2216
          %s2218 = sand.u32 %s154, 1
          %s2219 = smul.addr %s2218, 256
          %s2220 = scalar_lea.vmem [#allocation2], %s2219
          %2222 = dma.done %s2217, 4096
        $region52: #{tpu_custom_call.1} parent=47 // pred_fallthru
          _
      $region48: #{tpu_custom_call.1} parent=5 // pred_fallthru
        _
    $region6: #{tpu_custom_call.1} parent=1 // loop_footer
      %s18 = sadd.s32 1, %s14
    $region7: #{tpu_custom_call.1} parent=1 // loop_footer_branch
      %13 = sbr.rel target = $region3
    $region8: #{tpu_custom_call.1} parent=1 // loop_exit
      _
    %2223 = vsyncpa [#allocation3], 1
    %s2224 = scalar_lea.sflag [#allocation3], 1
    %2225 = vsyncpa %s2224, 1

// kernel: tpu_custom_call.1
$region0: #{tpu_custom_call.1}
  #allocation0 [shape = 'u32[]', space=smem, size = 0x4, offset = 0x4, fixed_abs, tag = 'smem constant byte address 0x4 - core index']
  #allocation1 [shape = 'u32[72,128]{1,0:T(1,128)}', space=vmem, size = 0x9000, scoped, tag = 'internal scratch']
  %s0 = inlined_call_operand.vmem [shape: bf16[2,1,608,4], index: 0, kind: input, shape index: {}]
  %s1 = inlined_call_operand.vmem [shape: bf16[36,128], index: 1, kind: input, shape index: {}]
  %s2 = inlined_call_operand.vmem [shape: f32[1,128], index: 2, kind: input, shape index: {}]
  %s3 = inlined_call_operand.vmem [shape: bf16[128,128], index: 3, kind: input, shape index: {}]
  %s4 = inlined_call_operand.vmem [shape: f32[1,128], index: 4, kind: input, shape index: {}]
  %s5 = inlined_call_operand.hbm [shape: bf16[2,1,512,128], index: 5, kind: output, shape index: {}]
  %s6 = sld [smem:[#allocation0]]
  $region53: #{tpu_custom_call.1} parent=0
    _
  %s8 = ssub.s32 1, %s6
  %s9 = scalar_select 0, %s8, %s6
  $region1: #{tpu_custom_call.1} parent=0
    #allocation2 [shape = 'u8[262144]{0}', space=vmem, size = 0x40000, scoped, tag = 'output window, operand 0']
    #allocation3 [shape = 's32[2]{0}', space=sflag, size = 0x8, scoped, tag = 'scoped memory for tpu_custom_call.1']
    %10 = vsyncpa [#allocation3], 0
    %s11 = scalar_lea.sflag [#allocation3], 1
    %12 = vsyncpa %s11, 0
    loop: start=0, step=1, limit=4
    $region2: #{tpu_custom_call.1} parent=1 // loop_pre_header
      _
    $region3: #{tpu_custom_call.1} parent=1 // loop_header
      %s14 = sphi 0, %s18
      %p15 = scmp.ge.s32.totalorder %s14, 4
      %s21 = sphi 0, %s33
      %s22 = sphi 0, %s29
      %s23 = sphi 0, %s21
      %s24 = sphi 0, %s22
      %s25 = sphi 0, %s23
      %s26 = sphi 0, %s24
      %s38 = sphi 0, %s40
      %s41 = sphi 0, %s38
      %s42 = sphi 0, %s41
      %s58 = sphi 0, %s42
      %s62 = sphi 0, %s62
      %s64 = sphi 0, %s62
      %s65 = sphi 0, %s64
      %s79 = sphi 0, %s65
      %s83 = sphi 0, %s83
      %s85 = sphi 0, %s83
      %s86 = sphi 0, %s85
      %s100 = sphi 0, %s86
      %s104 = sphi 0, %s104
      %s106 = sphi 0, %s104
      %s107 = sphi 0, %s106
      %s121 = sphi 0, %s107
      %s125 = sphi 0, %s125
      %s127 = sphi 0, %s125
      %s128 = sphi 0, %s127
      %s142 = sphi 0, %s128
      %s150 = sphi 0, %s152
      %s153 = sphi 0, %s150
      %s154 = sphi 0, %s153
      %s170 = sphi 0, %s154
    $region4: #{tpu_custom_call.1} parent=1 // loop_header_branch
      %17 = sbr.rel (%p15) target = $region8
    $region5: #{tpu_custom_call.1} parent=1 // loop_body
      %s19 = ssub.s32 %s14, 1
      %s20 = ssub.s32 %s14, 2
      %s27 = sadd.s32 1, %s22
      %p28 = scmp.ge.s32.totalorder %s27, 1
      %s29 = scalar_select %p28, 0, %s27
      %s30 = sadd.s32 1, %s21
      %s31 = scalar_select %p28, %s30, %s21
      %p32 = scmp.ge.s32.totalorder %s31, 2
      %s33 = scalar_select %p32, 0, %s31
      %s34 = ssub.s32 %s21, %s33
      %s35 = ssub.s32 %s22, %s29
      %s36 = sor.u32 %s34, %s35
      %p37 = scmp.eq.s32.totalorder %s36, 0
      %s39 = sadd.s32 %s38, 1
      %s40 = scalar_select %p37, %s38, %s39
      %p43 = pneg %p37
      %p44 = scmp.eq.s32.totalorder %s14, 1
      %p45 = por %p43, %p44
      %p46 = scmp.ne.s32.totalorder %s38, %s41
      %p47 = scmp.eq.s32.totalorder %s14, 0
      %p48 = por %p46, %p47
      %p49 = scmp.ne.s32.totalorder %s38, %s41
      %p50 = scmp.eq.s32.totalorder %s19, 1
      %p51 = por %p49, %p50
      %p52 = scmp.ne.s32.totalorder %s41, %s42
      %p53 = scmp.eq.s32.totalorder %s19, 0
      %p54 = por %p52, %p53
      %p55 = scmp.ne.s32.totalorder %s41, %s42
      %p56 = scmp.eq.s32.totalorder %s20, 1
      %p57 = por %p55, %p56
      %p59 = scmp.ne.s32.totalorder %s42, %s58
      %p60 = scmp.eq.s32.totalorder %s20, 0
      %p61 = por %p59, %p60
      %s63 = sadd.s32 %s62, 1
      %p66 = scmp.eq.s32.totalorder %s14, 1
      %p67 = scmp.ne.s32.totalorder %s62, %s64
      %p68 = scmp.eq.s32.totalorder %s14, 0
      %p69 = por %p67, %p68
      %p70 = scmp.ne.s32.totalorder %s62, %s64
      %p71 = scmp.eq.s32.totalorder %s19, 1
      %p72 = por %p70, %p71
      %p73 = scmp.ne.s32.totalorder %s64, %s65
      %p74 = scmp.eq.s32.totalorder %s19, 0
      %p75 = por %p73, %p74
      %p76 = scmp.ne.s32.totalorder %s64, %s65
      %p77 = scmp.eq.s32.totalorder %s20, 1
      %p78 = por %p76, %p77
      %p80 = scmp.ne.s32.totalorder %s65, %s79
      %p81 = scmp.eq.s32.totalorder %s20, 0
      %p82 = por %p80, %p81
      %s84 = sadd.s32 %s83, 1
      %p87 = scmp.eq.s32.totalorder %s14, 1
      %p88 = scmp.ne.s32.totalorder %s83, %s85
      %p89 = scmp.eq.s32.totalorder %s14, 0
      %p90 = por %p88, %p89
      %p91 = scmp.ne.s32.totalorder %s83, %s85
      %p92 = scmp.eq.s32.totalorder %s19, 1
      %p93 = por %p91, %p92
      %p94 = scmp.ne.s32.totalorder %s85, %s86
      %p95 = scmp.eq.s32.totalorder %s19, 0
      %p96 = por %p94, %p95
      %p97 = scmp.ne.s32.totalorder %s85, %s86
      %p98 = scmp.eq.s32.totalorder %s20, 1
      %p99 = por %p97, %p98
      %p101 = scmp.ne.s32.totalorder %s86, %s100
      %p102 = scmp.eq.s32.totalorder %s20, 0
      %p103 = por %p101, %p102
      %s105 = sadd.s32 %s104, 1
      %p108 = scmp.eq.s32.totalorder %s14, 1
      %p109 = scmp.ne.s32.totalorder %s104, %s106
      %p110 = scmp.eq.s32.totalorder %s14, 0
      %p111 = por %p109, %p110
      %p112 = scmp.ne.s32.totalorder %s104, %s106
      %p113 = scmp.eq.s32.totalorder %s19, 1
      %p114 = por %p112, %p113
      %p115 = scmp.ne.s32.totalorder %s106, %s107
      %p116 = scmp.eq.s32.totalorder %s19, 0
      %p117 = por %p115, %p116
      %p118 = scmp.ne.s32.totalorder %s106, %s107
      %p119 = scmp.eq.s32.totalorder %s20, 1
      %p120 = por %p118, %p119
      %p122 = scmp.ne.s32.totalorder %s107, %s121
      %p123 = scmp.eq.s32.totalorder %s20, 0
      %p124 = por %p122, %p123
      %s126 = sadd.s32 %s125, 1
      %p129 = scmp.eq.s32.totalorder %s14, 1
      %p130 = scmp.ne.s32.totalorder %s125, %s127
      %p131 = scmp.eq.s32.totalorder %s14, 0
      %p132 = por %p130, %p131
      %p133 = scmp.ne.s32.totalorder %s125, %s127
      %p134 = scmp.eq.s32.totalorder %s19, 1
      %p135 = por %p133, %p134
      %p136 = scmp.ne.s32.totalorder %s127, %s128
      %p137 = scmp.eq.s32.totalorder %s19, 0
      %p138 = por %p136, %p137
      %p139 = scmp.ne.s32.totalorder %s127, %s128
      %p140 = scmp.eq.s32.totalorder %s20, 1
      %p141 = por %p139, %p140
      %p143 = scmp.ne.s32.totalorder %s128, %s142
      %p144 = scmp.eq.s32.totalorder %s20, 0
      %p145 = por %p143, %p144
      %s146 = ssub.s32 %s21, %s33
      %s147 = ssub.s32 %s22, %s29
      %s148 = sor.u32 %s146, %s147
      %p149 = scmp.eq.s32.totalorder %s148, 0
      %s151 = sadd.s32 %s150, 1
      %s152 = scalar_select %p149, %s150, %s151
      %p155 = pneg %p149
      %p156 = scmp.eq.s32.totalorder %s14, 1
      %p157 = por %p155, %p156
      %p158 = scmp.ne.s32.totalorder %s150, %s153
      %p159 = scmp.eq.s32.totalorder %s14, 0
      %p160 = por %p158, %p159
      %p161 = scmp.ne.s32.totalorder %s150, %s153
      %p162 = scmp.eq.s32.totalorder %s19, 1
      %p163 = por %p161, %p162
      %p164 = scmp.ne.s32.totalorder %s153, %s154
      %p165 = scmp.eq.s32.totalorder %s19, 0
      %p166 = por %p164, %p165
      %p167 = scmp.ne.s32.totalorder %s153, %s154
      %p168 = scmp.eq.s32.totalorder %s20, 1
      %p169 = por %p167, %p168
      %p171 = scmp.ne.s32.totalorder %s154, %s170
      %p172 = scmp.eq.s32.totalorder %s20, 0
      %p173 = por %p171, %p172
      %p174 = scmp.le.s32.totalorder 1, %s14
      %p175 = scmp.lt.s32.totalorder %s14, 3
      %p176 = pnand %p174, %p175
      %p177 = pneg %p176
      // Predicated region
      $region9: #{tpu_custom_call.1} parent=5 // pred_check
        _
      $region10: #{tpu_custom_call.1} parent=5 // pred_check_branch
        %179 = sbr.rel (%p176) target = $region12
      $region11: #{tpu_custom_call.1} parent=5 // pred_region
        %s180 = ssub.s32 %s14, 1
        // Predicated region
        $region13: #{tpu_custom_call.1} parent=11 // pred_check
          %p181 = pneg %p75
        $region14: #{tpu_custom_call.1} parent=11 // pred_check_branch
          %183 = sbr.rel (%p181) target = $region16
        $region15: #{tpu_custom_call.1} parent=11 // pred_region
          _
        $region16: #{tpu_custom_call.1} parent=11 // pred_fallthru
          _
        // Predicated region
        $region17: #{tpu_custom_call.1} parent=11 // pred_check
          %p184 = pneg %p96
        $region18: #{tpu_custom_call.1} parent=11 // pred_check_branch
          %186 = sbr.rel (%p184) target = $region20
        $region19: #{tpu_custom_call.1} parent=11 // pred_region
          _
        $region20: #{tpu_custom_call.1} parent=11 // pred_fallthru
          _
        // Predicated region
        $region21: #{tpu_custom_call.1} parent=11 // pred_check
          %p187 = pneg %p117
        $region22: #{tpu_custom_call.1} parent=11 // pred_check_branch
          %189 = sbr.rel (%p187) target = $region24
        $region23: #{tpu_custom_call.1} parent=11 // pred_region
          _
        $region24: #{tpu_custom_call.1} parent=11 // pred_fallthru
          _
        // Predicated region
        $region25: #{tpu_custom_call.1} parent=11 // pred_check
          %p190 = pneg %p138
        $region26: #{tpu_custom_call.1} parent=11 // pred_check_branch
          %192 = sbr.rel (%p190) target = $region28
        $region27: #{tpu_custom_call.1} parent=11 // pred_region
          _
        $region28: #{tpu_custom_call.1} parent=11 // pred_fallthru
          _
      $region12: #{tpu_custom_call.1} parent=5 // pred_fallthru
        _
      %p193 = scmp.lt.s32.totalorder %s14, 2
      // Predicated region
      $region29: #{tpu_custom_call.1} parent=5 // pred_check
        %p194 = pneg %p193
      $region30: #{tpu_custom_call.1} parent=5 // pred_check_branch
        %196 = sbr.rel (%p194) target = $region32
      $region31: #{tpu_custom_call.1} parent=5 // pred_region
        // Predicated region
        $region33: #{tpu_custom_call.1} parent=31 // pred_check
          %p197 = pneg %p48
        $region34: #{tpu_custom_call.1} parent=31 // pred_check_branch
          %199 = sbr.rel (%p197) target = $region36
        $region35: #{tpu_custom_call.1} parent=31 // pred_region
          %p200 = scmp.lt.s32.totalorder %s21, 1
          %s201 = scalar_select %p200, %s21, 1
          %p202 = scmp.lt.s32.totalorder %s22, 0
          %s203 = scalar_select %p202, %s22, 0
          %s204 = smul.addr %s203, 76
          %s205 = smul.addr %s201, 76
          %s206 = sadd.s32 %s204, %s205
          %s207 = smul.addr %s206, 4
          %s208 = scalar_lea.vmem %s0, %s207
        $region36: #{tpu_custom_call.1} parent=31 // pred_fallthru
          _
      $region32: #{tpu_custom_call.1} parent=5 // pred_fallthru
        _
      %p209 = scmp.le.s32.totalorder 1, %s14
      %p210 = scmp.lt.s32.totalorder %s14, 3
      %p211 = pnand %p209, %p210
      %p212 = pneg %p211
      // Predicated region
      $region37: #{tpu_custom_call.1} parent=5 // pred_check
        _
      $region38: #{tpu_custom_call.1} parent=5 // pred_check_branch
        %214 = sbr.rel (%p211) target = $region40
      $region39: #{tpu_custom_call.1} parent=5 // pred_region
        %s215 = ssub.s32 %s14, 1
        %p216 = scmp.lt.s32.totalorder %s23, 1
        %s217 = scalar_select %p216, %s23, 1
        %p218 = scmp.lt.s32.totalorder %s24, 0
        %s219 = scalar_select %p218, %s24, 0
        %s220 = smul.addr %s219, 76
        %s221 = smul.addr %s217, 76
        %s222 = sadd.s32 %s220, %s221
        %s223 = smul.addr %s222, 4
        %s224 = scalar_lea.vmem %s0, %s223
        %p225 = pneg %p54
        %p226 = pneg %p51
        %p227 = pneg %p75
        %p228 = pneg %p72
        %p229 = pneg %p96
        %p230 = pneg %p93
        %p231 = pneg %p117
        %p232 = pneg %p114
        %p233 = pneg %p138
        %p234 = pneg %p135
        %p235 = pneg %p166
        %p236 = pneg %p163
        %s237 = sand.u32 %s153, 1
        %s238 = scalar_lea.sflag [#allocation3], %s237
        %s239 = sand.u32 %s153, 1
        %s240 = smul.addr %s239, 256
        %s241 = scalar_lea.vmem [#allocation2], %s240
        %p242 = scmp.lt.s32.totalorder %s23, 1
        %s243 = scalar_select %p242, %s23, 1
        %p244 = scmp.lt.s32.totalorder %s24, 0
        %s245 = scalar_select %p244, %s24, 0
        %s246 = smul.addr %s245, 76
        %s247 = smul.addr %s243, 76
        %s248 = sadd.s32 %s246, %s247
        %s249 = smul.addr %s248, 4
        %s250 = scalar_lea.vmem %s0, %s249
        %v252 = vld [vmem:[%s250] sm:$0xf]
        %v253 = vld [vmem:[%s250 + $0x4] sm:$0xf]
        %v254 = vld [vmem:[%s250 + $0x8] sm:$0xf]
        %v255 = vld [vmem:[%s250 + $0xc] sm:$0xf]
        %v256 = vld [vmem:[%s250 + $0x10] sm:$0xf]
        %v257 = vld [vmem:[%s250 + $0x14] sm:$0xf]
        %v258 = vld [vmem:[%s250 + $0x18] sm:$0xf]
        %v259 = vld [vmem:[%s250 + $0x1c] sm:$0xf]
        %v260 = vld [vmem:[%s250 + $0x20] sm:$0xf]
        %v261 = vld [vmem:[%s250 + $0x24] sm:$0xf]
        %v262 = vld [vmem:[%s250 + $0x28] sm:$0xf]
        %v263 = vld [vmem:[%s250 + $0x2c] sm:$0xf]
        %v264 = vld [vmem:[%s250 + $0x30] sm:$0xf]
        %v265 = vld [vmem:[%s250 + $0x34] sm:$0xf]
        %v266 = vld [vmem:[%s250 + $0x38] sm:$0xf]
        %v267 = vld [vmem:[%s250 + $0x3c] sm:$0xf]
        %v268 = vld [vmem:[%s250 + $0x40] sm:$0xf]
        %v269 = vld [vmem:[%s250 + $0x44] sm:$0xf]
        %v270 = vld [vmem:[%s250 + $0x48] sm:$0xf]
        %v271 = vld [vmem:[%s250 + $0x4c] sm:$0xf]
        %v272 = vld [vmem:[%s250 + $0x50] sm:$0xf]
        %v273 = vld [vmem:[%s250 + $0x54] sm:$0xf]
        %v274 = vld [vmem:[%s250 + $0x58] sm:$0xf]
        %v275 = vld [vmem:[%s250 + $0x5c] sm:$0xf]
        %v276 = vld [vmem:[%s250 + $0x60] sm:$0xf]
        %v277 = vld [vmem:[%s250 + $0x64] sm:$0xf]
        %v278 = vld [vmem:[%s250 + $0x68] sm:$0xf]
        %v279 = vld [vmem:[%s250 + $0x6c] sm:$0xf]
        %v280 = vld [vmem:[%s250 + $0x70] sm:$0xf]
        %v281 = vld [vmem:[%s250 + $0x74] sm:$0xf]
        %v282 = vld [vmem:[%s250 + $0x78] sm:$0xf]
        %v283 = vld [vmem:[%s250 + $0x7c] sm:$0xf]
        %v284 = vld [vmem:[%s250 + $0x80] sm:$0xf]
        %v285 = vld [vmem:[%s250 + $0x84] sm:$0xf]
        %v286 = vld [vmem:[%s250 + $0x88] sm:$0xf]
        %v287 = vld [vmem:[%s250 + $0x8c] sm:$0xf]
        %v288 = vld [vmem:[%s250 + $0x90] sm:$0xf]
        %v289 = vld [vmem:[%s250 + $0x94] sm:$0xf]
        %v290 = vld [vmem:[%s250 + $0x98] sm:$0xf]
        %v291 = vld [vmem:[%s250 + $0x9c] sm:$0xf]
        %v292 = vld [vmem:[%s250 + $0xa0] sm:$0xf]
        %v293 = vld [vmem:[%s250 + $0xa4] sm:$0xf]
        %v294 = vld [vmem:[%s250 + $0xa8] sm:$0xf]
        %v295 = vld [vmem:[%s250 + $0xac] sm:$0xf]
        %v296 = vld [vmem:[%s250 + $0xb0] sm:$0xf]
        %v297 = vld [vmem:[%s250 + $0xb4] sm:$0xf]
        %v298 = vld [vmem:[%s250 + $0xb8] sm:$0xf]
        %v299 = vld [vmem:[%s250 + $0xbc] sm:$0xf]
        %v300 = vld [vmem:[%s250 + $0xc0] sm:$0xf]
        %v301 = vld [vmem:[%s250 + $0xc4] sm:$0xf]
        %v302 = vld [vmem:[%s250 + $0xc8] sm:$0xf]
        %v303 = vld [vmem:[%s250 + $0xcc] sm:$0xf]
        %v304 = vld [vmem:[%s250 + $0xd0] sm:$0xf]
        %v305 = vld [vmem:[%s250 + $0xd4] sm:$0xf]
        %v306 = vld [vmem:[%s250 + $0xd8] sm:$0xf]
        %v307 = vld [vmem:[%s250 + $0xdc] sm:$0xf]
        %v308 = vld [vmem:[%s250 + $0xe0] sm:$0xf]
        %v309 = vld [vmem:[%s250 + $0xe4] sm:$0xf]
        %v310 = vld [vmem:[%s250 + $0xe8] sm:$0xf]
        %v311 = vld [vmem:[%s250 + $0xec] sm:$0xf]
        %v312 = vld [vmem:[%s250 + $0xf0] sm:$0xf]
        %v313 = vld [vmem:[%s250 + $0xf4] sm:$0xf]
        %v314 = vld [vmem:[%s250 + $0xf8] sm:$0xf]
        %v315 = vld [vmem:[%s250 + $0xfc] sm:$0xf]
        %v316 = vld [vmem:[%s250 + $0x100] sm:$0xf]
        %v317 = vld [vmem:[%s250 + $0x104] sm:$0xf]
        %v318 = vld [vmem:[%s250 + $0x108] sm:$0xf]
        %v319 = vld [vmem:[%s250 + $0x10c] sm:$0xf]
        %v320 = vld [vmem:[%s250 + $0x110] sm:$0xf]
        %v321 = vld [vmem:[%s250 + $0x114] sm:$0xf]
        %v322 = vld [vmem:[%s250 + $0x118] sm:$0xf]
        %v323 = vld [vmem:[%s250 + $0x11c] sm:$0xf]
        %v324 = vld [vmem:[%s250 + $0x120] sm:$0x1]
        %v325 = vld [vmem:[%s250] sm:$0xe]
        %v398 = vunpack.c.l.b16 %v252
        %v399 = vunpack.c.l.b16 %v253
        %v400 = vunpack.c.l.b16 %v254
        %v401 = vunpack.c.l.b16 %v255
        %v402 = vunpack.c.l.b16 %v256
        %v403 = vunpack.c.l.b16 %v257
        %v404 = vunpack.c.l.b16 %v258
        %v405 = vunpack.c.l.b16 %v259
        %v406 = vunpack.c.l.b16 %v260
        %v407 = vunpack.c.l.b16 %v261
        %v408 = vunpack.c.l.b16 %v262
        %v409 = vunpack.c.l.b16 %v263
        %v410 = vunpack.c.l.b16 %v264
        %v411 = vunpack.c.l.b16 %v265
        %v412 = vunpack.c.l.b16 %v266
        %v413 = vunpack.c.l.b16 %v267
        %v414 = vunpack.c.l.b16 %v268
        %v415 = vunpack.c.l.b16 %v269
        %v416 = vunpack.c.l.b16 %v270
        %v417 = vunpack.c.l.b16 %v271
        %v418 = vunpack.c.l.b16 %v272
        %v419 = vunpack.c.l.b16 %v273
        %v420 = vunpack.c.l.b16 %v274
        %v421 = vunpack.c.l.b16 %v275
        %v422 = vunpack.c.l.b16 %v276
        %v423 = vunpack.c.l.b16 %v277
        %v424 = vunpack.c.l.b16 %v278
        %v425 = vunpack.c.l.b16 %v279
        %v426 = vunpack.c.l.b16 %v280
        %v427 = vunpack.c.l.b16 %v281
        %v428 = vunpack.c.l.b16 %v282
        %v429 = vunpack.c.l.b16 %v283
        %v430 = vunpack.c.l.b16 %v284
        %v431 = vunpack.c.l.b16 %v285
        %v432 = vunpack.c.l.b16 %v286
        %v433 = vunpack.c.l.b16 %v287
        %v434 = vunpack.c.l.b16 %v288
        %v435 = vunpack.c.l.b16 %v289
        %v436 = vunpack.c.l.b16 %v290
        %v437 = vunpack.c.l.b16 %v291
        %v438 = vunpack.c.l.b16 %v292
        %v439 = vunpack.c.l.b16 %v293
        %v440 = vunpack.c.l.b16 %v294
        %v441 = vunpack.c.l.b16 %v295
        %v442 = vunpack.c.l.b16 %v296
        %v443 = vunpack.c.l.b16 %v297
        %v444 = vunpack.c.l.b16 %v298
        %v445 = vunpack.c.l.b16 %v299
        %v446 = vunpack.c.l.b16 %v300
        %v447 = vunpack.c.l.b16 %v301
        %v448 = vunpack.c.l.b16 %v302
        %v449 = vunpack.c.l.b16 %v303
        %v450 = vunpack.c.l.b16 %v304
        %v451 = vunpack.c.l.b16 %v305
        %v452 = vunpack.c.l.b16 %v306
        %v453 = vunpack.c.l.b16 %v307
        %v454 = vunpack.c.l.b16 %v308
        %v455 = vunpack.c.l.b16 %v309
        %v456 = vunpack.c.l.b16 %v310
        %v457 = vunpack.c.l.b16 %v311
        %v458 = vunpack.c.l.b16 %v312
        %v459 = vunpack.c.l.b16 %v313
        %v460 = vunpack.c.l.b16 %v314
        %v461 = vunpack.c.l.b16 %v315
        %v462 = vunpack.c.l.b16 %v316
        %v463 = vunpack.c.l.b16 %v317
        %v464 = vunpack.c.l.b16 %v318
        %v465 = vunpack.c.l.b16 %v319
        %v466 = vunpack.c.l.b16 %v320
        %v467 = vunpack.c.l.b16 %v321
        %v468 = vunpack.c.l.b16 %v322
        %v469 = vunpack.c.l.b16 %v323
        %v470 = vpack.c.b16 %v399, %v398
        %v471 = vpack.c.b16 %v401, %v400
        %v472 = vpack.c.b16 %v403, %v402
        %v473 = vpack.c.b16 %v405, %v404
        %v474 = vpack.c.b16 %v407, %v406
        %v475 = vpack.c.b16 %v409, %v408
        %v476 = vpack.c.b16 %v411, %v410
        %v477 = vpack.c.b16 %v413, %v412
        %v478 = vpack.c.b16 %v415, %v414
        %v479 = vpack.c.b16 %v417, %v416
        %v480 = vpack.c.b16 %v419, %v418
        %v481 = vpack.c.b16 %v421, %v420
        %v482 = vpack.c.b16 %v423, %v422
        %v483 = vpack.c.b16 %v425, %v424
        %v484 = vpack.c.b16 %v427, %v426
        %v485 = vpack.c.b16 %v429, %v428
        %v486 = vpack.c.b16 %v431, %v430
        %v487 = vpack.c.b16 %v433, %v432
        %v488 = vpack.c.b16 %v435, %v434
        %v489 = vpack.c.b16 %v437, %v436
        %v490 = vpack.c.b16 %v439, %v438
        %v491 = vpack.c.b16 %v441, %v440
        %v492 = vpack.c.b16 %v443, %v442
        %v493 = vpack.c.b16 %v445, %v444
        %v494 = vpack.c.b16 %v447, %v446
        %v495 = vpack.c.b16 %v449, %v448
        %v496 = vpack.c.b16 %v451, %v450
        %v497 = vpack.c.b16 %v453, %v452
        %v498 = vpack.c.b16 %v455, %v454
        %v499 = vpack.c.b16 %v457, %v456
        %v500 = vpack.c.b16 %v459, %v458
        %v501 = vpack.c.b16 %v461, %v460
        %v502 = vpack.c.b16 %v463, %v462
        %v503 = vpack.c.b16 %v465, %v464
        %v504 = vpack.c.b16 %v467, %v466
        %v505 = vpack.c.b16 %v469, %v468
        %v507 = vunpack.c.l.b16 %v324
        %v508 = vpack.c.b16 %v507, %v507
        %vm509 = vsmask.f32 7424
        %v511 = vshrl.u32 %v470, 16
        %v513 = vshll.u32 %v470, 16
        %v515 = vrot.slane %v513, 1
        %v516 = vor.u32 %v511, %v515
        %v518 = vshll.u32 %v471, 16
        %v520 = vrot.slane %v518, 1
        %v521 = vsel %vm509, %v516, %v520
        %v522 = vshrl.u32 %v471, 16
        %v524 = vor.u32 %v522, %v520
        %v526 = vshll.u32 %v472, 16
        %v528 = vrot.slane %v526, 1
        %v529 = vsel %vm509, %v524, %v528
        %v530 = vshrl.u32 %v472, 16
        %v532 = vor.u32 %v530, %v528
        %v534 = vshll.u32 %v473, 16
        %v536 = vrot.slane %v534, 1
        %v537 = vsel %vm509, %v532, %v536
        %v538 = vshrl.u32 %v473, 16
        %v540 = vor.u32 %v538, %v536
        %v542 = vshll.u32 %v474, 16
        %v544 = vrot.slane %v542, 1
        %v545 = vsel %vm509, %v540, %v544
        %v546 = vshrl.u32 %v474, 16
        %v548 = vor.u32 %v546, %v544
        %v550 = vshll.u32 %v475, 16
        %v552 = vrot.slane %v550, 1
        %v553 = vsel %vm509, %v548, %v552
        %v554 = vshrl.u32 %v475, 16
        %v556 = vor.u32 %v554, %v552
        %v558 = vshll.u32 %v476, 16
        %v560 = vrot.slane %v558, 1
        %v561 = vsel %vm509, %v556, %v560
        %v562 = vshrl.u32 %v476, 16
        %v564 = vor.u32 %v562, %v560
        %v566 = vshll.u32 %v477, 16
        %v568 = vrot.slane %v566, 1
        %v569 = vsel %vm509, %v564, %v568
        %v570 = vshrl.u32 %v477, 16
        %v572 = vor.u32 %v570, %v568
        %v574 = vshll.u32 %v478, 16
        %v576 = vrot.slane %v574, 1
        %v577 = vsel %vm509, %v572, %v576
        %v578 = vshrl.u32 %v478, 16
        %v580 = vor.u32 %v578, %v576
        %v582 = vshll.u32 %v479, 16
        %v584 = vrot.slane %v582, 1
        %v585 = vsel %vm509, %v580, %v584
        %v586 = vshrl.u32 %v479, 16
        %v588 = vor.u32 %v586, %v584
        %v590 = vshll.u32 %v480, 16
        %v592 = vrot.slane %v590, 1
        %v593 = vsel %vm509, %v588, %v592
        %v594 = vshrl.u32 %v480, 16
        %v596 = vor.u32 %v594, %v592
        %v598 = vshll.u32 %v481, 16
        %v600 = vrot.slane %v598, 1
        %v601 = vsel %vm509, %v596, %v600
        %v602 = vshrl.u32 %v481, 16
        %v604 = vor.u32 %v602, %v600
        %v606 = vshll.u32 %v482, 16
        %v608 = vrot.slane %v606, 1
        %v609 = vsel %vm509, %v604, %v608
        %v610 = vshrl.u32 %v482, 16
        %v612 = vor.u32 %v610, %v608
        %v614 = vshll.u32 %v483, 16
        %v616 = vrot.slane %v614, 1
        %v617 = vsel %vm509, %v612, %v616
        %v618 = vshrl.u32 %v483, 16
        %v620 = vor.u32 %v618, %v616
        %v622 = vshll.u32 %v484, 16
        %v624 = vrot.slane %v622, 1
        %v625 = vsel %vm509, %v620, %v624
        %v626 = vshrl.u32 %v484, 16
        %v628 = vor.u32 %v626, %v624
        %v630 = vshll.u32 %v485, 16
        %v632 = vrot.slane %v630, 1
        %v633 = vsel %vm509, %v628, %v632
        %v634 = vshrl.u32 %v485, 16
        %v636 = vor.u32 %v634, %v632
        %v638 = vshll.u32 %v486, 16
        %v640 = vrot.slane %v638, 1
        %v641 = vsel %vm509, %v636, %v640
        %v642 = vshrl.u32 %v486, 16
        %v644 = vor.u32 %v642, %v640
        %v646 = vshll.u32 %v487, 16
        %v648 = vrot.slane %v646, 1
        %v649 = vsel %vm509, %v644, %v648
        %v650 = vshrl.u32 %v487, 16
        %v652 = vor.u32 %v650, %v648
        %v654 = vshll.u32 %v488, 16
        %v656 = vrot.slane %v654, 1
        %v657 = vsel %vm509, %v652, %v656
        %v658 = vshrl.u32 %v488, 16
        %v660 = vor.u32 %v658, %v656
        %v662 = vshll.u32 %v489, 16
        %v664 = vrot.slane %v662, 1
        %v665 = vsel %vm509, %v660, %v664
        %v666 = vshrl.u32 %v489, 16
        %v668 = vor.u32 %v666, %v664
        %v670 = vshll.u32 %v490, 16
        %v672 = vrot.slane %v670, 1
        %v673 = vsel %vm509, %v668, %v672
        %v674 = vshrl.u32 %v490, 16
        %v676 = vor.u32 %v674, %v672
        %v678 = vshll.u32 %v491, 16
        %v680 = vrot.slane %v678, 1
        %v681 = vsel %vm509, %v676, %v680
        %v682 = vshrl.u32 %v491, 16
        %v684 = vor.u32 %v682, %v680
        %v686 = vshll.u32 %v492, 16
        %v688 = vrot.slane %v686, 1
        %v689 = vsel %vm509, %v684, %v688
        %v690 = vshrl.u32 %v492, 16
        %v692 = vor.u32 %v690, %v688
        %v694 = vshll.u32 %v493, 16
        %v696 = vrot.slane %v694, 1
        %v697 = vsel %vm509, %v692, %v696
        %v698 = vshrl.u32 %v493, 16
        %v700 = vor.u32 %v698, %v696
        %v702 = vshll.u32 %v494, 16
        %v704 = vrot.slane %v702, 1
        %v705 = vsel %vm509, %v700, %v704
        %v706 = vshrl.u32 %v494, 16
        %v708 = vor.u32 %v706, %v704
        %v710 = vshll.u32 %v495, 16
        %v712 = vrot.slane %v710, 1
        %v713 = vsel %vm509, %v708, %v712
        %v714 = vshrl.u32 %v495, 16
        %v716 = vor.u32 %v714, %v712
        %v718 = vshll.u32 %v496, 16
        %v720 = vrot.slane %v718, 1
        %v721 = vsel %vm509, %v716, %v720
        %v722 = vshrl.u32 %v496, 16
        %v724 = vor.u32 %v722, %v720
        %v726 = vshll.u32 %v497, 16
        %v728 = vrot.slane %v726, 1
        %v729 = vsel %vm509, %v724, %v728
        %v730 = vshrl.u32 %v497, 16
        %v732 = vor.u32 %v730, %v728
        %v734 = vshll.u32 %v498, 16
        %v736 = vrot.slane %v734, 1
        %v737 = vsel %vm509, %v732, %v736
        %v738 = vshrl.u32 %v498, 16
        %v740 = vor.u32 %v738, %v736
        %v742 = vshll.u32 %v499, 16
        %v744 = vrot.slane %v742, 1
        %v745 = vsel %vm509, %v740, %v744
        %v746 = vshrl.u32 %v499, 16
        %v748 = vor.u32 %v746, %v744
        %v750 = vshll.u32 %v500, 16
        %v752 = vrot.slane %v750, 1
        %v753 = vsel %vm509, %v748, %v752
        %v754 = vshrl.u32 %v500, 16
        %v756 = vor.u32 %v754, %v752
        %v758 = vshll.u32 %v501, 16
        %v760 = vrot.slane %v758, 1
        %v761 = vsel %vm509, %v756, %v760
        %v762 = vshrl.u32 %v501, 16
        %v764 = vor.u32 %v762, %v760
        %v766 = vshll.u32 %v502, 16
        %v768 = vrot.slane %v766, 1
        %v769 = vsel %vm509, %v764, %v768
        %v770 = vshrl.u32 %v502, 16
        %v772 = vor.u32 %v770, %v768
        %v774 = vshll.u32 %v503, 16
        %v776 = vrot.slane %v774, 1
        %v777 = vsel %vm509, %v772, %v776
        %v778 = vshrl.u32 %v503, 16
        %v780 = vor.u32 %v778, %v776
        %v782 = vshll.u32 %v504, 16
        %v784 = vrot.slane %v782, 1
        %v785 = vsel %vm509, %v780, %v784
        %v786 = vshrl.u32 %v504, 16
        %v788 = vor.u32 %v786, %v784
        %v790 = vshll.u32 %v505, 16
        %v792 = vrot.slane %v790, 1
        %v793 = vsel %vm509, %v788, %v792
        %v794 = vshrl.u32 %v505, 16
        %v796 = vor.u32 %v794, %v792
        %v798 = vshll.u32 %v508, 16
        %v800 = vrot.slane %v798, 1
        %v801 = vsel %vm509, %v796, %v800
        %802 = vrot.lane.b32.xlu0 %v521, 4
        %v803 = vpop.permute.xlu0 %802
        %804 = vrot.lane.b32.xlu0 %v529, 4
        %v805 = vpop.permute.xlu0 %804
        %806 = vrot.lane.b32.xlu0 %v537, 4
        %v807 = vpop.permute.xlu0 %806
        %808 = vrot.lane.b32.xlu0 %v545, 4
        %v809 = vpop.permute.xlu0 %808
        %810 = vrot.lane.b32.xlu0 %v553, 4
        %v811 = vpop.permute.xlu0 %810
        %812 = vrot.lane.b32.xlu0 %v561, 4
        %v813 = vpop.permute.xlu0 %812
        %814 = vrot.lane.b32.xlu0 %v569, 4
        %v815 = vpop.permute.xlu0 %814
        %816 = vrot.lane.b32.xlu0 %v577, 4
        %v817 = vpop.permute.xlu0 %816
        %818 = vrot.lane.b32.xlu0 %v585, 4
        %v819 = vpop.permute.xlu0 %818
        %820 = vrot.lane.b32.xlu0 %v593, 4
        %v821 = vpop.permute.xlu0 %820
        %822 = vrot.lane.b32.xlu0 %v601, 4
        %v823 = vpop.permute.xlu0 %822
        %824 = vrot.lane.b32.xlu0 %v609, 4
        %v825 = vpop.permute.xlu0 %824
        %826 = vrot.lane.b32.xlu0 %v617, 4
        %v827 = vpop.permute.xlu0 %826
        %828 = vrot.lane.b32.xlu0 %v625, 4
        %v829 = vpop.permute.xlu0 %828
        %830 = vrot.lane.b32.xlu0 %v633, 4
        %v831 = vpop.permute.xlu0 %830
        %832 = vrot.lane.b32.xlu0 %v641, 4
        %v833 = vpop.permute.xlu0 %832
        %834 = vrot.lane.b32.xlu0 %v649, 4
        %v835 = vpop.permute.xlu0 %834
        %836 = vrot.lane.b32.xlu0 %v657, 4
        %v837 = vpop.permute.xlu0 %836
        %838 = vrot.lane.b32.xlu0 %v665, 4
        %v839 = vpop.permute.xlu0 %838
        %840 = vrot.lane.b32.xlu0 %v673, 4
        %v841 = vpop.permute.xlu0 %840
        %842 = vrot.lane.b32.xlu0 %v681, 4
        %v843 = vpop.permute.xlu0 %842
        %844 = vrot.lane.b32.xlu0 %v689, 4
        %v845 = vpop.permute.xlu0 %844
        %846 = vrot.lane.b32.xlu0 %v697, 4
        %v847 = vpop.permute.xlu0 %846
        %848 = vrot.lane.b32.xlu0 %v705, 4
        %v849 = vpop.permute.xlu0 %848
        %850 = vrot.lane.b32.xlu0 %v713, 4
        %v851 = vpop.permute.xlu0 %850
        %852 = vrot.lane.b32.xlu0 %v721, 4
        %v853 = vpop.permute.xlu0 %852
        %854 = vrot.lane.b32.xlu0 %v729, 4
        %v855 = vpop.permute.xlu0 %854
        %856 = vrot.lane.b32.xlu0 %v737, 4
        %v857 = vpop.permute.xlu0 %856
        %858 = vrot.lane.b32.xlu0 %v745, 4
        %v859 = vpop.permute.xlu0 %858
        %860 = vrot.lane.b32.xlu0 %v753, 4
        %v861 = vpop.permute.xlu0 %860
        %862 = vrot.lane.b32.xlu0 %v761, 4
        %v863 = vpop.permute.xlu0 %862
        %864 = vrot.lane.b32.xlu0 %v769, 4
        %v865 = vpop.permute.xlu0 %864
        %866 = vrot.lane.b32.xlu0 %v777, 4
        %v867 = vpop.permute.xlu0 %866
        %868 = vrot.lane.b32.xlu0 %v785, 4
        %v869 = vpop.permute.xlu0 %868
        %870 = vrot.lane.b32.xlu0 %v793, 4
        %v871 = vpop.permute.xlu0 %870
        %872 = vrot.lane.b32.xlu0 %v801, 4
        %v873 = vpop.permute.xlu0 %872
        %v875 = vunpack.c.l.b16 %v325
        %v876 = vpack.c.b16 %v399, %v875
        %vm877 = vcmask 1046528
        %v878 = vrot.slane %v876, 1
        %v879 = vrot.slane %v471, 1
        %v880 = vsel %vm877, %v878, %v879
        %v881 = vrot.slane %v472, 1
        %v882 = vsel %vm877, %v879, %v881
        %v883 = vrot.slane %v473, 1
        %v884 = vsel %vm877, %v881, %v883
        %v885 = vrot.slane %v474, 1
        %v886 = vsel %vm877, %v883, %v885
        %v887 = vrot.slane %v475, 1
        %v888 = vsel %vm877, %v885, %v887
        %v889 = vrot.slane %v476, 1
        %v890 = vsel %vm877, %v887, %v889
        %v891 = vrot.slane %v477, 1
        %v892 = vsel %vm877, %v889, %v891
        %v893 = vrot.slane %v478, 1
        %v894 = vsel %vm877, %v891, %v893
        %v895 = vrot.slane %v479, 1
        %v896 = vsel %vm877, %v893, %v895
        %v897 = vrot.slane %v480, 1
        %v898 = vsel %vm877, %v895, %v897
        %v899 = vrot.slane %v481, 1
        %v900 = vsel %vm877, %v897, %v899
        %v901 = vrot.slane %v482, 1
        %v902 = vsel %vm877, %v899, %v901
        %v903 = vrot.slane %v483, 1
        %v904 = vsel %vm877, %v901, %v903
        %v905 = vrot.slane %v484, 1
        %v906 = vsel %vm877, %v903, %v905
        %v907 = vrot.slane %v485, 1
        %v908 = vsel %vm877, %v905, %v907
        %v909 = vrot.slane %v486, 1
        %v910 = vsel %vm877, %v907, %v909
        %v911 = vrot.slane %v487, 1
        %v912 = vsel %vm877, %v909, %v911
        %v913 = vrot.slane %v488, 1
        %v914 = vsel %vm877, %v911, %v913
        %v915 = vrot.slane %v489, 1
        %v916 = vsel %vm877, %v913, %v915
        %v917 = vrot.slane %v490, 1
        %v918 = vsel %vm877, %v915, %v917
        %v919 = vrot.slane %v491, 1
        %v920 = vsel %vm877, %v917, %v919
        %v921 = vrot.slane %v492, 1
        %v922 = vsel %vm877, %v919, %v921
        %v923 = vrot.slane %v493, 1
        %v924 = vsel %vm877, %v921, %v923
        %v925 = vrot.slane %v494, 1
        %v926 = vsel %vm877, %v923, %v925
        %v927 = vrot.slane %v495, 1
        %v928 = vsel %vm877, %v925, %v927
        %v929 = vrot.slane %v496, 1
        %v930 = vsel %vm877, %v927, %v929
        %v931 = vrot.slane %v497, 1
        %v932 = vsel %vm877, %v929, %v931
        %v933 = vrot.slane %v498, 1
        %v934 = vsel %vm877, %v931, %v933
        %v935 = vrot.slane %v499, 1
        %v936 = vsel %vm877, %v933, %v935
        %v937 = vrot.slane %v500, 1
        %v938 = vsel %vm877, %v935, %v937
        %v939 = vrot.slane %v501, 1
        %v940 = vsel %vm877, %v937, %v939
        %v941 = vrot.slane %v502, 1
        %v942 = vsel %vm877, %v939, %v941
        %v943 = vrot.slane %v503, 1
        %v944 = vsel %vm877, %v941, %v943
        %v945 = vrot.slane %v504, 1
        %v946 = vsel %vm877, %v943, %v945
        %v947 = vrot.slane %v505, 1
        %v948 = vsel %vm877, %v945, %v947
        %v949 = vrot.slane %v508, 1
        %v950 = vsel %vm877, %v947, %v949
        %951 = vrot.lane.b32.xlu0 %v880, 8
        %v952 = vpop.permute.xlu0 %951
        %953 = vrot.lane.b32.xlu0 %v882, 8
        %v954 = vpop.permute.xlu0 %953
        %955 = vrot.lane.b32.xlu0 %v884, 8
        %v956 = vpop.permute.xlu0 %955
        %957 = vrot.lane.b32.xlu0 %v886, 8
        %v958 = vpop.permute.xlu0 %957
        %959 = vrot.lane.b32.xlu0 %v888, 8
        %v960 = vpop.permute.xlu0 %959
        %961 = vrot.lane.b32.xlu0 %v890, 8
        %v962 = vpop.permute.xlu0 %961
        %963 = vrot.lane.b32.xlu0 %v892, 8
        %v964 = vpop.permute.xlu0 %963
        %965 = vrot.lane.b32.xlu0 %v894, 8
        %v966 = vpop.permute.xlu0 %965
        %967 = vrot.lane.b32.xlu0 %v896, 8
        %v968 = vpop.permute.xlu0 %967
        %969 = vrot.lane.b32.xlu0 %v898, 8
        %v970 = vpop.permute.xlu0 %969
        %971 = vrot.lane.b32.xlu0 %v900, 8
        %v972 = vpop.permute.xlu0 %971
        %973 = vrot.lane.b32.xlu0 %v902, 8
        %v974 = vpop.permute.xlu0 %973
        %975 = vrot.lane.b32.xlu0 %v904, 8
        %v976 = vpop.permute.xlu0 %975
        %977 = vrot.lane.b32.xlu0 %v906, 8
        %v978 = vpop.permute.xlu0 %977
        %979 = vrot.lane.b32.xlu0 %v908, 8
        %v980 = vpop.permute.xlu0 %979
        %981 = vrot.lane.b32.xlu0 %v910, 8
        %v982 = vpop.permute.xlu0 %981
        %983 = vrot.lane.b32.xlu0 %v912, 8
        %v984 = vpop.permute.xlu0 %983
        %985 = vrot.lane.b32.xlu0 %v914, 8
        %v986 = vpop.permute.xlu0 %985
        %987 = vrot.lane.b32.xlu0 %v916, 8
        %v988 = vpop.permute.xlu0 %987
        %989 = vrot.lane.b32.xlu0 %v918, 8
        %v990 = vpop.permute.xlu0 %989
        %991 = vrot.lane.b32.xlu0 %v920, 8
        %v992 = vpop.permute.xlu0 %991
        %993 = vrot.lane.b32.xlu0 %v922, 8
        %v994 = vpop.permute.xlu0 %993
        %995 = vrot.lane.b32.xlu0 %v924, 8
        %v996 = vpop.permute.xlu0 %995
        %997 = vrot.lane.b32.xlu0 %v926, 8
        %v998 = vpop.permute.xlu0 %997
        %999 = vrot.lane.b32.xlu0 %v928, 8
        %v1000 = vpop.permute.xlu0 %999
        %1001 = vrot.lane.b32.xlu0 %v930, 8
        %v1002 = vpop.permute.xlu0 %1001
        %1003 = vrot.lane.b32.xlu0 %v932, 8
        %v1004 = vpop.permute.xlu0 %1003
        %1005 = vrot.lane.b32.xlu0 %v934, 8
        %v1006 = vpop.permute.xlu0 %1005
        %1007 = vrot.lane.b32.xlu0 %v936, 8
        %v1008 = vpop.permute.xlu0 %1007
        %1009 = vrot.lane.b32.xlu0 %v938, 8
        %v1010 = vpop.permute.xlu0 %1009
        %1011 = vrot.lane.b32.xlu0 %v940, 8
        %v1012 = vpop.permute.xlu0 %1011
        %1013 = vrot.lane.b32.xlu0 %v942, 8
        %v1014 = vpop.permute.xlu0 %1013
        %1015 = vrot.lane.b32.xlu0 %v944, 8
        %v1016 = vpop.permute.xlu0 %1015
        %1017 = vrot.lane.b32.xlu0 %v946, 8
        %v1018 = vpop.permute.xlu0 %1017
        %1019 = vrot.lane.b32.xlu0 %v948, 8
        %v1020 = vpop.permute.xlu0 %1019
        %1021 = vrot.lane.b32.xlu0 %v950, 8
        %v1022 = vpop.permute.xlu0 %1021
        %vm1023 = vcmask 31744
        %v1025 = vsel %vm1023, %v470, %v803
        %v1027 = vsel %vm1023, %v471, %v805
        %v1029 = vsel %vm1023, %v472, %v807
        %v1031 = vsel %vm1023, %v473, %v809
        %v1033 = vsel %vm1023, %v474, %v811
        %v1035 = vsel %vm1023, %v475, %v813
        %v1037 = vsel %vm1023, %v476, %v815
        %v1039 = vsel %vm1023, %v477, %v817
        %v1041 = vsel %vm1023, %v478, %v819
        %v1043 = vsel %vm1023, %v479, %v821
        %v1045 = vsel %vm1023, %v480, %v823
        %v1047 = vsel %vm1023, %v481, %v825
        %v1049 = vsel %vm1023, %v482, %v827
        %v1051 = vsel %vm1023, %v483, %v829
        %v1053 = vsel %vm1023, %v484, %v831
        %v1055 = vsel %vm1023, %v485, %v833
        %v1057 = vsel %vm1023, %v486, %v835
        %v1059 = vsel %vm1023, %v487, %v837
        %v1061 = vsel %vm1023, %v488, %v839
        %v1063 = vsel %vm1023, %v489, %v841
        %v1065 = vsel %vm1023, %v490, %v843
        %v1067 = vsel %vm1023, %v491, %v845
        %v1069 = vsel %vm1023, %v492, %v847
        %v1071 = vsel %vm1023, %v493, %v849
        %v1073 = vsel %vm1023, %v494, %v851
        %v1075 = vsel %vm1023, %v495, %v853
        %v1077 = vsel %vm1023, %v496, %v855
        %v1079 = vsel %vm1023, %v497, %v857
        %v1081 = vsel %vm1023, %v498, %v859
        %v1083 = vsel %vm1023, %v499, %v861
        %v1085 = vsel %vm1023, %v500, %v863
        %v1087 = vsel %vm1023, %v501, %v865
        %v1089 = vsel %vm1023, %v502, %v867
        %v1091 = vsel %vm1023, %v503, %v869
        %v1093 = vsel %vm1023, %v504, %v871
        %v1095 = vsel %vm1023, %v505, %v873
        %vm1096 = vcmask 64512
        %v1098 = vsel %vm1096, %v1025, %v952
        %v1100 = vsel %vm1096, %v1027, %v954
        %v1102 = vsel %vm1096, %v1029, %v956
        %v1104 = vsel %vm1096, %v1031, %v958
        %v1106 = vsel %vm1096, %v1033, %v960
        %v1108 = vsel %vm1096, %v1035, %v962
        %v1110 = vsel %vm1096, %v1037, %v964
        %v1112 = vsel %vm1096, %v1039, %v966
        %v1114 = vsel %vm1096, %v1041, %v968
        %v1116 = vsel %vm1096, %v1043, %v970
        %v1118 = vsel %vm1096, %v1045, %v972
        %v1120 = vsel %vm1096, %v1047, %v974
        %v1122 = vsel %vm1096, %v1049, %v976
        %v1124 = vsel %vm1096, %v1051, %v978
        %v1126 = vsel %vm1096, %v1053, %v980
        %v1128 = vsel %vm1096, %v1055, %v982
        %v1130 = vsel %vm1096, %v1057, %v984
        %v1132 = vsel %vm1096, %v1059, %v986
        %v1134 = vsel %vm1096, %v1061, %v988
        %v1136 = vsel %vm1096, %v1063, %v990
        %v1138 = vsel %vm1096, %v1065, %v992
        %v1140 = vsel %vm1096, %v1067, %v994
        %v1142 = vsel %vm1096, %v1069, %v996
        %v1144 = vsel %vm1096, %v1071, %v998
        %v1146 = vsel %vm1096, %v1073, %v1000
        %v1148 = vsel %vm1096, %v1075, %v1002
        %v1150 = vsel %vm1096, %v1077, %v1004
        %v1152 = vsel %vm1096, %v1079, %v1006
        %v1154 = vsel %vm1096, %v1081, %v1008
        %v1156 = vsel %vm1096, %v1083, %v1010
        %v1158 = vsel %vm1096, %v1085, %v1012
        %v1160 = vsel %vm1096, %v1087, %v1014
        %v1162 = vsel %vm1096, %v1089, %v1016
        %v1164 = vsel %vm1096, %v1091, %v1018
        %v1166 = vsel %vm1096, %v1093, %v1020
        %v1168 = vsel %vm1096, %v1095, %v1022
        %1201 = vrot.lane.b32.xlu0 %v1102, 12
        %v1202 = vpop.permute.xlu0 %1201
        %1203 = vrot.lane.b32.xlu0 %v1104, 12
        %v1204 = vpop.permute.xlu0 %1203
        %1205 = vrot.lane.b32.xlu0 %v1106, 12
        %v1206 = vpop.permute.xlu0 %1205
        %1207 = vrot.lane.b32.xlu0 %v1108, 12
        %v1208 = vpop.permute.xlu0 %1207
        %1209 = vrot.lane.b32.xlu0 %v1110, 12
        %v1210 = vpop.permute.xlu0 %1209
        %1211 = vrot.lane.b32.xlu0 %v1112, 12
        %v1212 = vpop.permute.xlu0 %1211
        %1213 = vrot.lane.b32.xlu0 %v1114, 12
        %v1214 = vpop.permute.xlu0 %1213
        %1215 = vrot.lane.b32.xlu0 %v1116, 12
        %v1216 = vpop.permute.xlu0 %1215
        %1217 = vrot.lane.b32.xlu0 %v1118, 12
        %v1218 = vpop.permute.xlu0 %1217
        %1219 = vrot.lane.b32.xlu0 %v1120, 12
        %v1220 = vpop.permute.xlu0 %1219
        %1221 = vrot.lane.b32.xlu0 %v1122, 12
        %v1222 = vpop.permute.xlu0 %1221
        %1223 = vrot.lane.b32.xlu0 %v1124, 12
        %v1224 = vpop.permute.xlu0 %1223
        %1225 = vrot.lane.b32.xlu0 %v1126, 12
        %v1226 = vpop.permute.xlu0 %1225
        %1227 = vrot.lane.b32.xlu0 %v1128, 12
        %v1228 = vpop.permute.xlu0 %1227
        %1229 = vrot.lane.b32.xlu0 %v1130, 12
        %v1230 = vpop.permute.xlu0 %1229
        %1231 = vrot.lane.b32.xlu0 %v1132, 12
        %v1232 = vpop.permute.xlu0 %1231
        %1233 = vrot.lane.b32.xlu0 %v1134, 12
        %v1234 = vpop.permute.xlu0 %1233
        %1235 = vrot.lane.b32.xlu0 %v1136, 12
        %v1236 = vpop.permute.xlu0 %1235
        %1237 = vrot.lane.b32.xlu0 %v1138, 12
        %v1238 = vpop.permute.xlu0 %1237
        %1239 = vrot.lane.b32.xlu0 %v1140, 12
        %v1240 = vpop.permute.xlu0 %1239
        %1241 = vrot.lane.b32.xlu0 %v1142, 12
        %v1242 = vpop.permute.xlu0 %1241
        %1243 = vrot.lane.b32.xlu0 %v1144, 12
        %v1244 = vpop.permute.xlu0 %1243
        %1245 = vrot.lane.b32.xlu0 %v1146, 12
        %v1246 = vpop.permute.xlu0 %1245
        %1247 = vrot.lane.b32.xlu0 %v1148, 12
        %v1248 = vpop.permute.xlu0 %1247
        %1249 = vrot.lane.b32.xlu0 %v1150, 12
        %v1250 = vpop.permute.xlu0 %1249
        %1251 = vrot.lane.b32.xlu0 %v1152, 12
        %v1252 = vpop.permute.xlu0 %1251
        %1253 = vrot.lane.b32.xlu0 %v1154, 12
        %v1254 = vpop.permute.xlu0 %1253
        %1255 = vrot.lane.b32.xlu0 %v1156, 12
        %v1256 = vpop.permute.xlu0 %1255
        %1257 = vrot.lane.b32.xlu0 %v1158, 12
        %v1258 = vpop.permute.xlu0 %1257
        %1259 = vrot.lane.b32.xlu0 %v1160, 12
        %v1260 = vpop.permute.xlu0 %1259
        %1261 = vrot.lane.b32.xlu0 %v1162, 12
        %v1262 = vpop.permute.xlu0 %1261
        %1263 = vrot.lane.b32.xlu0 %v1164, 12
        %v1264 = vpop.permute.xlu0 %1263
        %1267 = vrot.lane.b32.xlu0 %v1106, 24
        %v1268 = vpop.permute.xlu0 %1267
        %1269 = vrot.lane.b32.xlu0 %v1108, 24
        %v1270 = vpop.permute.xlu0 %1269
        %1271 = vrot.lane.b32.xlu0 %v1110, 24
        %v1272 = vpop.permute.xlu0 %1271
        %1273 = vrot.lane.b32.xlu0 %v1112, 24
        %v1274 = vpop.permute.xlu0 %1273
        %1275 = vrot.lane.b32.xlu0 %v1114, 24
        %v1276 = vpop.permute.xlu0 %1275
        %1277 = vrot.lane.b32.xlu0 %v1116, 24
        %v1278 = vpop.permute.xlu0 %1277
        %1279 = vrot.lane.b32.xlu0 %v1118, 24
        %v1280 = vpop.permute.xlu0 %1279
        %1281 = vrot.lane.b32.xlu0 %v1120, 24
        %v1282 = vpop.permute.xlu0 %1281
        %1283 = vrot.lane.b32.xlu0 %v1122, 24
        %v1284 = vpop.permute.xlu0 %1283
        %1285 = vrot.lane.b32.xlu0 %v1124, 24
        %v1286 = vpop.permute.xlu0 %1285
        %1287 = vrot.lane.b32.xlu0 %v1126, 24
        %v1288 = vpop.permute.xlu0 %1287
        %1289 = vrot.lane.b32.xlu0 %v1128, 24
        %v1290 = vpop.permute.xlu0 %1289
        %1291 = vrot.lane.b32.xlu0 %v1130, 24
        %v1292 = vpop.permute.xlu0 %1291
        %1293 = vrot.lane.b32.xlu0 %v1132, 24
        %v1294 = vpop.permute.xlu0 %1293
        %1295 = vrot.lane.b32.xlu0 %v1134, 24
        %v1296 = vpop.permute.xlu0 %1295
        %1297 = vrot.lane.b32.xlu0 %v1136, 24
        %v1298 = vpop.permute.xlu0 %1297
        %1299 = vrot.lane.b32.xlu0 %v1138, 24
        %v1300 = vpop.permute.xlu0 %1299
        %1301 = vrot.lane.b32.xlu0 %v1140, 24
        %v1302 = vpop.permute.xlu0 %1301
        %1303 = vrot.lane.b32.xlu0 %v1142, 24
        %v1304 = vpop.permute.xlu0 %1303
        %1305 = vrot.lane.b32.xlu0 %v1144, 24
        %v1306 = vpop.permute.xlu0 %1305
        %1307 = vrot.lane.b32.xlu0 %v1146, 24
        %v1308 = vpop.permute.xlu0 %1307
        %1309 = vrot.lane.b32.xlu0 %v1148, 24
        %v1310 = vpop.permute.xlu0 %1309
        %1311 = vrot.lane.b32.xlu0 %v1150, 24
        %v1312 = vpop.permute.xlu0 %1311
        %1313 = vrot.lane.b32.xlu0 %v1152, 24
        %v1314 = vpop.permute.xlu0 %1313
        %1315 = vrot.lane.b32.xlu0 %v1154, 24
        %v1316 = vpop.permute.xlu0 %1315
        %1317 = vrot.lane.b32.xlu0 %v1156, 24
        %v1318 = vpop.permute.xlu0 %1317
        %1319 = vrot.lane.b32.xlu0 %v1158, 24
        %v1320 = vpop.permute.xlu0 %1319
        %1321 = vrot.lane.b32.xlu0 %v1160, 24
        %v1322 = vpop.permute.xlu0 %1321
        %1323 = vrot.lane.b32.xlu0 %v1162, 24
        %v1324 = vpop.permute.xlu0 %1323
        %1325 = vrot.lane.b32.xlu0 %v1164, 24
        %v1326 = vpop.permute.xlu0 %1325
        %1327 = vrot.lane.b32.xlu0 %v1166, 24
        %v1328 = vpop.permute.xlu0 %1327
        %1329 = vrot.lane.b32.xlu0 %v1168, 24
        %v1330 = vpop.permute.xlu0 %1329
        %vm1331 = vcmask 97280
        %v1333 = vsel %vm1331, %v1098, %v1202
        %v1335 = vsel %vm1331, %v1100, %v1204
        %v1337 = vsel %vm1331, %v1102, %v1206
        %v1339 = vsel %vm1331, %v1104, %v1208
        %v1341 = vsel %vm1331, %v1106, %v1210
        %v1343 = vsel %vm1331, %v1108, %v1212
        %v1345 = vsel %vm1331, %v1110, %v1214
        %v1347 = vsel %vm1331, %v1112, %v1216
        %v1349 = vsel %vm1331, %v1114, %v1218
        %v1351 = vsel %vm1331, %v1116, %v1220
        %v1353 = vsel %vm1331, %v1118, %v1222
        %v1355 = vsel %vm1331, %v1120, %v1224
        %v1357 = vsel %vm1331, %v1122, %v1226
        %v1359 = vsel %vm1331, %v1124, %v1228
        %v1361 = vsel %vm1331, %v1126, %v1230
        %v1363 = vsel %vm1331, %v1128, %v1232
        %v1365 = vsel %vm1331, %v1130, %v1234
        %v1367 = vsel %vm1331, %v1132, %v1236
        %v1369 = vsel %vm1331, %v1134, %v1238
        %v1371 = vsel %vm1331, %v1136, %v1240
        %v1373 = vsel %vm1331, %v1138, %v1242
        %v1375 = vsel %vm1331, %v1140, %v1244
        %v1377 = vsel %vm1331, %v1142, %v1246
        %v1379 = vsel %vm1331, %v1144, %v1248
        %v1381 = vsel %vm1331, %v1146, %v1250
        %v1383 = vsel %vm1331, %v1148, %v1252
        %v1385 = vsel %vm1331, %v1150, %v1254
        %v1387 = vsel %vm1331, %v1152, %v1256
        %v1389 = vsel %vm1331, %v1154, %v1258
        %v1391 = vsel %vm1331, %v1156, %v1260
        %v1393 = vsel %vm1331, %v1158, %v1262
        %v1395 = vsel %vm1331, %v1160, %v1264
        %vm1396 = vcmask 195584
        %v1398 = vsel %vm1396, %v1333, %v1268
        %v1400 = vsel %vm1396, %v1335, %v1270
        %v1402 = vsel %vm1396, %v1337, %v1272
        %v1404 = vsel %vm1396, %v1339, %v1274
        %v1406 = vsel %vm1396, %v1341, %v1276
        %v1408 = vsel %vm1396, %v1343, %v1278
        %v1410 = vsel %vm1396, %v1345, %v1280
        %v1412 = vsel %vm1396, %v1347, %v1282
        %v1414 = vsel %vm1396, %v1349, %v1284
        %v1416 = vsel %vm1396, %v1351, %v1286
        %v1418 = vsel %vm1396, %v1353, %v1288
        %v1420 = vsel %vm1396, %v1355, %v1290
        %v1422 = vsel %vm1396, %v1357, %v1292
        %v1424 = vsel %vm1396, %v1359, %v1294
        %v1426 = vsel %vm1396, %v1361, %v1296
        %v1428 = vsel %vm1396, %v1363, %v1298
        %v1430 = vsel %vm1396, %v1365, %v1300
        %v1432 = vsel %vm1396, %v1367, %v1302
        %v1434 = vsel %vm1396, %v1369, %v1304
        %v1436 = vsel %vm1396, %v1371, %v1306
        %v1438 = vsel %vm1396, %v1373, %v1308
        %v1440 = vsel %vm1396, %v1375, %v1310
        %v1442 = vsel %vm1396, %v1377, %v1312
        %v1444 = vsel %vm1396, %v1379, %v1314
        %v1446 = vsel %vm1396, %v1381, %v1316
        %v1448 = vsel %vm1396, %v1383, %v1318
        %v1450 = vsel %vm1396, %v1385, %v1320
        %v1452 = vsel %vm1396, %v1387, %v1322
        %v1454 = vsel %vm1396, %v1389, %v1324
        %v1456 = vsel %vm1396, %v1391, %v1326
        %v1458 = vsel %vm1396, %v1393, %v1328
        %v1460 = vsel %vm1396, %v1395, %v1330
        %v1461 = vld [vmem:[%s1] sm:$0xf]
        %v1462 = vld [vmem:[%s1 + $0x4] sm:$0xf]
        %v1463 = vld [vmem:[%s1 + $0x8] sm:$0xf]
        %v1464 = vld [vmem:[%s1 + $0xc] sm:$0xf]
        %v1465 = vld [vmem:[%s1 + $0x10] sm:$0x3]
        %v1466 = vld [vmem:[%s2] sm:$0x1]
        %v1468 = vperm.slane %v1466, 0
        %v1475 = vunpack.c.l.b16 %v1461
        %v1476 = vunpack.c.l.b16 %v1462
        %v1477 = vunpack.c.l.b16 %v1463
        %v1478 = vunpack.c.l.b16 %v1464
        %v1479 = vunpack.c.l.b16 %v1465
        %v1480 = vpack.c.b16 %v1476, %v1475
        %v1481 = vpack.c.b16 %v1478, %v1477
        %v1482 = vpack.c.b16 %v1479, %v1479
        %vm1485 = vcmask 293888
        %v1486 = vsel %vm1485, %v1398, 0
        %v1488 = vsel %vm1485, %v1400, 0
        %v1490 = vsel %vm1485, %v1402, 0
        %v1492 = vsel %vm1485, %v1404, 0
        %v1494 = vsel %vm1485, %v1406, 0
        %v1496 = vsel %vm1485, %v1408, 0
        %v1498 = vsel %vm1485, %v1410, 0
        %v1500 = vsel %vm1485, %v1412, 0
        %v1502 = vsel %vm1485, %v1414, 0
        %v1504 = vsel %vm1485, %v1416, 0
        %v1506 = vsel %vm1485, %v1418, 0
        %v1508 = vsel %vm1485, %v1420, 0
        %v1510 = vsel %vm1485, %v1422, 0
        %v1512 = vsel %vm1485, %v1424, 0
        %v1514 = vsel %vm1485, %v1426, 0
        %v1516 = vsel %vm1485, %v1428, 0
        %v1518 = vsel %vm1485, %v1430, 0
        %v1520 = vsel %vm1485, %v1432, 0
        %v1522 = vsel %vm1485, %v1434, 0
        %v1524 = vsel %vm1485, %v1436, 0
        %v1526 = vsel %vm1485, %v1438, 0
        %v1528 = vsel %vm1485, %v1440, 0
        %v1530 = vsel %vm1485, %v1442, 0
        %v1532 = vsel %vm1485, %v1444, 0
        %v1534 = vsel %vm1485, %v1446, 0
        %v1536 = vsel %vm1485, %v1448, 0
        %v1538 = vsel %vm1485, %v1450, 0
        %v1540 = vsel %vm1485, %v1452, 0
        %v1542 = vsel %vm1485, %v1454, 0
        %v1544 = vsel %vm1485, %v1456, 0
        %v1546 = vsel %vm1485, %v1458, 0
        %v1548 = vsel %vm1485, %v1460, 0
        %vm1550 = vcmask 1041408
        %v1552 = vsel %vm1550, %v1482, 0
        %1554 = vmatpush.bf16.msra.mxu0 0
        %1555 = vmatpush.bf16.msra.mxu0 0
        %1556 = vmatpush.bf16.msra.mxu0 0
        %1557 = vmatpush.bf16.msra.mxu0 0
        %1558 = vmatpush.bf16.msra.mxu0 0
        %1559 = vmatpush.bf16.msra.mxu0 %v1552
        %1560 = vmatpush.bf16.msra.mxu0 %v1481
        %1561 = vmatpush.bf16.msra.mxu0 %v1480
        %1562 = vmatmul.bf16.gmra.mxu0 %v1486
        %v1563 = vpop.f32.mrf.mxu0
        %v1564 = vadd.f32 %v1468, %v1563
        %v1565 = vpop.f32.mrf.mxu0
        %v1566 = vadd.f32 %v1468, %v1565
        %1567 = vmatmul.bf16.gmra.mxu0 %v1488
        %v1568 = vpop.f32.mrf.mxu0
        %v1569 = vadd.f32 %v1468, %v1568
        %v1570 = vpop.f32.mrf.mxu0
        %v1571 = vadd.f32 %v1468, %v1570
        %1572 = vmatmul.bf16.gmra.mxu0 %v1490
        %v1573 = vpop.f32.mrf.mxu0
        %v1574 = vadd.f32 %v1468, %v1573
        %v1575 = vpop.f32.mrf.mxu0
        %v1576 = vadd.f32 %v1468, %v1575
        %1577 = vmatmul.bf16.gmra.mxu0 %v1492
        %v1578 = vpop.f32.mrf.mxu0
        %v1579 = vadd.f32 %v1468, %v1578
        %v1580 = vpop.f32.mrf.mxu0
        %v1581 = vadd.f32 %v1468, %v1580
        %1582 = vmatmul.bf16.gmra.mxu0 %v1494
        %v1583 = vpop.f32.mrf.mxu0
        %v1584 = vadd.f32 %v1468, %v1583
        %v1585 = vpop.f32.mrf.mxu0
        %v1586 = vadd.f32 %v1468, %v1585
        %1587 = vmatmul.bf16.gmra.mxu0 %v1496
        %v1588 = vpop.f32.mrf.mxu0
        %v1589 = vadd.f32 %v1468, %v1588
        %v1590 = vpop.f32.mrf.mxu0
        %v1591 = vadd.f32 %v1468, %v1590
        %1592 = vmatmul.bf16.gmra.mxu0 %v1498
        %v1593 = vpop.f32.mrf.mxu0
        %v1594 = vadd.f32 %v1468, %v1593
        %v1595 = vpop.f32.mrf.mxu0
        %v1596 = vadd.f32 %v1468, %v1595
        %1597 = vmatmul.bf16.gmra.mxu0 %v1500
        %v1598 = vpop.f32.mrf.mxu0
        %v1599 = vadd.f32 %v1468, %v1598
        %v1600 = vpop.f32.mrf.mxu0
        %v1601 = vadd.f32 %v1468, %v1600
        %1602 = vmatmul.bf16.gmra.mxu0 %v1502
        %v1603 = vpop.f32.mrf.mxu0
        %v1604 = vadd.f32 %v1468, %v1603
        %v1605 = vpop.f32.mrf.mxu0
        %v1606 = vadd.f32 %v1468, %v1605
        %1607 = vmatmul.bf16.gmra.mxu0 %v1504
        %v1608 = vpop.f32.mrf.mxu0
        %v1609 = vadd.f32 %v1468, %v1608
        %v1610 = vpop.f32.mrf.mxu0
        %v1611 = vadd.f32 %v1468, %v1610
        %1612 = vmatmul.bf16.gmra.mxu0 %v1506
        %v1613 = vpop.f32.mrf.mxu0
        %v1614 = vadd.f32 %v1468, %v1613
        %v1615 = vpop.f32.mrf.mxu0
        %v1616 = vadd.f32 %v1468, %v1615
        %1617 = vmatmul.bf16.gmra.mxu0 %v1508
        %v1618 = vpop.f32.mrf.mxu0
        %v1619 = vadd.f32 %v1468, %v1618
        %v1620 = vpop.f32.mrf.mxu0
        %v1621 = vadd.f32 %v1468, %v1620
        %1622 = vmatmul.bf16.gmra.mxu0 %v1510
        %v1623 = vpop.f32.mrf.mxu0
        %v1624 = vadd.f32 %v1468, %v1623
        %v1625 = vpop.f32.mrf.mxu0
        %v1626 = vadd.f32 %v1468, %v1625
        %1627 = vmatmul.bf16.gmra.mxu0 %v1512
        %v1628 = vpop.f32.mrf.mxu0
        %v1629 = vadd.f32 %v1468, %v1628
        %v1630 = vpop.f32.mrf.mxu0
        %v1631 = vadd.f32 %v1468, %v1630
        %1632 = vmatmul.bf16.gmra.mxu0 %v1514
        %v1633 = vpop.f32.mrf.mxu0
        %v1634 = vadd.f32 %v1468, %v1633
        %v1635 = vpop.f32.mrf.mxu0
        %v1636 = vadd.f32 %v1468, %v1635
        %1637 = vmatmul.bf16.gmra.mxu0 %v1516
        %v1638 = vpop.f32.mrf.mxu0
        %v1639 = vadd.f32 %v1468, %v1638
        %v1640 = vpop.f32.mrf.mxu0
        %v1641 = vadd.f32 %v1468, %v1640
        %1642 = vmatmul.bf16.gmra.mxu0 %v1518
        %v1643 = vpop.f32.mrf.mxu0
        %v1644 = vadd.f32 %v1468, %v1643
        %v1645 = vpop.f32.mrf.mxu0
        %v1646 = vadd.f32 %v1468, %v1645
        %1647 = vmatmul.bf16.gmra.mxu0 %v1520
        %v1648 = vpop.f32.mrf.mxu0
        %v1649 = vadd.f32 %v1468, %v1648
        %v1650 = vpop.f32.mrf.mxu0
        %v1651 = vadd.f32 %v1468, %v1650
        %1652 = vmatmul.bf16.gmra.mxu0 %v1522
        %v1653 = vpop.f32.mrf.mxu0
        %v1654 = vadd.f32 %v1468, %v1653
        %v1655 = vpop.f32.mrf.mxu0
        %v1656 = vadd.f32 %v1468, %v1655
        %1657 = vmatmul.bf16.gmra.mxu0 %v1524
        %v1658 = vpop.f32.mrf.mxu0
        %v1659 = vadd.f32 %v1468, %v1658
        %v1660 = vpop.f32.mrf.mxu0
        %v1661 = vadd.f32 %v1468, %v1660
        %1662 = vmatmul.bf16.gmra.mxu0 %v1526
        %v1663 = vpop.f32.mrf.mxu0
        %v1664 = vadd.f32 %v1468, %v1663
        %v1665 = vpop.f32.mrf.mxu0
        %v1666 = vadd.f32 %v1468, %v1665
        %1667 = vmatmul.bf16.gmra.mxu0 %v1528
        %v1668 = vpop.f32.mrf.mxu0
        %v1669 = vadd.f32 %v1468, %v1668
        %v1670 = vpop.f32.mrf.mxu0
        %v1671 = vadd.f32 %v1468, %v1670
        %1672 = vmatmul.bf16.gmra.mxu0 %v1530
        %v1673 = vpop.f32.mrf.mxu0
        %v1674 = vadd.f32 %v1468, %v1673
        %v1675 = vpop.f32.mrf.mxu0
        %v1676 = vadd.f32 %v1468, %v1675
        %1677 = vmatmul.bf16.gmra.mxu0 %v1532
        %v1678 = vpop.f32.mrf.mxu0
        %v1679 = vadd.f32 %v1468, %v1678
        %v1680 = vpop.f32.mrf.mxu0
        %v1681 = vadd.f32 %v1468, %v1680
        %1682 = vmatmul.bf16.gmra.mxu0 %v1534
        %v1683 = vpop.f32.mrf.mxu0
        %v1684 = vadd.f32 %v1468, %v1683
        %v1685 = vpop.f32.mrf.mxu0
        %v1686 = vadd.f32 %v1468, %v1685
        %1687 = vmatmul.bf16.gmra.mxu0 %v1536
        %v1688 = vpop.f32.mrf.mxu0
        %v1689 = vadd.f32 %v1468, %v1688
        %v1690 = vpop.f32.mrf.mxu0
        %v1691 = vadd.f32 %v1468, %v1690
        %1692 = vmatmul.bf16.gmra.mxu0 %v1538
        %v1693 = vpop.f32.mrf.mxu0
        %v1694 = vadd.f32 %v1468, %v1693
        %v1695 = vpop.f32.mrf.mxu0
        %v1696 = vadd.f32 %v1468, %v1695
        %1697 = vmatmul.bf16.gmra.mxu0 %v1540
        %v1698 = vpop.f32.mrf.mxu0
        %v1699 = vadd.f32 %v1468, %v1698
        %v1700 = vpop.f32.mrf.mxu0
        %v1701 = vadd.f32 %v1468, %v1700
        %1702 = vmatmul.bf16.gmra.mxu0 %v1542
        %v1703 = vpop.f32.mrf.mxu0
        %v1704 = vadd.f32 %v1468, %v1703
        %v1705 = vpop.f32.mrf.mxu0
        %v1706 = vadd.f32 %v1468, %v1705
        %1707 = vmatmul.bf16.gmra.mxu0 %v1544
        %v1708 = vpop.f32.mrf.mxu0
        %v1709 = vadd.f32 %v1468, %v1708
        %v1710 = vpop.f32.mrf.mxu0
        %v1711 = vadd.f32 %v1468, %v1710
        %1712 = vmatmul.bf16.gmra.mxu0 %v1546
        %v1713 = vpop.f32.mrf.mxu0
        %v1714 = vadd.f32 %v1468, %v1713
        %v1715 = vpop.f32.mrf.mxu0
        %v1716 = vadd.f32 %v1468, %v1715
        %1717 = vmatmul.bf16.gmra.mxu0 %v1548
        %v1718 = vpop.f32.mrf.mxu0
        %v1719 = vadd.f32 %v1468, %v1718
        %v1720 = vpop.f32.mrf.mxu0
        %v1721 = vadd.f32 %v1468, %v1720
        %1722 = vdwg.mxu0
        %v1723 = vmax.f32 %v1564, 0.0
        %v1724 = vmax.f32 %v1566, 0.0
        %v1725 = vmax.f32 %v1569, 0.0
        %v1726 = vmax.f32 %v1571, 0.0
        %v1727 = vmax.f32 %v1574, 0.0
        %v1728 = vmax.f32 %v1576, 0.0
        %v1729 = vmax.f32 %v1579, 0.0
        %v1730 = vmax.f32 %v1581, 0.0
        %v1731 = vmax.f32 %v1584, 0.0
        %v1732 = vmax.f32 %v1586, 0.0
        %v1733 = vmax.f32 %v1589, 0.0
        %v1734 = vmax.f32 %v1591, 0.0
        %v1735 = vmax.f32 %v1594, 0.0
        %v1736 = vmax.f32 %v1596, 0.0
        %v1737 = vmax.f32 %v1599, 0.0
        %v1738 = vmax.f32 %v1601, 0.0
        %v1739 = vmax.f32 %v1604, 0.0
        %v1740 = vmax.f32 %v1606, 0.0
        %v1741 = vmax.f32 %v1609, 0.0
        %v1742 = vmax.f32 %v1611, 0.0
        %v1743 = vmax.f32 %v1614, 0.0
        %v1744 = vmax.f32 %v1616, 0.0
        %v1745 = vmax.f32 %v1619, 0.0
        %v1746 = vmax.f32 %v1621, 0.0
        %v1747 = vmax.f32 %v1624, 0.0
        %v1748 = vmax.f32 %v1626, 0.0
        %v1749 = vmax.f32 %v1629, 0.0
        %v1750 = vmax.f32 %v1631, 0.0
        %v1751 = vmax.f32 %v1634, 0.0
        %v1752 = vmax.f32 %v1636, 0.0
        %v1753 = vmax.f32 %v1639, 0.0
        %v1754 = vmax.f32 %v1641, 0.0
        %v1755 = vmax.f32 %v1644, 0.0
        %v1756 = vmax.f32 %v1646, 0.0
        %v1757 = vmax.f32 %v1649, 0.0
        %v1758 = vmax.f32 %v1651, 0.0
        %v1759 = vmax.f32 %v1654, 0.0
        %v1760 = vmax.f32 %v1656, 0.0
        %v1761 = vmax.f32 %v1659, 0.0
        %v1762 = vmax.f32 %v1661, 0.0
        %v1763 = vmax.f32 %v1664, 0.0
        %v1764 = vmax.f32 %v1666, 0.0
        %v1765 = vmax.f32 %v1669, 0.0
        %v1766 = vmax.f32 %v1671, 0.0
        %v1767 = vmax.f32 %v1674, 0.0
        %v1768 = vmax.f32 %v1676, 0.0
        %v1769 = vmax.f32 %v1679, 0.0
        %v1770 = vmax.f32 %v1681, 0.0
        %v1771 = vmax.f32 %v1684, 0.0
        %v1772 = vmax.f32 %v1686, 0.0
        %v1773 = vmax.f32 %v1689, 0.0
        %v1774 = vmax.f32 %v1691, 0.0
        %v1775 = vmax.f32 %v1694, 0.0
        %v1776 = vmax.f32 %v1696, 0.0
        %v1777 = vmax.f32 %v1699, 0.0
        %v1778 = vmax.f32 %v1701, 0.0
        %v1779 = vmax.f32 %v1704, 0.0
        %v1780 = vmax.f32 %v1706, 0.0
        %v1781 = vmax.f32 %v1709, 0.0
        %v1782 = vmax.f32 %v1711, 0.0
        %v1783 = vmax.f32 %v1714, 0.0
        %v1784 = vmax.f32 %v1716, 0.0
        %v1785 = vmax.f32 %v1719, 0.0
        %v1786 = vmax.f32 %v1721, 0.0
        %v1787 = vpack.c.bf16 %v1724, %v1723
        %v1788 = vpack.c.bf16 %v1726, %v1725
        %v1789 = vpack.c.bf16 %v1728, %v1727
        %v1790 = vpack.c.bf16 %v1730, %v1729
        %v1791 = vpack.c.bf16 %v1732, %v1731
        %v1792 = vpack.c.bf16 %v1734, %v1733
        %v1793 = vpack.c.bf16 %v1736, %v1735
        %v1794 = vpack.c.bf16 %v1738, %v1737
        %v1795 = vpack.c.bf16 %v1740, %v1739
        %v1796 = vpack.c.bf16 %v1742, %v1741
        %v1797 = vpack.c.bf16 %v1744, %v1743
        %v1798 = vpack.c.bf16 %v1746, %v1745
        %v1799 = vpack.c.bf16 %v1748, %v1747
        %v1800 = vpack.c.bf16 %v1750, %v1749
        %v1801 = vpack.c.bf16 %v1752, %v1751
        %v1802 = vpack.c.bf16 %v1754, %v1753
        %v1803 = vpack.c.bf16 %v1756, %v1755
        %v1804 = vpack.c.bf16 %v1758, %v1757
        %v1805 = vpack.c.bf16 %v1760, %v1759
        %v1806 = vpack.c.bf16 %v1762, %v1761
        %v1807 = vpack.c.bf16 %v1764, %v1763
        %v1808 = vpack.c.bf16 %v1766, %v1765
        %v1809 = vpack.c.bf16 %v1768, %v1767
        %v1810 = vpack.c.bf16 %v1770, %v1769
        %v1811 = vpack.c.bf16 %v1772, %v1771
        %v1812 = vpack.c.bf16 %v1774, %v1773
        %v1813 = vpack.c.bf16 %v1776, %v1775
        %v1814 = vpack.c.bf16 %v1778, %v1777
        %v1815 = vpack.c.bf16 %v1780, %v1779
        %v1816 = vpack.c.bf16 %v1782, %v1781
        %v1817 = vpack.c.bf16 %v1784, %v1783
        %v1818 = vpack.c.bf16 %v1786, %v1785
        %v1819 = vld [vmem:[%s3] sm:$0xf]
        %v1820 = vld [vmem:[%s3 + $0x4] sm:$0xf]
        %v1821 = vld [vmem:[%s3 + $0x8] sm:$0xf]
        %v1822 = vld [vmem:[%s3 + $0xc] sm:$0xf]
        %v1823 = vld [vmem:[%s3 + $0x10] sm:$0xf]
        %v1824 = vld [vmem:[%s3 + $0x14] sm:$0xf]
        %v1825 = vld [vmem:[%s3 + $0x18] sm:$0xf]
        %v1826 = vld [vmem:[%s3 + $0x1c] sm:$0xf]
        %v1827 = vld [vmem:[%s3 + $0x20] sm:$0xf]
        %v1828 = vld [vmem:[%s3 + $0x24] sm:$0xf]
        %v1829 = vld [vmem:[%s3 + $0x28] sm:$0xf]
        %v1830 = vld [vmem:[%s3 + $0x2c] sm:$0xf]
        %v1831 = vld [vmem:[%s3 + $0x30] sm:$0xf]
        %v1832 = vld [vmem:[%s3 + $0x34] sm:$0xf]
        %v1833 = vld [vmem:[%s3 + $0x38] sm:$0xf]
        %v1834 = vld [vmem:[%s3 + $0x3c] sm:$0xf]
        %v1835 = vld [vmem:[%s4] sm:$0x1]
        %v1837 = vperm.slane %v1835, 0
        %v1855 = vunpack.c.l.b16 %v1819
        %v1856 = vunpack.c.l.b16 %v1820
        %v1857 = vunpack.c.l.b16 %v1821
        %v1858 = vunpack.c.l.b16 %v1822
        %v1859 = vunpack.c.l.b16 %v1823
        %v1860 = vunpack.c.l.b16 %v1824
        %v1861 = vunpack.c.l.b16 %v1825
        %v1862 = vunpack.c.l.b16 %v1826
        %v1863 = vunpack.c.l.b16 %v1827
        %v1864 = vunpack.c.l.b16 %v1828
        %v1865 = vunpack.c.l.b16 %v1829
        %v1866 = vunpack.c.l.b16 %v1830
        %v1867 = vunpack.c.l.b16 %v1831
        %v1868 = vunpack.c.l.b16 %v1832
        %v1869 = vunpack.c.l.b16 %v1833
        %v1870 = vunpack.c.l.b16 %v1834
        %v1871 = vpack.c.b16 %v1856, %v1855
        %v1872 = vpack.c.b16 %v1858, %v1857
        %v1873 = vpack.c.b16 %v1860, %v1859
        %v1874 = vpack.c.b16 %v1862, %v1861
        %v1875 = vpack.c.b16 %v1864, %v1863
        %v1876 = vpack.c.b16 %v1866, %v1865
        %v1877 = vpack.c.b16 %v1868, %v1867
        %v1878 = vpack.c.b16 %v1870, %v1869
        %1887 = vmatpush.bf16.msra.mxu0 %v1878
        %1888 = vmatpush.bf16.msra.mxu0 %v1877
        %1889 = vmatpush.bf16.msra.mxu0 %v1876
        %1890 = vmatpush.bf16.msra.mxu0 %v1875
        %1891 = vmatpush.bf16.msra.mxu0 %v1874
        %1892 = vmatpush.bf16.msra.mxu0 %v1873
        %1893 = vmatpush.bf16.msra.mxu0 %v1872
        %1894 = vmatpush.bf16.msra.mxu0 %v1871
        %1895 = vmatmul.bf16.gmra.mxu0 %v1787
        %v1896 = vpop.f32.mrf.mxu0
        %v1897 = vadd.f32 %v1837, %v1896
        %v1898 = vpop.f32.mrf.mxu0
        %v1899 = vadd.f32 %v1837, %v1898
        %1900 = vmatmul.bf16.gmra.mxu0 %v1788
        %v1901 = vpop.f32.mrf.mxu0
        %v1902 = vadd.f32 %v1837, %v1901
        %v1903 = vpop.f32.mrf.mxu0
        %v1904 = vadd.f32 %v1837, %v1903
        %1905 = vmatmul.bf16.gmra.mxu0 %v1789
        %v1906 = vpop.f32.mrf.mxu0
        %v1907 = vadd.f32 %v1837, %v1906
        %v1908 = vpop.f32.mrf.mxu0
        %v1909 = vadd.f32 %v1837, %v1908
        %1910 = vmatmul.bf16.gmra.mxu0 %v1790
        %v1911 = vpop.f32.mrf.mxu0
        %v1912 = vadd.f32 %v1837, %v1911
        %v1913 = vpop.f32.mrf.mxu0
        %v1914 = vadd.f32 %v1837, %v1913
        %1915 = vmatmul.bf16.gmra.mxu0 %v1791
        %v1916 = vpop.f32.mrf.mxu0
        %v1917 = vadd.f32 %v1837, %v1916
        %v1918 = vpop.f32.mrf.mxu0
        %v1919 = vadd.f32 %v1837, %v1918
        %1920 = vmatmul.bf16.gmra.mxu0 %v1792
        %v1921 = vpop.f32.mrf.mxu0
        %v1922 = vadd.f32 %v1837, %v1921
        %v1923 = vpop.f32.mrf.mxu0
        %v1924 = vadd.f32 %v1837, %v1923
        %1925 = vmatmul.bf16.gmra.mxu0 %v1793
        %v1926 = vpop.f32.mrf.mxu0
        %v1927 = vadd.f32 %v1837, %v1926
        %v1928 = vpop.f32.mrf.mxu0
        %v1929 = vadd.f32 %v1837, %v1928
        %1930 = vmatmul.bf16.gmra.mxu0 %v1794
        %v1931 = vpop.f32.mrf.mxu0
        %v1932 = vadd.f32 %v1837, %v1931
        %v1933 = vpop.f32.mrf.mxu0
        %v1934 = vadd.f32 %v1837, %v1933
        %1935 = vmatmul.bf16.gmra.mxu0 %v1795
        %v1936 = vpop.f32.mrf.mxu0
        %v1937 = vadd.f32 %v1837, %v1936
        %v1938 = vpop.f32.mrf.mxu0
        %v1939 = vadd.f32 %v1837, %v1938
        %1940 = vmatmul.bf16.gmra.mxu0 %v1796
        %v1941 = vpop.f32.mrf.mxu0
        %v1942 = vadd.f32 %v1837, %v1941
        %v1943 = vpop.f32.mrf.mxu0
        %v1944 = vadd.f32 %v1837, %v1943
        %1945 = vmatmul.bf16.gmra.mxu0 %v1797
        %v1946 = vpop.f32.mrf.mxu0
        %v1947 = vadd.f32 %v1837, %v1946
        %v1948 = vpop.f32.mrf.mxu0
        %v1949 = vadd.f32 %v1837, %v1948
        %1950 = vmatmul.bf16.gmra.mxu0 %v1798
        %v1951 = vpop.f32.mrf.mxu0
        %v1952 = vadd.f32 %v1837, %v1951
        %v1953 = vpop.f32.mrf.mxu0
        %v1954 = vadd.f32 %v1837, %v1953
        %1955 = vmatmul.bf16.gmra.mxu0 %v1799
        %v1956 = vpop.f32.mrf.mxu0
        %v1957 = vadd.f32 %v1837, %v1956
        %v1958 = vpop.f32.mrf.mxu0
        %v1959 = vadd.f32 %v1837, %v1958
        %1960 = vmatmul.bf16.gmra.mxu0 %v1800
        %v1961 = vpop.f32.mrf.mxu0
        %v1962 = vadd.f32 %v1837, %v1961
        %v1963 = vpop.f32.mrf.mxu0
        %v1964 = vadd.f32 %v1837, %v1963
        %1965 = vmatmul.bf16.gmra.mxu0 %v1801
        %v1966 = vpop.f32.mrf.mxu0
        %v1967 = vadd.f32 %v1837, %v1966
        %v1968 = vpop.f32.mrf.mxu0
        %v1969 = vadd.f32 %v1837, %v1968
        %1970 = vmatmul.bf16.gmra.mxu0 %v1802
        %v1971 = vpop.f32.mrf.mxu0
        %v1972 = vadd.f32 %v1837, %v1971
        %v1973 = vpop.f32.mrf.mxu0
        %v1974 = vadd.f32 %v1837, %v1973
        %1975 = vmatmul.bf16.gmra.mxu0 %v1803
        %v1976 = vpop.f32.mrf.mxu0
        %v1977 = vadd.f32 %v1837, %v1976
        %v1978 = vpop.f32.mrf.mxu0
        %v1979 = vadd.f32 %v1837, %v1978
        %1980 = vmatmul.bf16.gmra.mxu0 %v1804
        %v1981 = vpop.f32.mrf.mxu0
        %v1982 = vadd.f32 %v1837, %v1981
        %v1983 = vpop.f32.mrf.mxu0
        %v1984 = vadd.f32 %v1837, %v1983
        %1985 = vmatmul.bf16.gmra.mxu0 %v1805
        %v1986 = vpop.f32.mrf.mxu0
        %v1987 = vadd.f32 %v1837, %v1986
        %v1988 = vpop.f32.mrf.mxu0
        %v1989 = vadd.f32 %v1837, %v1988
        %1990 = vmatmul.bf16.gmra.mxu0 %v1806
        %v1991 = vpop.f32.mrf.mxu0
        %v1992 = vadd.f32 %v1837, %v1991
        %v1993 = vpop.f32.mrf.mxu0
        %v1994 = vadd.f32 %v1837, %v1993
        %1995 = vmatmul.bf16.gmra.mxu0 %v1807
        %v1996 = vpop.f32.mrf.mxu0
        %v1997 = vadd.f32 %v1837, %v1996
        %v1998 = vpop.f32.mrf.mxu0
        %v1999 = vadd.f32 %v1837, %v1998
        %2000 = vmatmul.bf16.gmra.mxu0 %v1808
        %v2001 = vpop.f32.mrf.mxu0
        %v2002 = vadd.f32 %v1837, %v2001
        %v2003 = vpop.f32.mrf.mxu0
        %v2004 = vadd.f32 %v1837, %v2003
        %2005 = vmatmul.bf16.gmra.mxu0 %v1809
        %v2006 = vpop.f32.mrf.mxu0
        %v2007 = vadd.f32 %v1837, %v2006
        %v2008 = vpop.f32.mrf.mxu0
        %v2009 = vadd.f32 %v1837, %v2008
        %2010 = vmatmul.bf16.gmra.mxu0 %v1810
        %v2011 = vpop.f32.mrf.mxu0
        %v2012 = vadd.f32 %v1837, %v2011
        %v2013 = vpop.f32.mrf.mxu0
        %v2014 = vadd.f32 %v1837, %v2013
        %2015 = vmatmul.bf16.gmra.mxu0 %v1811
        %v2016 = vpop.f32.mrf.mxu0
        %v2017 = vadd.f32 %v1837, %v2016
        %v2018 = vpop.f32.mrf.mxu0
        %v2019 = vadd.f32 %v1837, %v2018
        %2020 = vmatmul.bf16.gmra.mxu0 %v1812
        %v2021 = vpop.f32.mrf.mxu0
        %v2022 = vadd.f32 %v1837, %v2021
        %v2023 = vpop.f32.mrf.mxu0
        %v2024 = vadd.f32 %v1837, %v2023
        %2025 = vmatmul.bf16.gmra.mxu0 %v1813
        %v2026 = vpop.f32.mrf.mxu0
        %v2027 = vadd.f32 %v1837, %v2026
        %v2028 = vpop.f32.mrf.mxu0
        %v2029 = vadd.f32 %v1837, %v2028
        %2030 = vmatmul.bf16.gmra.mxu0 %v1814
        %v2031 = vpop.f32.mrf.mxu0
        %v2032 = vadd.f32 %v1837, %v2031
        %v2033 = vpop.f32.mrf.mxu0
        %v2034 = vadd.f32 %v1837, %v2033
        %2035 = vmatmul.bf16.gmra.mxu0 %v1815
        %v2036 = vpop.f32.mrf.mxu0
        %v2037 = vadd.f32 %v1837, %v2036
        %v2038 = vpop.f32.mrf.mxu0
        %v2039 = vadd.f32 %v1837, %v2038
        %2040 = vmatmul.bf16.gmra.mxu0 %v1816
        %v2041 = vpop.f32.mrf.mxu0
        %v2042 = vadd.f32 %v1837, %v2041
        %v2043 = vpop.f32.mrf.mxu0
        %v2044 = vadd.f32 %v1837, %v2043
        %2045 = vmatmul.bf16.gmra.mxu0 %v1817
        %v2046 = vpop.f32.mrf.mxu0
        %v2047 = vadd.f32 %v1837, %v2046
        %v2048 = vpop.f32.mrf.mxu0
        %v2049 = vadd.f32 %v1837, %v2048
        %2050 = vmatmul.bf16.gmra.mxu0 %v1818
        %v2051 = vpop.f32.mrf.mxu0
        %v2052 = vadd.f32 %v1837, %v2051
        %v2053 = vpop.f32.mrf.mxu0
        %v2054 = vadd.f32 %v1837, %v2053
        %2055 = vdwg.mxu0
        %v2056 = vpack.c.bf16 %v1897, %v1897
        %v2057 = vpack.c.bf16 %v1899, %v1899
        %v2058 = vpack.c.bf16 %v1902, %v1902
        %v2059 = vpack.c.bf16 %v1904, %v1904
        %v2060 = vpack.c.bf16 %v1907, %v1907
        %v2061 = vpack.c.bf16 %v1909, %v1909
        %v2062 = vpack.c.bf16 %v1912, %v1912
        %v2063 = vpack.c.bf16 %v1914, %v1914
        %v2064 = vpack.c.bf16 %v1917, %v1917
        %v2065 = vpack.c.bf16 %v1919, %v1919
        %v2066 = vpack.c.bf16 %v1922, %v1922
        %v2067 = vpack.c.bf16 %v1924, %v1924
        %v2068 = vpack.c.bf16 %v1927, %v1927
        %v2069 = vpack.c.bf16 %v1929, %v1929
        %v2070 = vpack.c.bf16 %v1932, %v1932
        %v2071 = vpack.c.bf16 %v1934, %v1934
        %v2072 = vpack.c.bf16 %v1937, %v1937
        %v2073 = vpack.c.bf16 %v1939, %v1939
        %v2074 = vpack.c.bf16 %v1942, %v1942
        %v2075 = vpack.c.bf16 %v1944, %v1944
        %v2076 = vpack.c.bf16 %v1947, %v1947
        %v2077 = vpack.c.bf16 %v1949, %v1949
        %v2078 = vpack.c.bf16 %v1952, %v1952
        %v2079 = vpack.c.bf16 %v1954, %v1954
        %v2080 = vpack.c.bf16 %v1957, %v1957
        %v2081 = vpack.c.bf16 %v1959, %v1959
        %v2082 = vpack.c.bf16 %v1962, %v1962
        %v2083 = vpack.c.bf16 %v1964, %v1964
        %v2084 = vpack.c.bf16 %v1967, %v1967
        %v2085 = vpack.c.bf16 %v1969, %v1969
        %v2086 = vpack.c.bf16 %v1972, %v1972
        %v2087 = vpack.c.bf16 %v1974, %v1974
        %v2088 = vpack.c.bf16 %v1977, %v1977
        %v2089 = vpack.c.bf16 %v1979, %v1979
        %v2090 = vpack.c.bf16 %v1982, %v1982
        %v2091 = vpack.c.bf16 %v1984, %v1984
        %v2092 = vpack.c.bf16 %v1987, %v1987
        %v2093 = vpack.c.bf16 %v1989, %v1989
        %v2094 = vpack.c.bf16 %v1992, %v1992
        %v2095 = vpack.c.bf16 %v1994, %v1994
        %v2096 = vpack.c.bf16 %v1997, %v1997
        %v2097 = vpack.c.bf16 %v1999, %v1999
        %v2098 = vpack.c.bf16 %v2002, %v2002
        %v2099 = vpack.c.bf16 %v2004, %v2004
        %v2100 = vpack.c.bf16 %v2007, %v2007
        %v2101 = vpack.c.bf16 %v2009, %v2009
        %v2102 = vpack.c.bf16 %v2012, %v2012
        %v2103 = vpack.c.bf16 %v2014, %v2014
        %v2104 = vpack.c.bf16 %v2017, %v2017
        %v2105 = vpack.c.bf16 %v2019, %v2019
        %v2106 = vpack.c.bf16 %v2022, %v2022
        %v2107 = vpack.c.bf16 %v2024, %v2024
        %v2108 = vpack.c.bf16 %v2027, %v2027
        %v2109 = vpack.c.bf16 %v2029, %v2029
        %v2110 = vpack.c.bf16 %v2032, %v2032
        %v2111 = vpack.c.bf16 %v2034, %v2034
        %v2112 = vpack.c.bf16 %v2037, %v2037
        %v2113 = vpack.c.bf16 %v2039, %v2039
        %v2114 = vpack.c.bf16 %v2042, %v2042
        %v2115 = vpack.c.bf16 %v2044, %v2044
        %v2116 = vpack.c.bf16 %v2047, %v2047
        %v2117 = vpack.c.bf16 %v2049, %v2049
        %v2118 = vpack.c.bf16 %v2052, %v2052
        %v2119 = vpack.c.bf16 %v2054, %v2054
        %2120 = vst [vmem:[%s241] sm:$0xf] %v2056
        %2121 = vst [vmem:[%s241 + $0x4] sm:$0xf] %v2057
        %2122 = vst [vmem:[%s241 + $0x8] sm:$0xf] %v2058
        %2123 = vst [vmem:[%s241 + $0xc] sm:$0xf] %v2059
        %2124 = vst [vmem:[%s241 + $0x10] sm:$0xf] %v2060
        %2125 = vst [vmem:[%s241 + $0x14] sm:$0xf] %v2061
        %2126 = vst [vmem:[%s241 + $0x18] sm:$0xf] %v2062
        %2127 = vst [vmem:[%s241 + $0x1c] sm:$0xf] %v2063
        %2128 = vst [vmem:[%s241 + $0x20] sm:$0xf] %v2064
        %2129 = vst [vmem:[%s241 + $0x24] sm:$0xf] %v2065
        %2130 = vst [vmem:[%s241 + $0x28] sm:$0xf] %v2066
        %2131 = vst [vmem:[%s241 + $0x2c] sm:$0xf] %v2067
        %2132 = vst [vmem:[%s241 + $0x30] sm:$0xf] %v2068
        %2133 = vst [vmem:[%s241 + $0x34] sm:$0xf] %v2069
        %2134 = vst [vmem:[%s241 + $0x38] sm:$0xf] %v2070
        %2135 = vst [vmem:[%s241 + $0x3c] sm:$0xf] %v2071
        %2136 = vst [vmem:[%s241 + $0x40] sm:$0xf] %v2072
        %2137 = vst [vmem:[%s241 + $0x44] sm:$0xf] %v2073
        %2138 = vst [vmem:[%s241 + $0x48] sm:$0xf] %v2074
        %2139 = vst [vmem:[%s241 + $0x4c] sm:$0xf] %v2075
        %2140 = vst [vmem:[%s241 + $0x50] sm:$0xf] %v2076
        %2141 = vst [vmem:[%s241 + $0x54] sm:$0xf] %v2077
        %2142 = vst [vmem:[%s241 + $0x58] sm:$0xf] %v2078
        %2143 = vst [vmem:[%s241 + $0x5c] sm:$0xf] %v2079
        %2144 = vst [vmem:[%s241 + $0x60] sm:$0xf] %v2080
        %2145 = vst [vmem:[%s241 + $0x64] sm:$0xf] %v2081
        %2146 = vst [vmem:[%s241 + $0x68] sm:$0xf] %v2082
        %2147 = vst [vmem:[%s241 + $0x6c] sm:$0xf] %v2083
        %2148 = vst [vmem:[%s241 + $0x70] sm:$0xf] %v2084
        %2149 = vst [vmem:[%s241 + $0x74] sm:$0xf] %v2085
        %2150 = vst [vmem:[%s241 + $0x78] sm:$0xf] %v2086
        %2151 = vst [vmem:[%s241 + $0x7c] sm:$0xf] %v2087
        %2152 = vst [vmem:[%s241 + $0x80] sm:$0xf] %v2088
        %2153 = vst [vmem:[%s241 + $0x84] sm:$0xf] %v2089
        %2154 = vst [vmem:[%s241 + $0x88] sm:$0xf] %v2090
        %2155 = vst [vmem:[%s241 + $0x8c] sm:$0xf] %v2091
        %2156 = vst [vmem:[%s241 + $0x90] sm:$0xf] %v2092
        %2157 = vst [vmem:[%s241 + $0x94] sm:$0xf] %v2093
        %2158 = vst [vmem:[%s241 + $0x98] sm:$0xf] %v2094
        %2159 = vst [vmem:[%s241 + $0x9c] sm:$0xf] %v2095
        %2160 = vst [vmem:[%s241 + $0xa0] sm:$0xf] %v2096
        %2161 = vst [vmem:[%s241 + $0xa4] sm:$0xf] %v2097
        %2162 = vst [vmem:[%s241 + $0xa8] sm:$0xf] %v2098
        %2163 = vst [vmem:[%s241 + $0xac] sm:$0xf] %v2099
        %2164 = vst [vmem:[%s241 + $0xb0] sm:$0xf] %v2100
        %2165 = vst [vmem:[%s241 + $0xb4] sm:$0xf] %v2101
        %2166 = vst [vmem:[%s241 + $0xb8] sm:$0xf] %v2102
        %2167 = vst [vmem:[%s241 + $0xbc] sm:$0xf] %v2103
        %2168 = vst [vmem:[%s241 + $0xc0] sm:$0xf] %v2104
        %2169 = vst [vmem:[%s241 + $0xc4] sm:$0xf] %v2105
        %2170 = vst [vmem:[%s241 + $0xc8] sm:$0xf] %v2106
        %2171 = vst [vmem:[%s241 + $0xcc] sm:$0xf] %v2107
        %2172 = vst [vmem:[%s241 + $0xd0] sm:$0xf] %v2108
        %2173 = vst [vmem:[%s241 + $0xd4] sm:$0xf] %v2109
        %2174 = vst [vmem:[%s241 + $0xd8] sm:$0xf] %v2110
        %2175 = vst [vmem:[%s241 + $0xdc] sm:$0xf] %v2111
        %2176 = vst [vmem:[%s241 + $0xe0] sm:$0xf] %v2112
        %2177 = vst [vmem:[%s241 + $0xe4] sm:$0xf] %v2113
        %2178 = vst [vmem:[%s241 + $0xe8] sm:$0xf] %v2114
        %2179 = vst [vmem:[%s241 + $0xec] sm:$0xf] %v2115
        %2180 = vst [vmem:[%s241 + $0xf0] sm:$0xf] %v2116
        %2181 = vst [vmem:[%s241 + $0xf4] sm:$0xf] %v2117
        %2182 = vst [vmem:[%s241 + $0xf8] sm:$0xf] %v2118
        %2183 = vst [vmem:[%s241 + $0xfc] sm:$0xf] %v2119
        %s2184 = sand.u32 %s153, 1
        %s2185 = scalar_lea.sflag [#allocation3], %s2184
        %s2186 = sand.u32 %s153, 1
        %s2187 = smul.addr %s2186, 256
        %s2188 = scalar_lea.vmem [#allocation2], %s2187
        // Predicated region
        $region41: #{tpu_custom_call.1} parent=39 // pred_check
          %p2189 = pneg %p163
        $region42: #{tpu_custom_call.1} parent=39 // pred_check_branch
          %2191 = sbr.rel (%p2189) target = $region44
        $region43: #{tpu_custom_call.1} parent=39 // pred_region
          %2193 = vsyncadd %s2185, 0
          %s2194 = smul.addr %s24, 64
          %s2195 = smul.addr %s23, 64
          %s2196 = sadd.s32 %s2194, %s2195
          %s2197 = smul.addr %s2196, 4
          %s2198 = scalar_lea.hbm %s5, %s2197
          %s2199 = sshll.u32 %s2188, 4
          %s2200 = int_to_ptr.vmem [resolvable:$true] %s2199
          %s2201 = sshll.u32 %s2198, 4
          %s2202 = int_to_ptr.hbm [resolvable:$true] %s2201
          %2207 = dma.vmem_to_hbm [thread:$0]  %s2200, 4096, %s2202, %s2185, 64, 64, 4
        $region44: #{tpu_custom_call.1} parent=39 // pred_fallthru
          _
      $region40: #{tpu_custom_call.1} parent=5 // pred_fallthru
        _
      %p2208 = scmp.le.s32.totalorder 2, %s14
      // Predicated region
      $region45: #{tpu_custom_call.1} parent=5 // pred_check
        %p2209 = pneg %p2208
      $region46: #{tpu_custom_call.1} parent=5 // pred_check_branch
        %2211 = sbr.rel (%p2209) target = $region48
      $region47: #{tpu_custom_call.1} parent=5 // pred_region
        %s2212 = ssub.s32 %s14, 2
        // Predicated region
        $region49: #{tpu_custom_call.1} parent=47 // pred_check
          %p2213 = pneg %p169
        $region50: #{tpu_custom_call.1} parent=47 // pred_check_branch
          %2215 = sbr.rel (%p2213) target = $region52
        $region51: #{tpu_custom_call.1} parent=47 // pred_region
          %s2216 = sand.u32 %s154, 1
          %s2217 = scalar_lea.sflag [#allocation3], %s2216
          %s2218 = sand.u32 %s154, 1
          %s2219 = smul.addr %s2218, 256
          %s2220 = scalar_lea.vmem [#allocation2], %s2219
          %2222 = dma.done %s2217, 4096
        $region52: #{tpu_custom_call.1} parent=47 // pred_fallthru
          _
      $region48: #{tpu_custom_call.1} parent=5 // pred_fallthru
        _
    $region6: #{tpu_custom_call.1} parent=1 // loop_footer
      %s18 = sadd.s32 1, %s14
    $region7: #{tpu_custom_call.1} parent=1 // loop_footer_branch
      %13 = sbr.rel target = $region3
    $region8: #{tpu_custom_call.1} parent=1 // loop_exit
      _
    %2223 = vsyncpa [#allocation3], 1
    %s2224 = scalar_lea.sflag [#allocation3], 1
    %2225 = vsyncpa %s2224, 1

</llo_original>
